<compile_context>
chip_gen: v7x
topology: tpu7x:2x2x1
jax: 0.10.0
libtpu: 0.0.40
codegen_flags: <defaults>
</compile_context>

<pallas_src>
import math

import jax
import jax.numpy as jnp
from jax import lax
from jax.experimental import pallas as pl
from jax.experimental.pallas import tpu as pltpu

# ---------------- synthetic "BERT" config ----------------
VOCAB = 100
MAX_POS = 16
H = 32           # hidden size
L = 2            # encoder layers
NH = 4           # attention heads
HD = H // NH     # head dim (= 8 -> one fp32 sublane tile)
F = 64           # intermediate (FFN) size
N_EXTRA = 2      # time-series features appended to pooled output
OUT_PAD = 128    # classifier logits padded to one full lane tile
LN_EPS = 1e-12


def _layer_norm(v, g, b):
    # v: (N, H), g/b: (1, H)
    mu = jnp.mean(v, axis=-1, keepdims=True)
    var = jnp.mean(jnp.square(v - mu), axis=-1, keepdims=True)
    return (v - mu) * lax.rsqrt(var + LN_EPS) * g + b


def _gelu(v):
    # TODO(synk): BERT uses exact erf-based GELU; tanh approximation used here
    # for guaranteed Mosaic lowering (pure VPU/EUP ops).
    return 0.5 * v * (1.0 + jnp.tanh(0.7978845608028654 * (v + 0.044715 * v * v * v)))


def bert_ts_kernel(emb_ref, mask_ref, eg_ref, eb_ref,
                   wqkv_ref, bqkv_ref, wo_ref, bo_ref, g1_ref, be1_ref,
                   w1_ref, b1_ref, w2_ref, b2_ref, g2_ref, be2_ref,
                   wp_ref, bp_ref, wc_ref, bc_ref, ts_ref,
                   out_ref):
    N, hid = emb_ref.shape           # N = B*S tokens on sublanes, hidden on lanes
    B = ts_ref.shape[0]
    S = N // B
    n_layers = wqkv_ref.shape[0]
    scale = 1.0 / math.sqrt(HD)

    # ----- hoisted loop invariants (loaded once; loops are fully unrolled) -----
    mask_add = mask_ref[...]                                    # (N, N) additive mask
    x = _layer_norm(emb_ref[...], eg_ref[...], eb_ref[...])     # embeddings LN, (N, H)

    # ----- transformer encoder layers -----
    for l in range(n_layers):
        # Fused QKV projection, produced transposed: (3H, N).  Each head is then
        # an aligned 8-row sublane slice (free vreg-tile select, no lane shuffles).
        qkv_t = lax.dot_general(wqkv_ref[l], x, (((1,), (1,)), ((), ())),
                                preferred_element_type=jnp.float32) + bqkv_ref[l]

        ctx_heads = []
        for h in range(NH):                                     # static head loop
            r = h * HD
            qh = qkv_t[r:r + HD, :]                             # (HD, N)
            kh = qkv_t[hid + r:hid + r + HD, :]                 # (HD, N)
            vh = qkv_t[2 * hid + r:2 * hid + r + HD, :]         # (HD, N)

            # scores = q^T k  (contract head dim; operands stay transposed)
            s = lax.dot_general(qh, kh, (((0,), (0,)), ((), ())),
                                preferred_element_type=jnp.float32)   # (N, N)
            s = s * scale + mask_add
            s = s - jnp.max(s, axis=-1, keepdims=True)
            e = jnp.exp(s)
            p = e * pl.reciprocal(jnp.sum(e, axis=-1, keepdims=True), approx=True)

            # context, transposed (HD, N) so heads stack along sublanes
            ctx_heads.append(lax.dot_general(vh, p, (((1,), (1,)), ((), ())),
                                             preferred_element_type=jnp.float32))

        ctx_t = jnp.concatenate(ctx_heads, axis=0)              # (H, N)
        # single fused output projection: (N, H)
        attn = lax.dot_general(ctx_t, wo_ref[l], (((0,), (0,)), ((), ())),
                               preferred_element_type=jnp.float32) + bo_ref[l]
        x = _layer_norm(x + attn, g1_ref[l], be1_ref[l])

        # feed-forward
        h1 = _gelu(jnp.dot(x, w1_ref[l], preferred_element_type=jnp.float32) + b1_ref[l])
        ff = jnp.dot(h1, w2_ref[l], preferred_element_type=jnp.float32) + b2_ref[l]
        x = _layer_norm(x + ff, g2_ref[l], be2_ref[l])

    # ----- pooler: tanh(W_p @ h[CLS]) for every batch row at once -----
    cls = jnp.concatenate([x[b * S:b * S + 1, :] for b in range(B)], axis=0)   # (B, H)
    pooled = jnp.tanh(jnp.dot(cls, wp_ref[...],
                              preferred_element_type=jnp.float32) + bp_ref[...])

    # ----- classifier on concat([pooled, time_series]) as split matmul -----
    # wc/bc are zero-padded to 128 output lanes -> one lane-dense store.
    logits = (jnp.dot(pooled, wc_ref[0:hid, :], preferred_element_type=jnp.float32)
              + jnp.dot(ts_ref[...], wc_ref[hid:hid + N_EXTRA, :],
                        preferred_element_type=jnp.float32)
              + bc_ref[...])                                                   # (B, OUT_PAD)
    out_ref[...] = logits


def bert_with_time_series(params, input_ids, attention_mask, time_series, labels=None):
    B, S = input_ids.shape
    N = B * S

    # embedding gather (glue, plain JAX): word + position + token-type(=0); LN in kernel
    emb = (params["word_emb"][input_ids]
           + params["pos_emb"][:S][None, :, :]
           + params["type_emb"][0][None, None, :]).astype(jnp.float32).reshape(N, H)
    ts = time_series.reshape(B, N_EXTRA).astype(jnp.float32)                   # squeeze(1)

    # additive attention mask for the batch-merged (N, N) score matrix:
    # block-diagonal per batch; padded keys get -1e4 (same as HF extended mask).
    row_batch = jnp.arange(N) // S
    same_batch = row_batch[:, None] == row_batch[None, :]
    key_valid = attention_mask.reshape(N) > 0
    mask_add = jnp.where(same_batch & key_valid[None, :], 0.0, -10000.0).astype(jnp.float32)

    # pad classifier to a full 128-lane output tile (sliced back after the kernel)
    wc_pad = jnp.zeros((H + N_EXTRA, OUT_PAD), jnp.float32).at[:, :2].set(params["wc"])
    bc_pad = jnp.zeros((1, OUT_PAD), jnp.float32).at[:, :2].set(params["bc"])

    ins = [emb, mask_add, params["emb_ln_g"], params["emb_ln_b"],
           params["wqkv"], params["bqkv"], params["wo"], params["bo"],
           params["ln1_g"], params["ln1_b"],
           params["w1"], params["b1"], params["w2"], params["b2"],
           params["ln2_g"], params["ln2_b"],
           params["wp"], params["bp"], wc_pad, bc_pad, ts]

    logits_pad = pl.pallas_call(
        bert_ts_kernel,
        out_shape=jax.ShapeDtypeStruct((B, OUT_PAD), jnp.float32),
        in_specs=[pl.BlockSpec(memory_space=pltpu.MemorySpace.VMEM)] * len(ins),
        out_specs=pl.BlockSpec(memory_space=pltpu.MemorySpace.VMEM),
    )(*ins)
    logits = logits_pad[:, :2]

    if labels is not None:
        # CrossEntropyLoss (mean reduction) — tiny, kept as JAX glue.
        logp = jax.nn.log_softmax(logits, axis=-1)
        loss = -jnp.mean(jnp.take_along_axis(logp, labels[:, None], axis=-1))
        return loss, logits
    return logits


def init_params(key):
    keys = iter(jax.random.split(key, 16))

    def nrm(shape):
        return 0.02 * jax.random.normal(next(keys), shape, jnp.float32)

    return dict(
        word_emb=nrm((VOCAB, H)),
        pos_emb=nrm((MAX_POS, H)),
        type_emb=nrm((2, H)),
        emb_ln_g=jnp.ones((1, H), jnp.float32),
        emb_ln_b=jnp.zeros((1, H), jnp.float32),
        # fused QKV weight stored (out_features=3H, in_features=H) so the kernel
        # can produce the transposed (3H, N) activation directly.
        wqkv=nrm((L, 3 * H, H)),
        bqkv=jnp.zeros((L, 3 * H, 1), jnp.float32),
        wo=nrm((L, H, H)),                 # (in=H from ctx, out=H): y = ctx @ wo
        bo=jnp.zeros((L, 1, H), jnp.float32),
        ln1_g=jnp.ones((L, 1, H), jnp.float32),
        ln1_b=jnp.zeros((L, 1, H), jnp.float32),
        w1=nrm((L, H, F)),
        b1=jnp.zeros((L, 1, F), jnp.float32),
        w2=nrm((L, F, H)),
        b2=jnp.zeros((L, 1, H), jnp.float32),
        ln2_g=jnp.ones((L, 1, H), jnp.float32),
        ln2_b=jnp.zeros((L, 1, H), jnp.float32),
        wp=nrm((H, H)),
        bp=jnp.zeros((1, H), jnp.float32),
        wc=nrm((H + N_EXTRA, 2)),
        bc=jnp.zeros((1, 2), jnp.float32),
    )


if __name__ == "__main__":
    key = jax.random.PRNGKey(0)
    pkey, ikey, tkey = jax.random.split(key, 3)

    params = init_params(pkey)

    B, S = 2, 8
    input_ids = jax.random.randint(ikey, (B, S), 0, VOCAB, dtype=jnp.int32)
    # batch 0 has 6 valid tokens, batch 1 has all 8
    attention_mask = (jnp.arange(S)[None, :] < jnp.array([[6], [8]])).astype(jnp.int32)
    time_series = jax.random.normal(tkey, (B, 1, N_EXTRA), jnp.float32)
    labels = jnp.array([0, 1], jnp.int32)

    loss, logits = bert_with_time_series(params, input_ids, attention_mask,
                                         time_series, labels)
    logits_only = bert_with_time_series(params, input_ids, attention_mask, time_series)
    jax.block_until_ready((loss, logits, logits_only))

    assert logits.shape == (B, 2) and logits_only.shape == (B, 2)
    assert bool(jnp.isfinite(loss)) and bool(jnp.all(jnp.isfinite(logits)))
    print("KERNEL_OK")
</pallas_src>

<mosaic_0001>
module attributes {stable_mosaic.version = 11 : i64} {
  func.func @bert_ts_kernel(%arg0: memref<16x32xf32, #tpu.memory_space<vmem>>, %arg1: memref<16x16xf32, #tpu.memory_space<vmem>>, %arg2: memref<1x32xf32, #tpu.memory_space<vmem>>, %arg3: memref<1x32xf32, #tpu.memory_space<vmem>>, %arg4: memref<2x96x32xf32, #tpu.memory_space<vmem>>, %arg5: memref<2x96x1xf32, #tpu.memory_space<vmem>>, %arg6: memref<2x32x32xf32, #tpu.memory_space<vmem>>, %arg7: memref<2x1x32xf32, #tpu.memory_space<vmem>>, %arg8: memref<2x1x32xf32, #tpu.memory_space<vmem>>, %arg9: memref<2x1x32xf32, #tpu.memory_space<vmem>>, %arg10: memref<2x32x64xf32, #tpu.memory_space<vmem>>, %arg11: memref<2x1x64xf32, #tpu.memory_space<vmem>>, %arg12: memref<2x64x32xf32, #tpu.memory_space<vmem>>, %arg13: memref<2x1x32xf32, #tpu.memory_space<vmem>>, %arg14: memref<2x1x32xf32, #tpu.memory_space<vmem>>, %arg15: memref<2x1x32xf32, #tpu.memory_space<vmem>>, %arg16: memref<32x32xf32, #tpu.memory_space<vmem>>, %arg17: memref<1x32xf32, #tpu.memory_space<vmem>>, %arg18: memref<34x128xf32, #tpu.memory_space<vmem>>, %arg19: memref<1x128xf32, #tpu.memory_space<vmem>>, %arg20: memref<2x2xf32, #tpu.memory_space<vmem>>, %arg21: memref<2x128xf32, #tpu.memory_space<vmem>>) attributes {dimension_semantics = [], scalar_prefetch = 0 : i64, scratch_operands = 0 : i64, tpu.core_type = #tpu.core_type<tc>} {
    %c0 = arith.constant 0 : index
    %c0_0 = arith.constant 0 : index
    %0 = vector.load %arg1[%c0, %c0_0] : memref<16x16xf32, #tpu.memory_space<vmem>>, vector<16x16xf32>
    %c0_1 = arith.constant 0 : index
    %c0_2 = arith.constant 0 : index
    %1 = vector.load %arg0[%c0_1, %c0_2] : memref<16x32xf32, #tpu.memory_space<vmem>>, vector<16x32xf32>
    %c0_3 = arith.constant 0 : index
    %c0_4 = arith.constant 0 : index
    %2 = vector.load %arg2[%c0_3, %c0_4] : memref<1x32xf32, #tpu.memory_space<vmem>>, vector<1x32xf32>
    %c0_5 = arith.constant 0 : index
    %c0_6 = arith.constant 0 : index
    %3 = vector.load %arg3[%c0_5, %c0_6] : memref<1x32xf32, #tpu.memory_space<vmem>>, vector<1x32xf32>
    %cst = arith.constant dense<0.000000e+00> : vector<16xf32>
    %4 = vector.multi_reduction <add>, %1, %cst [1] : vector<16x32xf32> to vector<16xf32>
    %5 = vector.shape_cast %4 : vector<16xf32> to vector<16x1xf32>
    %cst_7 = arith.constant 3.200000e+01 : f32
    %6 = vector.broadcast %cst_7 : f32 to vector<16x1xf32>
    %7 = arith.divf %5, %6 : vector<16x1xf32>
    %8 = vector.broadcast %7 : vector<16x1xf32> to vector<16x32xf32>
    %9 = arith.subf %1, %8 : vector<16x32xf32>
    %10 = arith.mulf %9, %9 : vector<16x32xf32>
    %cst_8 = arith.constant dense<0.000000e+00> : vector<16xf32>
    %11 = vector.multi_reduction <add>, %10, %cst_8 [1] : vector<16x32xf32> to vector<16xf32>
    %12 = vector.shape_cast %11 : vector<16xf32> to vector<16x1xf32>
    %cst_9 = arith.constant 3.200000e+01 : f32
    %13 = vector.broadcast %cst_9 : f32 to vector<16x1xf32>
    %14 = arith.divf %12, %13 : vector<16x1xf32>
    %15 = vector.broadcast %7 : vector<16x1xf32> to vector<16x32xf32>
    %16 = arith.subf %1, %15 : vector<16x32xf32>
    %cst_10 = arith.constant 9.99999996E-13 : f32
    %17 = vector.broadcast %cst_10 : f32 to vector<16x1xf32>
    %18 = arith.addf %14, %17 : vector<16x1xf32>
    %19 = math.rsqrt %18 : vector<16x1xf32>
    %20 = vector.broadcast %19 : vector<16x1xf32> to vector<16x32xf32>
    %21 = arith.mulf %16, %20 : vector<16x32xf32>
    %22 = vector.broadcast %2 : vector<1x32xf32> to vector<16x32xf32>
    %23 = arith.mulf %21, %22 : vector<16x32xf32>
    %24 = vector.broadcast %3 : vector<1x32xf32> to vector<16x32xf32>
    %25 = arith.addf %23, %24 : vector<16x32xf32>
    %c0_11 = arith.constant 0 : index
    %c0_12 = arith.constant 0 : index
    %c0_13 = arith.constant 0 : index
    %26 = vector.load %arg4[%c0_11, %c0_12, %c0_13] : memref<2x96x32xf32, #tpu.memory_space<vmem>>, vector<1x96x32xf32>
    %27 = vector.shape_cast %26 : vector<1x96x32xf32> to vector<96x32xf32>
    %cst_14 = arith.constant dense<0.000000e+00> : vector<96x16xf32>
    %28 = tpu.matmul %27, %25, %cst_14 {dimension_numbers = #tpu.dot_dimension_numbers<[1], [1], [0], [0], [0, 0, 1, 0], [], []>} : vector<96x32xf32>, vector<16x32xf32>, vector<96x16xf32> -> vector<96x16xf32>
    %c0_15 = arith.constant 0 : index
    %c0_16 = arith.constant 0 : index
    %c0_17 = arith.constant 0 : index
    %29 = vector.load %arg5[%c0_15, %c0_16, %c0_17] : memref<2x96x1xf32, #tpu.memory_space<vmem>>, vector<1x96x1xf32>
    %30 = vector.shape_cast %29 : vector<1x96x1xf32> to vector<96x1xf32>
    %31 = vector.broadcast %30 : vector<96x1xf32> to vector<96x16xf32>
    %32 = arith.addf %28, %31 : vector<96x16xf32>
    %33 = vector.extract_strided_slice %32 {offsets = [0, 0], sizes = [8, 16], strides = [1, 1]} : vector<96x16xf32> to vector<8x16xf32>
    %34 = vector.extract_strided_slice %32 {offsets = [32, 0], sizes = [8, 16], strides = [1, 1]} : vector<96x16xf32> to vector<8x16xf32>
    %35 = vector.extract_strided_slice %32 {offsets = [64, 0], sizes = [8, 16], strides = [1, 1]} : vector<96x16xf32> to vector<8x16xf32>
    %cst_18 = arith.constant dense<0.000000e+00> : vector<16x16xf32>
    %36 = tpu.matmul %33, %34, %cst_18 {dimension_numbers = #tpu.dot_dimension_numbers<[0], [0], [1], [1], [0, 1, 1, 1], [], []>} : vector<8x16xf32>, vector<8x16xf32>, vector<16x16xf32> -> vector<16x16xf32>
    %cst_19 = arith.constant 0.353553385 : f32
    %37 = vector.broadcast %cst_19 : f32 to vector<16x16xf32>
    %38 = arith.mulf %36, %37 : vector<16x16xf32>
    %39 = arith.addf %38, %0 : vector<16x16xf32>
    %cst_20 = arith.constant dense<0xFF800000> : vector<16xf32>
    %40 = vector.multi_reduction <maximumf>, %39, %cst_20 [1] : vector<16x16xf32> to vector<16xf32>
    %41 = vector.shape_cast %40 : vector<16xf32> to vector<16x1xf32>
    %42 = vector.broadcast %41 : vector<16x1xf32> to vector<16x16xf32>
    %43 = arith.subf %39, %42 : vector<16x16xf32>
    %44 = math.exp %43 : vector<16x16xf32>
    %cst_21 = arith.constant dense<0.000000e+00> : vector<16xf32>
    %45 = vector.multi_reduction <add>, %44, %cst_21 [1] : vector<16x16xf32> to vector<16xf32>
    %46 = vector.shape_cast %45 : vector<16xf32> to vector<16x1xf32>
    %47 = tpu.reciprocal %46 {approx = true} : vector<16x1xf32> -> vector<16x1xf32>
    %48 = vector.broadcast %47 : vector<16x1xf32> to vector<16x16xf32>
    %49 = arith.mulf %44, %48 : vector<16x16xf32>
    %cst_22 = arith.constant dense<0.000000e+00> : vector<8x16xf32>
    %50 = tpu.matmul %35, %49, %cst_22 {dimension_numbers = #tpu.dot_dimension_numbers<[1], [1], [0], [0], [0, 0, 1, 0], [], []>} : vector<8x16xf32>, vector<16x16xf32>, vector<8x16xf32> -> vector<8x16xf32>
    %51 = vector.extract_strided_slice %32 {offsets = [8, 0], sizes = [8, 16], strides = [1, 1]} : vector<96x16xf32> to vector<8x16xf32>
    %52 = vector.extract_strided_slice %32 {offsets = [40, 0], sizes = [8, 16], strides = [1, 1]} : vector<96x16xf32> to vector<8x16xf32>
    %53 = vector.extract_strided_slice %32 {offsets = [72, 0], sizes = [8, 16], strides = [1, 1]} : vector<96x16xf32> to vector<8x16xf32>
    %cst_23 = arith.constant dense<0.000000e+00> : vector<16x16xf32>
    %54 = tpu.matmul %51, %52, %cst_23 {dimension_numbers = #tpu.dot_dimension_numbers<[0], [0], [1], [1], [0, 1, 1, 1], [], []>} : vector<8x16xf32>, vector<8x16xf32>, vector<16x16xf32> -> vector<16x16xf32>
    %cst_24 = arith.constant 0.353553385 : f32
    %55 = vector.broadcast %cst_24 : f32 to vector<16x16xf32>
    %56 = arith.mulf %54, %55 : vector<16x16xf32>
    %57 = arith.addf %56, %0 : vector<16x16xf32>
    %cst_25 = arith.constant dense<0xFF800000> : vector<16xf32>
    %58 = vector.multi_reduction <maximumf>, %57, %cst_25 [1] : vector<16x16xf32> to vector<16xf32>
    %59 = vector.shape_cast %58 : vector<16xf32> to vector<16x1xf32>
    %60 = vector.broadcast %59 : vector<16x1xf32> to vector<16x16xf32>
    %61 = arith.subf %57, %60 : vector<16x16xf32>
    %62 = math.exp %61 : vector<16x16xf32>
    %cst_26 = arith.constant dense<0.000000e+00> : vector<16xf32>
    %63 = vector.multi_reduction <add>, %62, %cst_26 [1] : vector<16x16xf32> to vector<16xf32>
    %64 = vector.shape_cast %63 : vector<16xf32> to vector<16x1xf32>
    %65 = tpu.reciprocal %64 {approx = true} : vector<16x1xf32> -> vector<16x1xf32>
    %66 = vector.broadcast %65 : vector<16x1xf32> to vector<16x16xf32>
    %67 = arith.mulf %62, %66 : vector<16x16xf32>
    %cst_27 = arith.constant dense<0.000000e+00> : vector<8x16xf32>
    %68 = tpu.matmul %53, %67, %cst_27 {dimension_numbers = #tpu.dot_dimension_numbers<[1], [1], [0], [0], [0, 0, 1, 0], [], []>} : vector<8x16xf32>, vector<16x16xf32>, vector<8x16xf32> -> vector<8x16xf32>
    %69 = vector.extract_strided_slice %32 {offsets = [16, 0], sizes = [8, 16], strides = [1, 1]} : vector<96x16xf32> to vector<8x16xf32>
    %70 = vector.extract_strided_slice %32 {offsets = [48, 0], sizes = [8, 16], strides = [1, 1]} : vector<96x16xf32> to vector<8x16xf32>
    %71 = vector.extract_strided_slice %32 {offsets = [80, 0], sizes = [8, 16], strides = [1, 1]} : vector<96x16xf32> to vector<8x16xf32>
    %cst_28 = arith.constant dense<0.000000e+00> : vector<16x16xf32>
    %72 = tpu.matmul %69, %70, %cst_28 {dimension_numbers = #tpu.dot_dimension_numbers<[0], [0], [1], [1], [0, 1, 1, 1], [], []>} : vector<8x16xf32>, vector<8x16xf32>, vector<16x16xf32> -> vector<16x16xf32>
    %cst_29 = arith.constant 0.353553385 : f32
    %73 = vector.broadcast %cst_29 : f32 to vector<16x16xf32>
    %74 = arith.mulf %72, %73 : vector<16x16xf32>
    %75 = arith.addf %74, %0 : vector<16x16xf32>
    %cst_30 = arith.constant dense<0xFF800000> : vector<16xf32>
    %76 = vector.multi_reduction <maximumf>, %75, %cst_30 [1] : vector<16x16xf32> to vector<16xf32>
    %77 = vector.shape_cast %76 : vector<16xf32> to vector<16x1xf32>
    %78 = vector.broadcast %77 : vector<16x1xf32> to vector<16x16xf32>
    %79 = arith.subf %75, %78 : vector<16x16xf32>
    %80 = math.exp %79 : vector<16x16xf32>
    %cst_31 = arith.constant dense<0.000000e+00> : vector<16xf32>
    %81 = vector.multi_reduction <add>, %80, %cst_31 [1] : vector<16x16xf32> to vector<16xf32>
    %82 = vector.shape_cast %81 : vector<16xf32> to vector<16x1xf32>
    %83 = tpu.reciprocal %82 {approx = true} : vector<16x1xf32> -> vector<16x1xf32>
    %84 = vector.broadcast %83 : vector<16x1xf32> to vector<16x16xf32>
    %85 = arith.mulf %80, %84 : vector<16x16xf32>
    %cst_32 = arith.constant dense<0.000000e+00> : vector<8x16xf32>
    %86 = tpu.matmul %71, %85, %cst_32 {dimension_numbers = #tpu.dot_dimension_numbers<[1], [1], [0], [0], [0, 0, 1, 0], [], []>} : vector<8x16xf32>, vector<16x16xf32>, vector<8x16xf32> -> vector<8x16xf32>
    %87 = vector.extract_strided_slice %32 {offsets = [24, 0], sizes = [8, 16], strides = [1, 1]} : vector<96x16xf32> to vector<8x16xf32>
    %88 = vector.extract_strided_slice %32 {offsets = [56, 0], sizes = [8, 16], strides = [1, 1]} : vector<96x16xf32> to vector<8x16xf32>
    %89 = vector.extract_strided_slice %32 {offsets = [88, 0], sizes = [8, 16], strides = [1, 1]} : vector<96x16xf32> to vector<8x16xf32>
    %cst_33 = arith.constant dense<0.000000e+00> : vector<16x16xf32>
    %90 = tpu.matmul %87, %88, %cst_33 {dimension_numbers = #tpu.dot_dimension_numbers<[0], [0], [1], [1], [0, 1, 1, 1], [], []>} : vector<8x16xf32>, vector<8x16xf32>, vector<16x16xf32> -> vector<16x16xf32>
    %cst_34 = arith.constant 0.353553385 : f32
    %91 = vector.broadcast %cst_34 : f32 to vector<16x16xf32>
    %92 = arith.mulf %90, %91 : vector<16x16xf32>
    %93 = arith.addf %92, %0 : vector<16x16xf32>
    %cst_35 = arith.constant dense<0xFF800000> : vector<16xf32>
    %94 = vector.multi_reduction <maximumf>, %93, %cst_35 [1] : vector<16x16xf32> to vector<16xf32>
    %95 = vector.shape_cast %94 : vector<16xf32> to vector<16x1xf32>
    %96 = vector.broadcast %95 : vector<16x1xf32> to vector<16x16xf32>
    %97 = arith.subf %93, %96 : vector<16x16xf32>
    %98 = math.exp %97 : vector<16x16xf32>
    %cst_36 = arith.constant dense<0.000000e+00> : vector<16xf32>
    %99 = vector.multi_reduction <add>, %98, %cst_36 [1] : vector<16x16xf32> to vector<16xf32>
    %100 = vector.shape_cast %99 : vector<16xf32> to vector<16x1xf32>
    %101 = tpu.reciprocal %100 {approx = true} : vector<16x1xf32> -> vector<16x1xf32>
    %102 = vector.broadcast %101 : vector<16x1xf32> to vector<16x16xf32>
    %103 = arith.mulf %98, %102 : vector<16x16xf32>
    %cst_37 = arith.constant dense<0.000000e+00> : vector<8x16xf32>
    %104 = tpu.matmul %89, %103, %cst_37 {dimension_numbers = #tpu.dot_dimension_numbers<[1], [1], [0], [0], [0, 0, 1, 0], [], []>} : vector<8x16xf32>, vector<16x16xf32>, vector<8x16xf32> -> vector<8x16xf32>
    %105 = tpu.concatenate %50, %68, %86, %104 in 0 : vector<8x16xf32>, vector<8x16xf32>, vector<8x16xf32>, vector<8x16xf32> -> vector<32x16xf32>
    %c0_38 = arith.constant 0 : index
    %c0_39 = arith.constant 0 : index
    %c0_40 = arith.constant 0 : index
    %106 = vector.load %arg6[%c0_38, %c0_39, %c0_40] : memref<2x32x32xf32, #tpu.memory_space<vmem>>, vector<1x32x32xf32>
    %107 = vector.shape_cast %106 : vector<1x32x32xf32> to vector<32x32xf32>
    %cst_41 = arith.constant dense<0.000000e+00> : vector<16x32xf32>
    %108 = tpu.matmul %105, %107, %cst_41 {dimension_numbers = #tpu.dot_dimension_numbers<[0], [0], [1], [1], [0, 1, 1, 1], [], []>} : vector<32x16xf32>, vector<32x32xf32>, vector<16x32xf32> -> vector<16x32xf32>
    %c0_42 = arith.constant 0 : index
    %c0_43 = arith.constant 0 : index
    %c0_44 = arith.constant 0 : index
    %109 = vector.load %arg7[%c0_42, %c0_43, %c0_44] : memref<2x1x32xf32, #tpu.memory_space<vmem>>, vector<1x1x32xf32>
    %110 = vector.shape_cast %109 : vector<1x1x32xf32> to vector<1x32xf32>
    %111 = vector.broadcast %110 : vector<1x32xf32> to vector<16x32xf32>
    %112 = arith.addf %108, %111 : vector<16x32xf32>
    %113 = arith.addf %25, %112 : vector<16x32xf32>
    %c0_45 = arith.constant 0 : index
    %c0_46 = arith.constant 0 : index
    %c0_47 = arith.constant 0 : index
    %114 = vector.load %arg8[%c0_45, %c0_46, %c0_47] : memref<2x1x32xf32, #tpu.memory_space<vmem>>, vector<1x1x32xf32>
    %115 = vector.shape_cast %114 : vector<1x1x32xf32> to vector<1x32xf32>
    %c0_48 = arith.constant 0 : index
    %c0_49 = arith.constant 0 : index
    %c0_50 = arith.constant 0 : index
    %116 = vector.load %arg9[%c0_48, %c0_49, %c0_50] : memref<2x1x32xf32, #tpu.memory_space<vmem>>, vector<1x1x32xf32>
    %117 = vector.shape_cast %116 : vector<1x1x32xf32> to vector<1x32xf32>
    %cst_51 = arith.constant dense<0.000000e+00> : vector<16xf32>
    %118 = vector.multi_reduction <add>, %113, %cst_51 [1] : vector<16x32xf32> to vector<16xf32>
    %119 = vector.shape_cast %118 : vector<16xf32> to vector<16x1xf32>
    %cst_52 = arith.constant 3.200000e+01 : f32
    %120 = vector.broadcast %cst_52 : f32 to vector<16x1xf32>
    %121 = arith.divf %119, %120 : vector<16x1xf32>
    %122 = vector.broadcast %121 : vector<16x1xf32> to vector<16x32xf32>
    %123 = arith.subf %113, %122 : vector<16x32xf32>
    %124 = arith.mulf %123, %123 : vector<16x32xf32>
    %cst_53 = arith.constant dense<0.000000e+00> : vector<16xf32>
    %125 = vector.multi_reduction <add>, %124, %cst_53 [1] : vector<16x32xf32> to vector<16xf32>
    %126 = vector.shape_cast %125 : vector<16xf32> to vector<16x1xf32>
    %cst_54 = arith.constant 3.200000e+01 : f32
    %127 = vector.broadcast %cst_54 : f32 to vector<16x1xf32>
    %128 = arith.divf %126, %127 : vector<16x1xf32>
    %129 = vector.broadcast %121 : vector<16x1xf32> to vector<16x32xf32>
    %130 = arith.subf %113, %129 : vector<16x32xf32>
    %cst_55 = arith.constant 9.99999996E-13 : f32
    %131 = vector.broadcast %cst_55 : f32 to vector<16x1xf32>
    %132 = arith.addf %128, %131 : vector<16x1xf32>
    %133 = math.rsqrt %132 : vector<16x1xf32>
    %134 = vector.broadcast %133 : vector<16x1xf32> to vector<16x32xf32>
    %135 = arith.mulf %130, %134 : vector<16x32xf32>
    %136 = vector.broadcast %115 : vector<1x32xf32> to vector<16x32xf32>
    %137 = arith.mulf %135, %136 : vector<16x32xf32>
    %138 = vector.broadcast %117 : vector<1x32xf32> to vector<16x32xf32>
    %139 = arith.addf %137, %138 : vector<16x32xf32>
    %c0_56 = arith.constant 0 : index
    %c0_57 = arith.constant 0 : index
    %c0_58 = arith.constant 0 : index
    %140 = vector.load %arg10[%c0_56, %c0_57, %c0_58] : memref<2x32x64xf32, #tpu.memory_space<vmem>>, vector<1x32x64xf32>
    %141 = vector.shape_cast %140 : vector<1x32x64xf32> to vector<32x64xf32>
    %cst_59 = arith.constant dense<0.000000e+00> : vector<16x64xf32>
    %142 = tpu.matmul %139, %141, %cst_59 {dimension_numbers = #tpu.dot_dimension_numbers<[1], [0], [0], [1], [0, 0, 1, 1], [], []>} : vector<16x32xf32>, vector<32x64xf32>, vector<16x64xf32> -> vector<16x64xf32>
    %c0_60 = arith.constant 0 : index
    %c0_61 = arith.constant 0 : index
    %c0_62 = arith.constant 0 : index
    %143 = vector.load %arg11[%c0_60, %c0_61, %c0_62] : memref<2x1x64xf32, #tpu.memory_space<vmem>>, vector<1x1x64xf32>
    %144 = vector.shape_cast %143 : vector<1x1x64xf32> to vector<1x64xf32>
    %145 = vector.broadcast %144 : vector<1x64xf32> to vector<16x64xf32>
    %146 = arith.addf %142, %145 : vector<16x64xf32>
    %cst_63 = arith.constant 5.000000e-01 : f32
    %147 = vector.broadcast %cst_63 : f32 to vector<16x64xf32>
    %148 = arith.mulf %147, %146 : vector<16x64xf32>
    %cst_64 = arith.constant 4.471500e-02 : f32
    %149 = vector.broadcast %cst_64 : f32 to vector<16x64xf32>
    %150 = arith.mulf %149, %146 : vector<16x64xf32>
    %151 = arith.mulf %150, %146 : vector<16x64xf32>
    %152 = arith.mulf %151, %146 : vector<16x64xf32>
    %153 = arith.addf %146, %152 : vector<16x64xf32>
    %cst_65 = arith.constant 0.797884583 : f32
    %154 = vector.broadcast %cst_65 : f32 to vector<16x64xf32>
    %155 = arith.mulf %154, %153 : vector<16x64xf32>
    %156 = math.tanh %155 : vector<16x64xf32>
    %cst_66 = arith.constant 1.000000e+00 : f32
    %157 = vector.broadcast %cst_66 : f32 to vector<16x64xf32>
    %158 = arith.addf %157, %156 : vector<16x64xf32>
    %159 = arith.mulf %148, %158 : vector<16x64xf32>
    %c0_67 = arith.constant 0 : index
    %c0_68 = arith.constant 0 : index
    %c0_69 = arith.constant 0 : index
    %160 = vector.load %arg12[%c0_67, %c0_68, %c0_69] : memref<2x64x32xf32, #tpu.memory_space<vmem>>, vector<1x64x32xf32>
    %161 = vector.shape_cast %160 : vector<1x64x32xf32> to vector<64x32xf32>
    %cst_70 = arith.constant dense<0.000000e+00> : vector<16x32xf32>
    %162 = tpu.matmul %159, %161, %cst_70 {dimension_numbers = #tpu.dot_dimension_numbers<[1], [0], [0], [1], [0, 0, 1, 1], [], []>} : vector<16x64xf32>, vector<64x32xf32>, vector<16x32xf32> -> vector<16x32xf32>
    %c0_71 = arith.constant 0 : index
    %c0_72 = arith.constant 0 : index
    %c0_73 = arith.constant 0 : index
    %163 = vector.load %arg13[%c0_71, %c0_72, %c0_73] : memref<2x1x32xf32, #tpu.memory_space<vmem>>, vector<1x1x32xf32>
    %164 = vector.shape_cast %163 : vector<1x1x32xf32> to vector<1x32xf32>
    %165 = vector.broadcast %164 : vector<1x32xf32> to vector<16x32xf32>
    %166 = arith.addf %162, %165 : vector<16x32xf32>
    %167 = arith.addf %139, %166 : vector<16x32xf32>
    %c0_74 = arith.constant 0 : index
    %c0_75 = arith.constant 0 : index
    %c0_76 = arith.constant 0 : index
    %168 = vector.load %arg14[%c0_74, %c0_75, %c0_76] : memref<2x1x32xf32, #tpu.memory_space<vmem>>, vector<1x1x32xf32>
    %169 = vector.shape_cast %168 : vector<1x1x32xf32> to vector<1x32xf32>
    %c0_77 = arith.constant 0 : index
    %c0_78 = arith.constant 0 : index
    %c0_79 = arith.constant 0 : index
    %170 = vector.load %arg15[%c0_77, %c0_78, %c0_79] : memref<2x1x32xf32, #tpu.memory_space<vmem>>, vector<1x1x32xf32>
    %171 = vector.shape_cast %170 : vector<1x1x32xf32> to vector<1x32xf32>
    %cst_80 = arith.constant dense<0.000000e+00> : vector<16xf32>
    %172 = vector.multi_reduction <add>, %167, %cst_80 [1] : vector<16x32xf32> to vector<16xf32>
    %173 = vector.shape_cast %172 : vector<16xf32> to vector<16x1xf32>
    %cst_81 = arith.constant 3.200000e+01 : f32
    %174 = vector.broadcast %cst_81 : f32 to vector<16x1xf32>
    %175 = arith.divf %173, %174 : vector<16x1xf32>
    %176 = vector.broadcast %175 : vector<16x1xf32> to vector<16x32xf32>
    %177 = arith.subf %167, %176 : vector<16x32xf32>
    %178 = arith.mulf %177, %177 : vector<16x32xf32>
    %cst_82 = arith.constant dense<0.000000e+00> : vector<16xf32>
    %179 = vector.multi_reduction <add>, %178, %cst_82 [1] : vector<16x32xf32> to vector<16xf32>
    %180 = vector.shape_cast %179 : vector<16xf32> to vector<16x1xf32>
    %cst_83 = arith.constant 3.200000e+01 : f32
    %181 = vector.broadcast %cst_83 : f32 to vector<16x1xf32>
    %182 = arith.divf %180, %181 : vector<16x1xf32>
    %183 = vector.broadcast %175 : vector<16x1xf32> to vector<16x32xf32>
    %184 = arith.subf %167, %183 : vector<16x32xf32>
    %cst_84 = arith.constant 9.99999996E-13 : f32
    %185 = vector.broadcast %cst_84 : f32 to vector<16x1xf32>
    %186 = arith.addf %182, %185 : vector<16x1xf32>
    %187 = math.rsqrt %186 : vector<16x1xf32>
    %188 = vector.broadcast %187 : vector<16x1xf32> to vector<16x32xf32>
    %189 = arith.mulf %184, %188 : vector<16x32xf32>
    %190 = vector.broadcast %169 : vector<1x32xf32> to vector<16x32xf32>
    %191 = arith.mulf %189, %190 : vector<16x32xf32>
    %192 = vector.broadcast %171 : vector<1x32xf32> to vector<16x32xf32>
    %193 = arith.addf %191, %192 : vector<16x32xf32>
    %c1 = arith.constant 1 : index
    %c0_85 = arith.constant 0 : index
    %c0_86 = arith.constant 0 : index
    %194 = vector.load %arg4[%c1, %c0_85, %c0_86] : memref<2x96x32xf32, #tpu.memory_space<vmem>>, vector<1x96x32xf32>
    %195 = vector.shape_cast %194 : vector<1x96x32xf32> to vector<96x32xf32>
    %cst_87 = arith.constant dense<0.000000e+00> : vector<96x16xf32>
    %196 = tpu.matmul %195, %193, %cst_87 {dimension_numbers = #tpu.dot_dimension_numbers<[1], [1], [0], [0], [0, 0, 1, 0], [], []>} : vector<96x32xf32>, vector<16x32xf32>, vector<96x16xf32> -> vector<96x16xf32>
    %c1_88 = arith.constant 1 : index
    %c0_89 = arith.constant 0 : index
    %c0_90 = arith.constant 0 : index
    %197 = vector.load %arg5[%c1_88, %c0_89, %c0_90] : memref<2x96x1xf32, #tpu.memory_space<vmem>>, vector<1x96x1xf32>
    %198 = vector.shape_cast %197 : vector<1x96x1xf32> to vector<96x1xf32>
    %199 = vector.broadcast %198 : vector<96x1xf32> to vector<96x16xf32>
    %200 = arith.addf %196, %199 : vector<96x16xf32>
    %201 = vector.extract_strided_slice %200 {offsets = [0, 0], sizes = [8, 16], strides = [1, 1]} : vector<96x16xf32> to vector<8x16xf32>
    %202 = vector.extract_strided_slice %200 {offsets = [32, 0], sizes = [8, 16], strides = [1, 1]} : vector<96x16xf32> to vector<8x16xf32>
    %203 = vector.extract_strided_slice %200 {offsets = [64, 0], sizes = [8, 16], strides = [1, 1]} : vector<96x16xf32> to vector<8x16xf32>
    %cst_91 = arith.constant dense<0.000000e+00> : vector<16x16xf32>
    %204 = tpu.matmul %201, %202, %cst_91 {dimension_numbers = #tpu.dot_dimension_numbers<[0], [0], [1], [1], [0, 1, 1, 1], [], []>} : vector<8x16xf32>, vector<8x16xf32>, vector<16x16xf32> -> vector<16x16xf32>
    %cst_92 = arith.constant 0.353553385 : f32
    %205 = vector.broadcast %cst_92 : f32 to vector<16x16xf32>
    %206 = arith.mulf %204, %205 : vector<16x16xf32>
    %207 = arith.addf %206, %0 : vector<16x16xf32>
    %cst_93 = arith.constant dense<0xFF800000> : vector<16xf32>
    %208 = vector.multi_reduction <maximumf>, %207, %cst_93 [1] : vector<16x16xf32> to vector<16xf32>
    %209 = vector.shape_cast %208 : vector<16xf32> to vector<16x1xf32>
    %210 = vector.broadcast %209 : vector<16x1xf32> to vector<16x16xf32>
    %211 = arith.subf %207, %210 : vector<16x16xf32>
    %212 = math.exp %211 : vector<16x16xf32>
    %cst_94 = arith.constant dense<0.000000e+00> : vector<16xf32>
    %213 = vector.multi_reduction <add>, %212, %cst_94 [1] : vector<16x16xf32> to vector<16xf32>
    %214 = vector.shape_cast %213 : vector<16xf32> to vector<16x1xf32>
    %215 = tpu.reciprocal %214 {approx = true} : vector<16x1xf32> -> vector<16x1xf32>
    %216 = vector.broadcast %215 : vector<16x1xf32> to vector<16x16xf32>
    %217 = arith.mulf %212, %216 : vector<16x16xf32>
    %cst_95 = arith.constant dense<0.000000e+00> : vector<8x16xf32>
    %218 = tpu.matmul %203, %217, %cst_95 {dimension_numbers = #tpu.dot_dimension_numbers<[1], [1], [0], [0], [0, 0, 1, 0], [], []>} : vector<8x16xf32>, vector<16x16xf32>, vector<8x16xf32> -> vector<8x16xf32>
    %219 = vector.extract_strided_slice %200 {offsets = [8, 0], sizes = [8, 16], strides = [1, 1]} : vector<96x16xf32> to vector<8x16xf32>
    %220 = vector.extract_strided_slice %200 {offsets = [40, 0], sizes = [8, 16], strides = [1, 1]} : vector<96x16xf32> to vector<8x16xf32>
    %221 = vector.extract_strided_slice %200 {offsets = [72, 0], sizes = [8, 16], strides = [1, 1]} : vector<96x16xf32> to vector<8x16xf32>
    %cst_96 = arith.constant dense<0.000000e+00> : vector<16x16xf32>
    %222 = tpu.matmul %219, %220, %cst_96 {dimension_numbers = #tpu.dot_dimension_numbers<[0], [0], [1], [1], [0, 1, 1, 1], [], []>} : vector<8x16xf32>, vector<8x16xf32>, vector<16x16xf32> -> vector<16x16xf32>
    %cst_97 = arith.constant 0.353553385 : f32
    %223 = vector.broadcast %cst_97 : f32 to vector<16x16xf32>
    %224 = arith.mulf %222, %223 : vector<16x16xf32>
    %225 = arith.addf %224, %0 : vector<16x16xf32>
    %cst_98 = arith.constant dense<0xFF800000> : vector<16xf32>
    %226 = vector.multi_reduction <maximumf>, %225, %cst_98 [1] : vector<16x16xf32> to vector<16xf32>
    %227 = vector.shape_cast %226 : vector<16xf32> to vector<16x1xf32>
    %228 = vector.broadcast %227 : vector<16x1xf32> to vector<16x16xf32>
    %229 = arith.subf %225, %228 : vector<16x16xf32>
    %230 = math.exp %229 : vector<16x16xf32>
    %cst_99 = arith.constant dense<0.000000e+00> : vector<16xf32>
    %231 = vector.multi_reduction <add>, %230, %cst_99 [1] : vector<16x16xf32> to vector<16xf32>
    %232 = vector.shape_cast %231 : vector<16xf32> to vector<16x1xf32>
    %233 = tpu.reciprocal %232 {approx = true} : vector<16x1xf32> -> vector<16x1xf32>
    %234 = vector.broadcast %233 : vector<16x1xf32> to vector<16x16xf32>
    %235 = arith.mulf %230, %234 : vector<16x16xf32>
    %cst_100 = arith.constant dense<0.000000e+00> : vector<8x16xf32>
    %236 = tpu.matmul %221, %235, %cst_100 {dimension_numbers = #tpu.dot_dimension_numbers<[1], [1], [0], [0], [0, 0, 1, 0], [], []>} : vector<8x16xf32>, vector<16x16xf32>, vector<8x16xf32> -> vector<8x16xf32>
    %237 = vector.extract_strided_slice %200 {offsets = [16, 0], sizes = [8, 16], strides = [1, 1]} : vector<96x16xf32> to vector<8x16xf32>
    %238 = vector.extract_strided_slice %200 {offsets = [48, 0], sizes = [8, 16], strides = [1, 1]} : vector<96x16xf32> to vector<8x16xf32>
    %239 = vector.extract_strided_slice %200 {offsets = [80, 0], sizes = [8, 16], strides = [1, 1]} : vector<96x16xf32> to vector<8x16xf32>
    %cst_101 = arith.constant dense<0.000000e+00> : vector<16x16xf32>
    %240 = tpu.matmul %237, %238, %cst_101 {dimension_numbers = #tpu.dot_dimension_numbers<[0], [0], [1], [1], [0, 1, 1, 1], [], []>} : vector<8x16xf32>, vector<8x16xf32>, vector<16x16xf32> -> vector<16x16xf32>
    %cst_102 = arith.constant 0.353553385 : f32
    %241 = vector.broadcast %cst_102 : f32 to vector<16x16xf32>
    %242 = arith.mulf %240, %241 : vector<16x16xf32>
    %243 = arith.addf %242, %0 : vector<16x16xf32>
    %cst_103 = arith.constant dense<0xFF800000> : vector<16xf32>
    %244 = vector.multi_reduction <maximumf>, %243, %cst_103 [1] : vector<16x16xf32> to vector<16xf32>
    %245 = vector.shape_cast %244 : vector<16xf32> to vector<16x1xf32>
    %246 = vector.broadcast %245 : vector<16x1xf32> to vector<16x16xf32>
    %247 = arith.subf %243, %246 : vector<16x16xf32>
    %248 = math.exp %247 : vector<16x16xf32>
    %cst_104 = arith.constant dense<0.000000e+00> : vector<16xf32>
    %249 = vector.multi_reduction <add>, %248, %cst_104 [1] : vector<16x16xf32> to vector<16xf32>
    %250 = vector.shape_cast %249 : vector<16xf32> to vector<16x1xf32>
    %251 = tpu.reciprocal %250 {approx = true} : vector<16x1xf32> -> vector<16x1xf32>
    %252 = vector.broadcast %251 : vector<16x1xf32> to vector<16x16xf32>
    %253 = arith.mulf %248, %252 : vector<16x16xf32>
    %cst_105 = arith.constant dense<0.000000e+00> : vector<8x16xf32>
    %254 = tpu.matmul %239, %253, %cst_105 {dimension_numbers = #tpu.dot_dimension_numbers<[1], [1], [0], [0], [0, 0, 1, 0], [], []>} : vector<8x16xf32>, vector<16x16xf32>, vector<8x16xf32> -> vector<8x16xf32>
    %255 = vector.extract_strided_slice %200 {offsets = [24, 0], sizes = [8, 16], strides = [1, 1]} : vector<96x16xf32> to vector<8x16xf32>
    %256 = vector.extract_strided_slice %200 {offsets = [56, 0], sizes = [8, 16], strides = [1, 1]} : vector<96x16xf32> to vector<8x16xf32>
    %257 = vector.extract_strided_slice %200 {offsets = [88, 0], sizes = [8, 16], strides = [1, 1]} : vector<96x16xf32> to vector<8x16xf32>
    %cst_106 = arith.constant dense<0.000000e+00> : vector<16x16xf32>
    %258 = tpu.matmul %255, %256, %cst_106 {dimension_numbers = #tpu.dot_dimension_numbers<[0], [0], [1], [1], [0, 1, 1, 1], [], []>} : vector<8x16xf32>, vector<8x16xf32>, vector<16x16xf32> -> vector<16x16xf32>
    %cst_107 = arith.constant 0.353553385 : f32
    %259 = vector.broadcast %cst_107 : f32 to vector<16x16xf32>
    %260 = arith.mulf %258, %259 : vector<16x16xf32>
    %261 = arith.addf %260, %0 : vector<16x16xf32>
    %cst_108 = arith.constant dense<0xFF800000> : vector<16xf32>
    %262 = vector.multi_reduction <maximumf>, %261, %cst_108 [1] : vector<16x16xf32> to vector<16xf32>
    %263 = vector.shape_cast %262 : vector<16xf32> to vector<16x1xf32>
    %264 = vector.broadcast %263 : vector<16x1xf32> to vector<16x16xf32>
    %265 = arith.subf %261, %264 : vector<16x16xf32>
    %266 = math.exp %265 : vector<16x16xf32>
    %cst_109 = arith.constant dense<0.000000e+00> : vector<16xf32>
    %267 = vector.multi_reduction <add>, %266, %cst_109 [1] : vector<16x16xf32> to vector<16xf32>
    %268 = vector.shape_cast %267 : vector<16xf32> to vector<16x1xf32>
    %269 = tpu.reciprocal %268 {approx = true} : vector<16x1xf32> -> vector<16x1xf32>
    %270 = vector.broadcast %269 : vector<16x1xf32> to vector<16x16xf32>
    %271 = arith.mulf %266, %270 : vector<16x16xf32>
    %cst_110 = arith.constant dense<0.000000e+00> : vector<8x16xf32>
    %272 = tpu.matmul %257, %271, %cst_110 {dimension_numbers = #tpu.dot_dimension_numbers<[1], [1], [0], [0], [0, 0, 1, 0], [], []>} : vector<8x16xf32>, vector<16x16xf32>, vector<8x16xf32> -> vector<8x16xf32>
    %273 = tpu.concatenate %218, %236, %254, %272 in 0 : vector<8x16xf32>, vector<8x16xf32>, vector<8x16xf32>, vector<8x16xf32> -> vector<32x16xf32>
    %c1_111 = arith.constant 1 : index
    %c0_112 = arith.constant 0 : index
    %c0_113 = arith.constant 0 : index
    %274 = vector.load %arg6[%c1_111, %c0_112, %c0_113] : memref<2x32x32xf32, #tpu.memory_space<vmem>>, vector<1x32x32xf32>
    %275 = vector.shape_cast %274 : vector<1x32x32xf32> to vector<32x32xf32>
    %cst_114 = arith.constant dense<0.000000e+00> : vector<16x32xf32>
    %276 = tpu.matmul %273, %275, %cst_114 {dimension_numbers = #tpu.dot_dimension_numbers<[0], [0], [1], [1], [0, 1, 1, 1], [], []>} : vector<32x16xf32>, vector<32x32xf32>, vector<16x32xf32> -> vector<16x32xf32>
    %c1_115 = arith.constant 1 : index
    %c0_116 = arith.constant 0 : index
    %c0_117 = arith.constant 0 : index
    %277 = vector.load %arg7[%c1_115, %c0_116, %c0_117] : memref<2x1x32xf32, #tpu.memory_space<vmem>>, vector<1x1x32xf32>
    %278 = vector.shape_cast %277 : vector<1x1x32xf32> to vector<1x32xf32>
    %279 = vector.broadcast %278 : vector<1x32xf32> to vector<16x32xf32>
    %280 = arith.addf %276, %279 : vector<16x32xf32>
    %281 = arith.addf %193, %280 : vector<16x32xf32>
    %c1_118 = arith.constant 1 : index
    %c0_119 = arith.constant 0 : index
    %c0_120 = arith.constant 0 : index
    %282 = vector.load %arg8[%c1_118, %c0_119, %c0_120] : memref<2x1x32xf32, #tpu.memory_space<vmem>>, vector<1x1x32xf32>
    %283 = vector.shape_cast %282 : vector<1x1x32xf32> to vector<1x32xf32>
    %c1_121 = arith.constant 1 : index
    %c0_122 = arith.constant 0 : index
    %c0_123 = arith.constant 0 : index
    %284 = vector.load %arg9[%c1_121, %c0_122, %c0_123] : memref<2x1x32xf32, #tpu.memory_space<vmem>>, vector<1x1x32xf32>
    %285 = vector.shape_cast %284 : vector<1x1x32xf32> to vector<1x32xf32>
    %cst_124 = arith.constant dense<0.000000e+00> : vector<16xf32>
    %286 = vector.multi_reduction <add>, %281, %cst_124 [1] : vector<16x32xf32> to vector<16xf32>
    %287 = vector.shape_cast %286 : vector<16xf32> to vector<16x1xf32>
    %cst_125 = arith.constant 3.200000e+01 : f32
    %288 = vector.broadcast %cst_125 : f32 to vector<16x1xf32>
    %289 = arith.divf %287, %288 : vector<16x1xf32>
    %290 = vector.broadcast %289 : vector<16x1xf32> to vector<16x32xf32>
    %291 = arith.subf %281, %290 : vector<16x32xf32>
    %292 = arith.mulf %291, %291 : vector<16x32xf32>
    %cst_126 = arith.constant dense<0.000000e+00> : vector<16xf32>
    %293 = vector.multi_reduction <add>, %292, %cst_126 [1] : vector<16x32xf32> to vector<16xf32>
    %294 = vector.shape_cast %293 : vector<16xf32> to vector<16x1xf32>
    %cst_127 = arith.constant 3.200000e+01 : f32
    %295 = vector.broadcast %cst_127 : f32 to vector<16x1xf32>
    %296 = arith.divf %294, %295 : vector<16x1xf32>
    %297 = vector.broadcast %289 : vector<16x1xf32> to vector<16x32xf32>
    %298 = arith.subf %281, %297 : vector<16x32xf32>
    %cst_128 = arith.constant 9.99999996E-13 : f32
    %299 = vector.broadcast %cst_128 : f32 to vector<16x1xf32>
    %300 = arith.addf %296, %299 : vector<16x1xf32>
    %301 = math.rsqrt %300 : vector<16x1xf32>
    %302 = vector.broadcast %301 : vector<16x1xf32> to vector<16x32xf32>
    %303 = arith.mulf %298, %302 : vector<16x32xf32>
    %304 = vector.broadcast %283 : vector<1x32xf32> to vector<16x32xf32>
    %305 = arith.mulf %303, %304 : vector<16x32xf32>
    %306 = vector.broadcast %285 : vector<1x32xf32> to vector<16x32xf32>
    %307 = arith.addf %305, %306 : vector<16x32xf32>
    %c1_129 = arith.constant 1 : index
    %c0_130 = arith.constant 0 : index
    %c0_131 = arith.constant 0 : index
    %308 = vector.load %arg10[%c1_129, %c0_130, %c0_131] : memref<2x32x64xf32, #tpu.memory_space<vmem>>, vector<1x32x64xf32>
    %309 = vector.shape_cast %308 : vector<1x32x64xf32> to vector<32x64xf32>
    %cst_132 = arith.constant dense<0.000000e+00> : vector<16x64xf32>
    %310 = tpu.matmul %307, %309, %cst_132 {dimension_numbers = #tpu.dot_dimension_numbers<[1], [0], [0], [1], [0, 0, 1, 1], [], []>} : vector<16x32xf32>, vector<32x64xf32>, vector<16x64xf32> -> vector<16x64xf32>
    %c1_133 = arith.constant 1 : index
    %c0_134 = arith.constant 0 : index
    %c0_135 = arith.constant 0 : index
    %311 = vector.load %arg11[%c1_133, %c0_134, %c0_135] : memref<2x1x64xf32, #tpu.memory_space<vmem>>, vector<1x1x64xf32>
    %312 = vector.shape_cast %311 : vector<1x1x64xf32> to vector<1x64xf32>
    %313 = vector.broadcast %312 : vector<1x64xf32> to vector<16x64xf32>
    %314 = arith.addf %310, %313 : vector<16x64xf32>
    %cst_136 = arith.constant 5.000000e-01 : f32
    %315 = vector.broadcast %cst_136 : f32 to vector<16x64xf32>
    %316 = arith.mulf %315, %314 : vector<16x64xf32>
    %cst_137 = arith.constant 4.471500e-02 : f32
    %317 = vector.broadcast %cst_137 : f32 to vector<16x64xf32>
    %318 = arith.mulf %317, %314 : vector<16x64xf32>
    %319 = arith.mulf %318, %314 : vector<16x64xf32>
    %320 = arith.mulf %319, %314 : vector<16x64xf32>
    %321 = arith.addf %314, %320 : vector<16x64xf32>
    %cst_138 = arith.constant 0.797884583 : f32
    %322 = vector.broadcast %cst_138 : f32 to vector<16x64xf32>
    %323 = arith.mulf %322, %321 : vector<16x64xf32>
    %324 = math.tanh %323 : vector<16x64xf32>
    %cst_139 = arith.constant 1.000000e+00 : f32
    %325 = vector.broadcast %cst_139 : f32 to vector<16x64xf32>
    %326 = arith.addf %325, %324 : vector<16x64xf32>
    %327 = arith.mulf %316, %326 : vector<16x64xf32>
    %c1_140 = arith.constant 1 : index
    %c0_141 = arith.constant 0 : index
    %c0_142 = arith.constant 0 : index
    %328 = vector.load %arg12[%c1_140, %c0_141, %c0_142] : memref<2x64x32xf32, #tpu.memory_space<vmem>>, vector<1x64x32xf32>
    %329 = vector.shape_cast %328 : vector<1x64x32xf32> to vector<64x32xf32>
    %cst_143 = arith.constant dense<0.000000e+00> : vector<16x32xf32>
    %330 = tpu.matmul %327, %329, %cst_143 {dimension_numbers = #tpu.dot_dimension_numbers<[1], [0], [0], [1], [0, 0, 1, 1], [], []>} : vector<16x64xf32>, vector<64x32xf32>, vector<16x32xf32> -> vector<16x32xf32>
    %c1_144 = arith.constant 1 : index
    %c0_145 = arith.constant 0 : index
    %c0_146 = arith.constant 0 : index
    %331 = vector.load %arg13[%c1_144, %c0_145, %c0_146] : memref<2x1x32xf32, #tpu.memory_space<vmem>>, vector<1x1x32xf32>
    %332 = vector.shape_cast %331 : vector<1x1x32xf32> to vector<1x32xf32>
    %333 = vector.broadcast %332 : vector<1x32xf32> to vector<16x32xf32>
    %334 = arith.addf %330, %333 : vector<16x32xf32>
    %335 = arith.addf %307, %334 : vector<16x32xf32>
    %c1_147 = arith.constant 1 : index
    %c0_148 = arith.constant 0 : index
    %c0_149 = arith.constant 0 : index
    %336 = vector.load %arg14[%c1_147, %c0_148, %c0_149] : memref<2x1x32xf32, #tpu.memory_space<vmem>>, vector<1x1x32xf32>
    %337 = vector.shape_cast %336 : vector<1x1x32xf32> to vector<1x32xf32>
    %c1_150 = arith.constant 1 : index
    %c0_151 = arith.constant 0 : index
    %c0_152 = arith.constant 0 : index
    %338 = vector.load %arg15[%c1_150, %c0_151, %c0_152] : memref<2x1x32xf32, #tpu.memory_space<vmem>>, vector<1x1x32xf32>
    %339 = vector.shape_cast %338 : vector<1x1x32xf32> to vector<1x32xf32>
    %cst_153 = arith.constant dense<0.000000e+00> : vector<16xf32>
    %340 = vector.multi_reduction <add>, %335, %cst_153 [1] : vector<16x32xf32> to vector<16xf32>
    %341 = vector.shape_cast %340 : vector<16xf32> to vector<16x1xf32>
    %cst_154 = arith.constant 3.200000e+01 : f32
    %342 = vector.broadcast %cst_154 : f32 to vector<16x1xf32>
    %343 = arith.divf %341, %342 : vector<16x1xf32>
    %344 = vector.broadcast %343 : vector<16x1xf32> to vector<16x32xf32>
    %345 = arith.subf %335, %344 : vector<16x32xf32>
    %346 = arith.mulf %345, %345 : vector<16x32xf32>
    %cst_155 = arith.constant dense<0.000000e+00> : vector<16xf32>
    %347 = vector.multi_reduction <add>, %346, %cst_155 [1] : vector<16x32xf32> to vector<16xf32>
    %348 = vector.shape_cast %347 : vector<16xf32> to vector<16x1xf32>
    %cst_156 = arith.constant 3.200000e+01 : f32
    %349 = vector.broadcast %cst_156 : f32 to vector<16x1xf32>
    %350 = arith.divf %348, %349 : vector<16x1xf32>
    %351 = vector.broadcast %343 : vector<16x1xf32> to vector<16x32xf32>
    %352 = arith.subf %335, %351 : vector<16x32xf32>
    %cst_157 = arith.constant 9.99999996E-13 : f32
    %353 = vector.broadcast %cst_157 : f32 to vector<16x1xf32>
    %354 = arith.addf %350, %353 : vector<16x1xf32>
    %355 = math.rsqrt %354 : vector<16x1xf32>
    %356 = vector.broadcast %355 : vector<16x1xf32> to vector<16x32xf32>
    %357 = arith.mulf %352, %356 : vector<16x32xf32>
    %358 = vector.broadcast %337 : vector<1x32xf32> to vector<16x32xf32>
    %359 = arith.mulf %357, %358 : vector<16x32xf32>
    %360 = vector.broadcast %339 : vector<1x32xf32> to vector<16x32xf32>
    %361 = arith.addf %359, %360 : vector<16x32xf32>
    %362 = vector.extract_strided_slice %361 {offsets = [0, 0], sizes = [1, 32], strides = [1, 1]} : vector<16x32xf32> to vector<1x32xf32>
    %363 = vector.extract_strided_slice %361 {offsets = [8, 0], sizes = [1, 32], strides = [1, 1]} : vector<16x32xf32> to vector<1x32xf32>
    %364 = tpu.concatenate %362, %363 in 0 : vector<1x32xf32>, vector<1x32xf32> -> vector<2x32xf32>
    %c0_158 = arith.constant 0 : index
    %c0_159 = arith.constant 0 : index
    %365 = vector.load %arg16[%c0_158, %c0_159] : memref<32x32xf32, #tpu.memory_space<vmem>>, vector<32x32xf32>
    %cst_160 = arith.constant dense<0.000000e+00> : vector<2x32xf32>
    %366 = tpu.matmul %364, %365, %cst_160 {dimension_numbers = #tpu.dot_dimension_numbers<[1], [0], [0], [1], [0, 0, 1, 1], [], []>} : vector<2x32xf32>, vector<32x32xf32>, vector<2x32xf32> -> vector<2x32xf32>
    %c0_161 = arith.constant 0 : index
    %c0_162 = arith.constant 0 : index
    %367 = vector.load %arg17[%c0_161, %c0_162] : memref<1x32xf32, #tpu.memory_space<vmem>>, vector<1x32xf32>
    %368 = vector.broadcast %367 : vector<1x32xf32> to vector<2x32xf32>
    %369 = arith.addf %366, %368 : vector<2x32xf32>
    %370 = math.tanh %369 : vector<2x32xf32>
    %c0_163 = arith.constant 0 : index
    %c0_164 = arith.constant 0 : index
    %371 = vector.load %arg18[%c0_163, %c0_164] : memref<34x128xf32, #tpu.memory_space<vmem>>, vector<32x128xf32>
    %cst_165 = arith.constant dense<0.000000e+00> : vector<2x128xf32>
    %372 = tpu.matmul %370, %371, %cst_165 {dimension_numbers = #tpu.dot_dimension_numbers<[1], [0], [0], [1], [0, 0, 1, 1], [], []>} : vector<2x32xf32>, vector<32x128xf32>, vector<2x128xf32> -> vector<2x128xf32>
    %c0_166 = arith.constant 0 : index
    %c0_167 = arith.constant 0 : index
    %373 = vector.load %arg20[%c0_166, %c0_167] : memref<2x2xf32, #tpu.memory_space<vmem>>, vector<2x2xf32>
    %c32 = arith.constant 32 : index
    %c0_168 = arith.constant 0 : index
    %374 = vector.load %arg18[%c32, %c0_168] : memref<34x128xf32, #tpu.memory_space<vmem>>, vector<2x128xf32>
    %cst_169 = arith.constant dense<0.000000e+00> : vector<2x128xf32>
    %375 = tpu.matmul %373, %374, %cst_169 {dimension_numbers = #tpu.dot_dimension_numbers<[1], [0], [0], [1], [0, 0, 1, 1], [], []>} : vector<2x2xf32>, vector<2x128xf32>, vector<2x128xf32> -> vector<2x128xf32>
    %376 = arith.addf %372, %375 : vector<2x128xf32>
    %c0_170 = arith.constant 0 : index
    %c0_171 = arith.constant 0 : index
    %377 = vector.load %arg19[%c0_170, %c0_171] : memref<1x128xf32, #tpu.memory_space<vmem>>, vector<1x128xf32>
    %378 = vector.broadcast %377 : vector<1x128xf32> to vector<2x128xf32>
    %379 = arith.addf %376, %378 : vector<2x128xf32>
    %c0_172 = arith.constant 0 : index
    %c0_173 = arith.constant 0 : index
    %380 = vector.load %arg21[%c0_172, %c0_173] : memref<2x128xf32, #tpu.memory_space<vmem>>, vector<2x128xf32>
    tpu.vector_store %arg21[%c0_172, %c0_173], %379 {strides = array<i32>} : memref<2x128xf32, #tpu.memory_space<vmem>>, vector<2x128xf32>,
    return
  }
}

</mosaic_0001>

<llo_original>
// kernel: tpu_custom_call.1
$region0: #{tpu_custom_call.1}
  #allocation0 [shape = 'u32[]', space=smem, size = 0x4, offset = 0x4, fixed_abs, tag = 'smem constant byte address 0x4 - core index']
  #allocation1 [shape = 'u32[144,128]{1,0:T(1,128)}', space=vmem, size = 0x12000, scoped, tag = 'internal scratch']
  %s0 = inlined_call_operand.vmem [shape: f32[16,32], index: 0, kind: input, shape index: {}]
  %s1 = inlined_call_operand.vmem [shape: f32[16,16], index: 1, kind: input, shape index: {}]
  %s2 = inlined_call_operand.vmem [shape: f32[1,32], index: 2, kind: input, shape index: {}]
  %s3 = inlined_call_operand.vmem [shape: f32[1,32], index: 3, kind: input, shape index: {}]
  %s4 = inlined_call_operand.vmem [shape: f32[2,96,32], index: 4, kind: input, shape index: {}]
  %s5 = inlined_call_operand.vmem [shape: f32[2,96,1], index: 5, kind: input, shape index: {}]
  %s6 = inlined_call_operand.vmem [shape: f32[2,32,32], index: 6, kind: input, shape index: {}]
  %s7 = inlined_call_operand.vmem [shape: f32[2,1,32], index: 7, kind: input, shape index: {}]
  %s8 = inlined_call_operand.vmem [shape: f32[2,1,32], index: 8, kind: input, shape index: {}]
  %s9 = inlined_call_operand.vmem [shape: f32[2,1,32], index: 9, kind: input, shape index: {}]
  %s10 = inlined_call_operand.vmem [shape: f32[2,32,64], index: 10, kind: input, shape index: {}]
  %s11 = inlined_call_operand.vmem [shape: f32[2,1,64], index: 11, kind: input, shape index: {}]
  %s12 = inlined_call_operand.vmem [shape: f32[2,64,32], index: 12, kind: input, shape index: {}]
  %s13 = inlined_call_operand.vmem [shape: f32[2,1,32], index: 13, kind: input, shape index: {}]
  %s14 = inlined_call_operand.vmem [shape: f32[2,1,32], index: 14, kind: input, shape index: {}]
  %s15 = inlined_call_operand.vmem [shape: f32[2,1,32], index: 15, kind: input, shape index: {}]
  %s16 = inlined_call_operand.vmem [shape: f32[32,32], index: 16, kind: input, shape index: {}]
  %s17 = inlined_call_operand.vmem [shape: f32[1,32], index: 17, kind: input, shape index: {}]
  %s18 = inlined_call_operand.vmem [shape: f32[34,128], index: 18, kind: input, shape index: {}]
  %s19 = inlined_call_operand.vmem [shape: f32[1,128], index: 19, kind: input, shape index: {}]
  %s20 = inlined_call_operand.vmem [shape: f32[2,2], index: 20, kind: input, shape index: {}]
  %s21 = inlined_call_operand.hbm [shape: f32[2,128], index: 21, kind: output, shape index: {}]
  %s22 = sld [smem:[#allocation0]]
  $region94: #{tpu_custom_call.1} parent=0
    _
  %s24 = ssub.s32 1, %s22
  %s25 = scalar_select 0, %s24, %s22
  $region1: #{tpu_custom_call.1} parent=0
    #allocation2 [shape = 'u8[1024]{0}', space=vmem, size = 0x400, scoped, tag = 'output window, operand 0, single buffered']
    #allocation3 [shape = 's32[1]{0}', space=sflag, size = 0x4, scoped, tag = 'scoped memory for tpu_custom_call.1']
    %26 = vsyncpa [#allocation3], 0
    // Predicated region
    $region2: #{tpu_custom_call.1} parent=1 // pred_check
      _
    $region3: #{tpu_custom_call.1} parent=1 // pred_check_branch
      %28 = sbr.rel (0) target = $region5
    $region4: #{tpu_custom_call.1} parent=1 // pred_region
      _
    $region5: #{tpu_custom_call.1} parent=1 // pred_fallthru
      _
    // Predicated region
    $region6: #{tpu_custom_call.1} parent=1 // pred_check
      _
    $region7: #{tpu_custom_call.1} parent=1 // pred_check_branch
      %30 = sbr.rel (0) target = $region9
    $region8: #{tpu_custom_call.1} parent=1 // pred_region
      _
    $region9: #{tpu_custom_call.1} parent=1 // pred_fallthru
      _
    // Predicated region
    $region10: #{tpu_custom_call.1} parent=1 // pred_check
      _
    $region11: #{tpu_custom_call.1} parent=1 // pred_check_branch
      %32 = sbr.rel (0) target = $region13
    $region12: #{tpu_custom_call.1} parent=1 // pred_region
      _
    $region13: #{tpu_custom_call.1} parent=1 // pred_fallthru
      _
    // Predicated region
    $region14: #{tpu_custom_call.1} parent=1 // pred_check
      _
    $region15: #{tpu_custom_call.1} parent=1 // pred_check_branch
      %34 = sbr.rel (0) target = $region17
    $region16: #{tpu_custom_call.1} parent=1 // pred_region
      _
    $region17: #{tpu_custom_call.1} parent=1 // pred_fallthru
      _
    // Predicated region
    $region18: #{tpu_custom_call.1} parent=1 // pred_check
      _
    $region19: #{tpu_custom_call.1} parent=1 // pred_check_branch
      %36 = sbr.rel (0) target = $region21
    $region20: #{tpu_custom_call.1} parent=1 // pred_region
      _
    $region21: #{tpu_custom_call.1} parent=1 // pred_fallthru
      _
    // Predicated region
    $region22: #{tpu_custom_call.1} parent=1 // pred_check
      _
    $region23: #{tpu_custom_call.1} parent=1 // pred_check_branch
      %38 = sbr.rel (0) target = $region25
    $region24: #{tpu_custom_call.1} parent=1 // pred_region
      _
    $region25: #{tpu_custom_call.1} parent=1 // pred_fallthru
      _
    // Predicated region
    $region26: #{tpu_custom_call.1} parent=1 // pred_check
      _
    $region27: #{tpu_custom_call.1} parent=1 // pred_check_branch
      %40 = sbr.rel (0) target = $region29
    $region28: #{tpu_custom_call.1} parent=1 // pred_region
      _
    $region29: #{tpu_custom_call.1} parent=1 // pred_fallthru
      _
    // Predicated region
    $region30: #{tpu_custom_call.1} parent=1 // pred_check
      _
    $region31: #{tpu_custom_call.1} parent=1 // pred_check_branch
      %42 = sbr.rel (0) target = $region33
    $region32: #{tpu_custom_call.1} parent=1 // pred_region
      _
    $region33: #{tpu_custom_call.1} parent=1 // pred_fallthru
      _
    // Predicated region
    $region34: #{tpu_custom_call.1} parent=1 // pred_check
      _
    $region35: #{tpu_custom_call.1} parent=1 // pred_check_branch
      %44 = sbr.rel (0) target = $region37
    $region36: #{tpu_custom_call.1} parent=1 // pred_region
      _
    $region37: #{tpu_custom_call.1} parent=1 // pred_fallthru
      _
    // Predicated region
    $region38: #{tpu_custom_call.1} parent=1 // pred_check
      _
    $region39: #{tpu_custom_call.1} parent=1 // pred_check_branch
      %46 = sbr.rel (0) target = $region41
    $region40: #{tpu_custom_call.1} parent=1 // pred_region
      _
    $region41: #{tpu_custom_call.1} parent=1 // pred_fallthru
      _
    // Predicated region
    $region42: #{tpu_custom_call.1} parent=1 // pred_check
      _
    $region43: #{tpu_custom_call.1} parent=1 // pred_check_branch
      %48 = sbr.rel (0) target = $region45
    $region44: #{tpu_custom_call.1} parent=1 // pred_region
      _
    $region45: #{tpu_custom_call.1} parent=1 // pred_fallthru
      _
    // Predicated region
    $region46: #{tpu_custom_call.1} parent=1 // pred_check
      _
    $region47: #{tpu_custom_call.1} parent=1 // pred_check_branch
      %50 = sbr.rel (0) target = $region49
    $region48: #{tpu_custom_call.1} parent=1 // pred_region
      _
    $region49: #{tpu_custom_call.1} parent=1 // pred_fallthru
      _
    // Predicated region
    $region50: #{tpu_custom_call.1} parent=1 // pred_check
      _
    $region51: #{tpu_custom_call.1} parent=1 // pred_check_branch
      %52 = sbr.rel (0) target = $region53
    $region52: #{tpu_custom_call.1} parent=1 // pred_region
      _
    $region53: #{tpu_custom_call.1} parent=1 // pred_fallthru
      _
    // Predicated region
    $region54: #{tpu_custom_call.1} parent=1 // pred_check
      _
    $region55: #{tpu_custom_call.1} parent=1 // pred_check_branch
      %54 = sbr.rel (0) target = $region57
    $region56: #{tpu_custom_call.1} parent=1 // pred_region
      _
    $region57: #{tpu_custom_call.1} parent=1 // pred_fallthru
      _
    // Predicated region
    $region58: #{tpu_custom_call.1} parent=1 // pred_check
      _
    $region59: #{tpu_custom_call.1} parent=1 // pred_check_branch
      %56 = sbr.rel (0) target = $region61
    $region60: #{tpu_custom_call.1} parent=1 // pred_region
      _
    $region61: #{tpu_custom_call.1} parent=1 // pred_fallthru
      _
    // Predicated region
    $region62: #{tpu_custom_call.1} parent=1 // pred_check
      _
    $region63: #{tpu_custom_call.1} parent=1 // pred_check_branch
      %58 = sbr.rel (0) target = $region65
    $region64: #{tpu_custom_call.1} parent=1 // pred_region
      _
    $region65: #{tpu_custom_call.1} parent=1 // pred_fallthru
      _
    // Predicated region
    $region66: #{tpu_custom_call.1} parent=1 // pred_check
      _
    $region67: #{tpu_custom_call.1} parent=1 // pred_check_branch
      %60 = sbr.rel (0) target = $region69
    $region68: #{tpu_custom_call.1} parent=1 // pred_region
      _
    $region69: #{tpu_custom_call.1} parent=1 // pred_fallthru
      _
    // Predicated region
    $region70: #{tpu_custom_call.1} parent=1 // pred_check
      _
    $region71: #{tpu_custom_call.1} parent=1 // pred_check_branch
      %62 = sbr.rel (0) target = $region73
    $region72: #{tpu_custom_call.1} parent=1 // pred_region
      _
    $region73: #{tpu_custom_call.1} parent=1 // pred_fallthru
      _
    // Predicated region
    $region74: #{tpu_custom_call.1} parent=1 // pred_check
      _
    $region75: #{tpu_custom_call.1} parent=1 // pred_check_branch
      %64 = sbr.rel (0) target = $region77
    $region76: #{tpu_custom_call.1} parent=1 // pred_region
      _
    $region77: #{tpu_custom_call.1} parent=1 // pred_fallthru
      _
    // Predicated region
    $region78: #{tpu_custom_call.1} parent=1 // pred_check
      _
    $region79: #{tpu_custom_call.1} parent=1 // pred_check_branch
      %66 = sbr.rel (0) target = $region81
    $region80: #{tpu_custom_call.1} parent=1 // pred_region
      _
    $region81: #{tpu_custom_call.1} parent=1 // pred_fallthru
      _
    // Predicated region
    $region82: #{tpu_custom_call.1} parent=1 // pred_check
      _
    $region83: #{tpu_custom_call.1} parent=1 // pred_check_branch
      %68 = sbr.rel (0) target = $region85
    $region84: #{tpu_custom_call.1} parent=1 // pred_region
      _
    $region85: #{tpu_custom_call.1} parent=1 // pred_fallthru
      _
    %v69 = vld [vmem:[%s1] sm:$0xff]
    %v70 = vld [vmem:[%s1 + $0x8] sm:$0xff]
    %v71 = vld [vmem:[%s0] sm:$0xff]
    %v72 = vld [vmem:[%s0 + $0x8] sm:$0xff]
    %v73 = vld [vmem:[%s2] sm:$0x1]
    %v74 = vld [vmem:[%s3] sm:$0x1]
    %vm75 = vcmask 261120
    %v76 = vsel %vm75, %v71, 0.0
    %77 = vadd.xlane.f32.xlu0 %v76
    %v78 = vpop.xlane.xlu0 %77
    %v79 = vsel %vm75, %v72, 0.0
    %80 = vadd.xlane.f32.xlu0 %v79
    %v81 = vpop.xlane.xlu0 %80
    %v82 = vrcp.pop 32.0
    %v83 = vmul.f32 %v78, %v82
    %v84 = vmul.f32 %v81, %v82
    %v85 = vsub.f32 %v71, %v83
    %v86 = vsub.f32 %v72, %v84
    %v87 = vmul.f32 %v85, %v85
    %v88 = vmul.f32 %v86, %v86
    %v89 = vsel %vm75, %v87, 0.0
    %90 = vadd.xlane.f32.xlu0 %v89
    %v91 = vpop.xlane.xlu0 %90
    %v92 = vsel %vm75, %v88, 0.0
    %93 = vadd.xlane.f32.xlu0 %v92
    %v94 = vpop.xlane.xlu0 %93
    %v95 = vmul.f32 %v91, %v82
    %v96 = vmul.f32 %v94, %v82
    %v97 = vadd.f32 %v95, 1e-12
    %v98 = vadd.f32 %v96, 1e-12
    %v99 = vrsqrt.pop %v97
    %v100 = vrsqrt.pop %v98
    %v101 = vmul.f32 %v85, %v99
    %v102 = vmul.f32 %v86, %v100
    %v104 = vlaneseq
    %v105 = vshrl.u32 %v104, 7
    %v106 = vsub.s32 0, %v105
    %v107 = vrot.slane %v73, %v106
    %v109 = vmul.f32 %v101, %v107
    %v110 = vmul.f32 %v102, %v107
    %v112 = vlaneseq
    %v113 = vshrl.u32 %v112, 7
    %v114 = vsub.s32 0, %v113
    %v115 = vrot.slane %v74, %v114
    %v117 = vadd.f32 %v109, %v115
    %v118 = vadd.f32 %v110, %v115
    %v119 = vld [vmem:[%s4] sm:$0xff]
    %v120 = vld [vmem:[%s4 + $0x8] sm:$0xff]
    %v121 = vld [vmem:[%s4 + $0x10] sm:$0xff]
    %v122 = vld [vmem:[%s4 + $0x18] sm:$0xff]
    %v123 = vld [vmem:[%s4 + $0x20] sm:$0xff]
    %v124 = vld [vmem:[%s4 + $0x28] sm:$0xff]
    %v125 = vld [vmem:[%s4 + $0x30] sm:$0xff]
    %v126 = vld [vmem:[%s4 + $0x38] sm:$0xff]
    %v127 = vld [vmem:[%s4 + $0x40] sm:$0xff]
    %v128 = vld [vmem:[%s4 + $0x48] sm:$0xff]
    %v129 = vld [vmem:[%s4 + $0x50] sm:$0xff]
    %v130 = vld [vmem:[%s4 + $0x58] sm:$0xff]
    %v131 = vld [vmem:[%s5] sm:$0xff]
    %v132 = vld [vmem:[%s5 + $0x8] sm:$0xff]
    %v133 = vld [vmem:[%s5 + $0x10] sm:$0xff]
    %v134 = vld [vmem:[%s5 + $0x18] sm:$0xff]
    %v135 = vld [vmem:[%s5 + $0x20] sm:$0xff]
    %v136 = vld [vmem:[%s5 + $0x28] sm:$0xff]
    %v137 = vld [vmem:[%s5 + $0x30] sm:$0xff]
    %v138 = vld [vmem:[%s5 + $0x38] sm:$0xff]
    %v139 = vld [vmem:[%s5 + $0x40] sm:$0xff]
    %v140 = vld [vmem:[%s5 + $0x48] sm:$0xff]
    %v141 = vld [vmem:[%s5 + $0x50] sm:$0xff]
    %v142 = vld [vmem:[%s5 + $0x58] sm:$0xff]
    %144 = vset.pattern.permute.xlu0 0
    %145 = vperm.xlu0 %144, %v131
    %v146 = vpop.permute.xlu0 %145
    %149 = vset.pattern.permute.xlu0 0
    %150 = vperm.xlu0 %149, %v132
    %v151 = vpop.permute.xlu0 %150
    %154 = vset.pattern.permute.xlu0 0
    %155 = vperm.xlu0 %154, %v133
    %v156 = vpop.permute.xlu0 %155
    %159 = vset.pattern.permute.xlu0 0
    %160 = vperm.xlu0 %159, %v134
    %v161 = vpop.permute.xlu0 %160
    %164 = vset.pattern.permute.xlu0 0
    %165 = vperm.xlu0 %164, %v135
    %v166 = vpop.permute.xlu0 %165
    %169 = vset.pattern.permute.xlu0 0
    %170 = vperm.xlu0 %169, %v136
    %v171 = vpop.permute.xlu0 %170
    %174 = vset.pattern.permute.xlu0 0
    %175 = vperm.xlu0 %174, %v137
    %v176 = vpop.permute.xlu0 %175
    %179 = vset.pattern.permute.xlu0 0
    %180 = vperm.xlu0 %179, %v138
    %v181 = vpop.permute.xlu0 %180
    %184 = vset.pattern.permute.xlu0 0
    %185 = vperm.xlu0 %184, %v139
    %v186 = vpop.permute.xlu0 %185
    %189 = vset.pattern.permute.xlu0 0
    %190 = vperm.xlu0 %189, %v140
    %v191 = vpop.permute.xlu0 %190
    %194 = vset.pattern.permute.xlu0 0
    %195 = vperm.xlu0 %194, %v141
    %v196 = vpop.permute.xlu0 %195
    %199 = vset.pattern.permute.xlu0 0
    %200 = vperm.xlu0 %199, %v142
    %v201 = vpop.permute.xlu0 %200
    %v204 = vsel %vm75, %v119, 0
    %v207 = vsel %vm75, %v120, 0
    %v210 = vsel %vm75, %v121, 0
    %v213 = vsel %vm75, %v122, 0
    %v216 = vsel %vm75, %v123, 0
    %v219 = vsel %vm75, %v124, 0
    %v222 = vsel %vm75, %v125, 0
    %v225 = vsel %vm75, %v126, 0
    %v228 = vsel %vm75, %v127, 0
    %v231 = vsel %vm75, %v128, 0
    %v234 = vsel %vm75, %v129, 0
    %v237 = vsel %vm75, %v130, 0
    %v240 = vsel %vm75, %v117, 0
    %v243 = vsel %vm75, %v118, 0
    %245 = vmatprep.subr.mxu0 0.0
    %246 = vmatpush1.xpose.msra.mxu0 %v240
    %247 = vmatprep.subr.mxu0 0.0
    %248 = vmatpush1.xpose.msra.mxu0 %v243
    %249 = vmatprep.subr.mxu0 0.0
    %250 = vmatpush1.xpose.msra.mxu0 0.0
    %251 = vmatprep.subr.mxu0 0.0
    %252 = vmatpush1.xpose.msra.mxu0 0.0
    %253 = vmatprep.subr.mxu0 0.0
    %254 = vmatpush1.xpose.msra.mxu0 0.0
    %255 = vmatprep.subr.mxu0 0.0
    %256 = vmatpush1.xpose.msra.mxu0 0.0
    %257 = vmatprep.subr.mxu0 0.0
    %258 = vmatpush1.xpose.msra.mxu0 0.0
    %259 = vmatprep.subr.mxu0 0.0
    %260 = vmatpush1.xpose.msra.mxu0 0.0
    %261 = vmatprep.subr.mxu0 0.0
    %262 = vmatpush1.xpose.msra.mxu0 0.0
    %263 = vmatprep.subr.mxu0 0.0
    %264 = vmatpush1.xpose.msra.mxu0 0.0
    %265 = vmatprep.subr.mxu0 0.0
    %266 = vmatpush1.xpose.msra.mxu0 0.0
    %267 = vmatprep.subr.mxu0 0.0
    %268 = vmatpush1.xpose.msra.mxu0 0.0
    %269 = vmatprep.subr.mxu0 0.0
    %270 = vmatpush1.xpose.msra.mxu0 0.0
    %271 = vmatprep.subr.mxu0 0.0
    %272 = vmatpush1.xpose.msra.mxu0 0.0
    %273 = vmatprep.subr.mxu0 0.0
    %274 = vmatpush1.xpose.msra.mxu0 0.0
    %275 = vmatprep.subr.mxu0 0.0
    %276 = vmatpush1.xpose.msra.mxu0 0.0
    %277 = vmatprep.subr.mxu0 0.0
    %278 = vmatpush1.xpose.msra.mxu0 0.0
    %279 = vmatprep.subr.mxu0 0.0
    %280 = vmatpush1.xpose.msra.mxu0 0.0
    %281 = vmatprep.subr.mxu0 0.0
    %282 = vmatpush1.xpose.msra.mxu0 0.0
    %283 = vmatprep.subr.mxu0 0.0
    %284 = vmatpush1.xpose.msra.mxu0 0.0
    %285 = vmatprep.subr.mxu0 0.0
    %286 = vmatpush1.xpose.msra.mxu0 0.0
    %287 = vmatprep.subr.mxu0 0.0
    %288 = vmatpush1.xpose.msra.mxu0 0.0
    %289 = vmatprep.subr.mxu0 0.0
    %290 = vmatpush1.xpose.msra.mxu0 0.0
    %291 = vmatprep.subr.mxu0 0.0
    %292 = vmatpush1.xpose.msra.mxu0 0.0
    %293 = vmatprep.subr.mxu0 0.0
    %294 = vmatpush1.xpose.msra.mxu0 0.0
    %295 = vmatprep.subr.mxu0 0.0
    %296 = vmatpush1.xpose.msra.mxu0 0.0
    %297 = vmatprep.subr.mxu0 0.0
    %298 = vmatpush1.xpose.msra.mxu0 0.0
    %299 = vmatprep.subr.mxu0 0.0
    %300 = vmatpush1.xpose.msra.mxu0 0.0
    %301 = vmatprep.subr.mxu0 0.0
    %302 = vmatpush1.xpose.msra.mxu0 0.0
    %303 = vmatprep.subr.mxu0 0.0
    %304 = vmatpush1.xpose.msra.mxu0 0.0
    %305 = vmatprep.subr.mxu0 0.0
    %306 = vmatpush1.xpose.msra.mxu0 0.0
    %307 = vmatprep.subr.mxu0 0.0
    %308 = vmatpush1.xpose.msra.mxu0 0.0
    %309 = vmatprep.mubr.f32.mxu0 0.0
    %310 = vmatmul.mubr.f32.gmra.mrb[0].mxu0 %v204
    %v311 = vpop.f32.mrb[0].mxu0
    %v312 = vadd.f32 %v146, %v311
    %v313 = vpop.f32.mrb[0].mxu0
    %314 = vmatprep.mubr.f32.mxu0 0.0
    %315 = vmatmul.mubr.f32.gmra.mrb[0].mxu0 %v207
    %v316 = vpop.f32.mrb[0].mxu0
    %v317 = vadd.f32 %v151, %v316
    %v318 = vpop.f32.mrb[0].mxu0
    %319 = vmatprep.mubr.f32.mxu0 0.0
    %320 = vmatmul.mubr.f32.gmra.mrb[0].mxu0 %v210
    %v321 = vpop.f32.mrb[0].mxu0
    %v322 = vadd.f32 %v156, %v321
    %v323 = vpop.f32.mrb[0].mxu0
    %324 = vmatprep.mubr.f32.mxu0 0.0
    %325 = vmatmul.mubr.f32.gmra.mrb[0].mxu0 %v213
    %v326 = vpop.f32.mrb[0].mxu0
    %v327 = vadd.f32 %v161, %v326
    %v328 = vpop.f32.mrb[0].mxu0
    %329 = vmatprep.mubr.f32.mxu0 0.0
    %330 = vmatmul.mubr.f32.gmra.mrb[0].mxu0 %v216
    %v331 = vpop.f32.mrb[0].mxu0
    %v332 = vadd.f32 %v166, %v331
    %v333 = vpop.f32.mrb[0].mxu0
    %334 = vmatprep.mubr.f32.mxu0 0.0
    %335 = vmatmul.mubr.f32.gmra.mrb[0].mxu0 %v219
    %v336 = vpop.f32.mrb[0].mxu0
    %v337 = vadd.f32 %v171, %v336
    %v338 = vpop.f32.mrb[0].mxu0
    %339 = vmatprep.mubr.f32.mxu0 0.0
    %340 = vmatmul.mubr.f32.gmra.mrb[0].mxu0 %v222
    %v341 = vpop.f32.mrb[0].mxu0
    %v342 = vadd.f32 %v176, %v341
    %v343 = vpop.f32.mrb[0].mxu0
    %344 = vmatprep.mubr.f32.mxu0 0.0
    %345 = vmatmul.mubr.f32.gmra.mrb[0].mxu0 %v225
    %v346 = vpop.f32.mrb[0].mxu0
    %v347 = vadd.f32 %v181, %v346
    %v348 = vpop.f32.mrb[0].mxu0
    %349 = vmatprep.mubr.f32.mxu0 0.0
    %350 = vmatmul.mubr.f32.gmra.mrb[0].mxu0 %v228
    %v351 = vpop.f32.mrb[0].mxu0
    %v352 = vadd.f32 %v186, %v351
    %v353 = vpop.f32.mrb[0].mxu0
    %354 = vmatprep.mubr.f32.mxu0 0.0
    %355 = vmatmul.mubr.f32.gmra.mrb[0].mxu0 %v231
    %v356 = vpop.f32.mrb[0].mxu0
    %v357 = vadd.f32 %v191, %v356
    %v358 = vpop.f32.mrb[0].mxu0
    %359 = vmatprep.mubr.f32.mxu0 0.0
    %360 = vmatmul.mubr.f32.gmra.mrb[0].mxu0 %v234
    %v361 = vpop.f32.mrb[0].mxu0
    %v362 = vadd.f32 %v196, %v361
    %v363 = vpop.f32.mrb[0].mxu0
    %364 = vmatprep.mubr.f32.mxu0 0.0
    %365 = vmatmul.mubr.f32.gmra.mrb[0].mxu0 %v237
    %v366 = vpop.f32.mrb[0].mxu0
    %v367 = vadd.f32 %v201, %v366
    %v368 = vpop.f32.mrb[0].mxu0
    %369 = vdwg.mxu0
    %370 = vxpose.xlu0.b32.start [1/16] %v312, 128
    %371 = vxpose.xlu0.b32.cont [2/16] 0.0, 128
    %372 = vxpose.xlu0.b32.cont [3/16] 0.0, 128
    %373 = vxpose.xlu0.b32.cont [4/16] 0.0, 128
    %374 = vxpose.xlu0.b32.cont [5/16] 0.0, 128
    %375 = vxpose.xlu0.b32.cont [6/16] 0.0, 128
    %376 = vxpose.xlu0.b32.cont [7/16] 0.0, 128
    %377 = vxpose.xlu0.b32.cont [8/16] 0.0, 128
    %378 = vxpose.xlu0.b32.cont [9/16] 0.0, 128
    %379 = vxpose.xlu0.b32.cont [10/16] 0.0, 128
    %380 = vxpose.xlu0.b32.cont [11/16] 0.0, 128
    %381 = vxpose.xlu0.b32.cont [12/16] 0.0, 128
    %382 = vxpose.xlu0.b32.cont [13/16] 0.0, 128
    %383 = vxpose.xlu0.b32.cont [14/16] 0.0, 128
    %384 = vxpose.xlu0.b32.cont [15/16] 0.0, 128
    %385 = vxpose.xlu0.b32.end [16/16] 0.0, 128
    %v386 = vpop.trf.xlu0
    %v387 = vpop.trf.xlu0
    %v388 = vpop.trf.xlu0
    %v389 = vpop.trf.xlu0
    %v390 = vpop.trf.xlu0
    %v391 = vpop.trf.xlu0
    %v392 = vpop.trf.xlu0
    %v393 = vpop.trf.xlu0
    %v394 = vpop.trf.xlu0
    %v395 = vpop.trf.xlu0
    %v396 = vpop.trf.xlu0
    %v397 = vpop.trf.xlu0
    %v398 = vpop.trf.xlu0
    %v399 = vpop.trf.xlu0
    %v400 = vpop.trf.xlu0
    %v401 = vpop.trf.xlu0
    %vm402 = vcmask 64512
    %v404 = vsel %vm402, %v386, 0
    %v407 = vsel %vm402, %v387, 0
    %409 = vmatprep.subr.mxu0 0.0
    %410 = vmatpush1.msra.mxu0 %v332
    %411 = vmatprep.subr.mxu0 0.0
    %412 = vmatpush1.msra.mxu0 0.0
    %413 = vmatprep.subr.mxu0 0.0
    %414 = vmatpush1.msra.mxu0 0.0
    %415 = vmatprep.subr.mxu0 0.0
    %416 = vmatpush1.msra.mxu0 0.0
    %417 = vmatprep.subr.mxu0 0.0
    %418 = vmatpush1.msra.mxu0 0.0
    %419 = vmatprep.subr.mxu0 0.0
    %420 = vmatpush1.msra.mxu0 0.0
    %421 = vmatprep.subr.mxu0 0.0
    %422 = vmatpush1.msra.mxu0 0.0
    %423 = vmatprep.subr.mxu0 0.0
    %424 = vmatpush1.msra.mxu0 0.0
    %425 = vmatprep.subr.mxu0 0.0
    %426 = vmatpush1.msra.mxu0 0.0
    %427 = vmatprep.subr.mxu0 0.0
    %428 = vmatpush1.msra.mxu0 0.0
    %429 = vmatprep.subr.mxu0 0.0
    %430 = vmatpush1.msra.mxu0 0.0
    %431 = vmatprep.subr.mxu0 0.0
    %432 = vmatpush1.msra.mxu0 0.0
    %433 = vmatprep.subr.mxu0 0.0
    %434 = vmatpush1.msra.mxu0 0.0
    %435 = vmatprep.subr.mxu0 0.0
    %436 = vmatpush1.msra.mxu0 0.0
    %437 = vmatprep.subr.mxu0 0.0
    %438 = vmatpush1.msra.mxu0 0.0
    %439 = vmatprep.subr.mxu0 0.0
    %440 = vmatpush1.msra.mxu0 0.0
    %441 = vmatprep.subr.mxu0 0.0
    %442 = vmatpush1.msra.mxu0 0.0
    %443 = vmatprep.subr.mxu0 0.0
    %444 = vmatpush1.msra.mxu0 0.0
    %445 = vmatprep.subr.mxu0 0.0
    %446 = vmatpush1.msra.mxu0 0.0
    %447 = vmatprep.subr.mxu0 0.0
    %448 = vmatpush1.msra.mxu0 0.0
    %449 = vmatprep.subr.mxu0 0.0
    %450 = vmatpush1.msra.mxu0 0.0
    %451 = vmatprep.subr.mxu0 0.0
    %452 = vmatpush1.msra.mxu0 0.0
    %453 = vmatprep.subr.mxu0 0.0
    %454 = vmatpush1.msra.mxu0 0.0
    %455 = vmatprep.subr.mxu0 0.0
    %456 = vmatpush1.msra.mxu0 0.0
    %457 = vmatprep.subr.mxu0 0.0
    %458 = vmatpush1.msra.mxu0 0.0
    %459 = vmatprep.subr.mxu0 0.0
    %460 = vmatpush1.msra.mxu0 0.0
    %461 = vmatprep.subr.mxu0 0.0
    %462 = vmatpush1.msra.mxu0 0.0
    %463 = vmatprep.subr.mxu0 0.0
    %464 = vmatpush1.msra.mxu0 0.0
    %465 = vmatprep.subr.mxu0 0.0
    %466 = vmatpush1.msra.mxu0 0.0
    %467 = vmatprep.subr.mxu0 0.0
    %468 = vmatpush1.msra.mxu0 0.0
    %469 = vmatprep.subr.mxu0 0.0
    %470 = vmatpush1.msra.mxu0 0.0
    %471 = vmatprep.subr.mxu0 0.0
    %472 = vmatpush1.msra.mxu0 0.0
    %473 = vmatprep.mubr.f32.mxu0 0.0
    %474 = vmatmul.mubr.f32.gmra.mrb[0].mxu0 %v404
    %v475 = vpop.f32.mrb[0].mxu0
    %v476 = vadd.f32 0.0, %v475
    %v477 = vpop.f32.mrb[0].mxu0
    %478 = vmatprep.mubr.f32.mxu0 0.0
    %479 = vmatmul.mubr.f32.gmra.mrb[0].mxu0 %v407
    %v480 = vpop.f32.mrb[0].mxu0
    %v481 = vadd.f32 0.0, %v480
    %v482 = vpop.f32.mrb[0].mxu0
    %483 = vdwg.mxu0
    %v484 = vmul.f32 %v476, 0.35355338
    %v485 = vmul.f32 %v481, 0.35355338
    %v486 = vadd.f32 %v484, %v69
    %v487 = vadd.f32 %v485, %v70
    %vm488 = vcmask 130048
    %v489 = vsel %vm488, %v486, -inf
    %490 = vmax.xlane.f32.xlu0 %v489
    %v491 = vpop.xlane.xlu0 %490
    %v492 = vsel %vm488, %v487, -inf
    %493 = vmax.xlane.f32.xlu0 %v492
    %v494 = vpop.xlane.xlu0 %493
    %v495 = vsub.f32 %v486, %v491
    %v496 = vsub.f32 %v487, %v494
    %v497 = vmul.f32 %v495, 1.442695
    %v498 = vpow.pop %v497
    %v499 = vmul.f32 %v496, 1.442695
    %v500 = vpow.pop %v499
    %v501 = vsel %vm488, %v498, 0.0
    %502 = vadd.xlane.f32.xlu0 %v501
    %v503 = vpop.xlane.xlu0 %502
    %v504 = vsel %vm488, %v500, 0.0
    %505 = vadd.xlane.f32.xlu0 %v504
    %v506 = vpop.xlane.xlu0 %505
    %v507 = vrcp.pop %v503
    %v508 = vrcp.pop %v506
    %v509 = vmul.f32 %v498, %v507
    %v510 = vmul.f32 %v500, %v508
    %v512 = vsel %vm488, %v352, 0
    %v515 = vsel %vm488, %v509, 0
    %v518 = vsel %vm488, %v510, 0
    %520 = vmatprep.subr.mxu0 0.0
    %521 = vmatpush1.xpose.msra.mxu0 %v515
    %522 = vmatprep.subr.mxu0 0.0
    %523 = vmatpush1.xpose.msra.mxu0 %v518
    %524 = vmatprep.subr.mxu0 0.0
    %525 = vmatpush1.xpose.msra.mxu0 0.0
    %526 = vmatprep.subr.mxu0 0.0
    %527 = vmatpush1.xpose.msra.mxu0 0.0
    %528 = vmatprep.subr.mxu0 0.0
    %529 = vmatpush1.xpose.msra.mxu0 0.0
    %530 = vmatprep.subr.mxu0 0.0
    %531 = vmatpush1.xpose.msra.mxu0 0.0
    %532 = vmatprep.subr.mxu0 0.0
    %533 = vmatpush1.xpose.msra.mxu0 0.0
    %534 = vmatprep.subr.mxu0 0.0
    %535 = vmatpush1.xpose.msra.mxu0 0.0
    %536 = vmatprep.subr.mxu0 0.0
    %537 = vmatpush1.xpose.msra.mxu0 0.0
    %538 = vmatprep.subr.mxu0 0.0
    %539 = vmatpush1.xpose.msra.mxu0 0.0
    %540 = vmatprep.subr.mxu0 0.0
    %541 = vmatpush1.xpose.msra.mxu0 0.0
    %542 = vmatprep.subr.mxu0 0.0
    %543 = vmatpush1.xpose.msra.mxu0 0.0
    %544 = vmatprep.subr.mxu0 0.0
    %545 = vmatpush1.xpose.msra.mxu0 0.0
    %546 = vmatprep.subr.mxu0 0.0
    %547 = vmatpush1.xpose.msra.mxu0 0.0
    %548 = vmatprep.subr.mxu0 0.0
    %549 = vmatpush1.xpose.msra.mxu0 0.0
    %550 = vmatprep.subr.mxu0 0.0
    %551 = vmatpush1.xpose.msra.mxu0 0.0
    %552 = vmatprep.subr.mxu0 0.0
    %553 = vmatpush1.xpose.msra.mxu0 0.0
    %554 = vmatprep.subr.mxu0 0.0
    %555 = vmatpush1.xpose.msra.mxu0 0.0
    %556 = vmatprep.subr.mxu0 0.0
    %557 = vmatpush1.xpose.msra.mxu0 0.0
    %558 = vmatprep.subr.mxu0 0.0
    %559 = vmatpush1.xpose.msra.mxu0 0.0
    %560 = vmatprep.subr.mxu0 0.0
    %561 = vmatpush1.xpose.msra.mxu0 0.0
    %562 = vmatprep.subr.mxu0 0.0
    %563 = vmatpush1.xpose.msra.mxu0 0.0
    %564 = vmatprep.subr.mxu0 0.0
    %565 = vmatpush1.xpose.msra.mxu0 0.0
    %566 = vmatprep.subr.mxu0 0.0
    %567 = vmatpush1.xpose.msra.mxu0 0.0
    %568 = vmatprep.subr.mxu0 0.0
    %569 = vmatpush1.xpose.msra.mxu0 0.0
    %570 = vmatprep.subr.mxu0 0.0
    %571 = vmatpush1.xpose.msra.mxu0 0.0
    %572 = vmatprep.subr.mxu0 0.0
    %573 = vmatpush1.xpose.msra.mxu0 0.0
    %574 = vmatprep.subr.mxu0 0.0
    %575 = vmatpush1.xpose.msra.mxu0 0.0
    %576 = vmatprep.subr.mxu0 0.0
    %577 = vmatpush1.xpose.msra.mxu0 0.0
    %578 = vmatprep.subr.mxu0 0.0
    %579 = vmatpush1.xpose.msra.mxu0 0.0
    %580 = vmatprep.subr.mxu0 0.0
    %581 = vmatpush1.xpose.msra.mxu0 0.0
    %582 = vmatprep.subr.mxu0 0.0
    %583 = vmatpush1.xpose.msra.mxu0 0.0
    %584 = vmatprep.mubr.f32.mxu0 0.0
    %585 = vmatmul.mubr.f32.gmra.mrb[0].mxu0 %v512
    %v586 = vpop.f32.mrb[0].mxu0
    %v587 = vadd.f32 0.0, %v586
    %v588 = vpop.f32.mrb[0].mxu0
    %589 = vdwg.mxu0
    %590 = vxpose.xlu0.b32.start [1/16] %v317, 128
    %591 = vxpose.xlu0.b32.cont [2/16] 0.0, 128
    %592 = vxpose.xlu0.b32.cont [3/16] 0.0, 128
    %593 = vxpose.xlu0.b32.cont [4/16] 0.0, 128
    %594 = vxpose.xlu0.b32.cont [5/16] 0.0, 128
    %595 = vxpose.xlu0.b32.cont [6/16] 0.0, 128
    %596 = vxpose.xlu0.b32.cont [7/16] 0.0, 128
    %597 = vxpose.xlu0.b32.cont [8/16] 0.0, 128
    %598 = vxpose.xlu0.b32.cont [9/16] 0.0, 128
    %599 = vxpose.xlu0.b32.cont [10/16] 0.0, 128
    %600 = vxpose.xlu0.b32.cont [11/16] 0.0, 128
    %601 = vxpose.xlu0.b32.cont [12/16] 0.0, 128
    %602 = vxpose.xlu0.b32.cont [13/16] 0.0, 128
    %603 = vxpose.xlu0.b32.cont [14/16] 0.0, 128
    %604 = vxpose.xlu0.b32.cont [15/16] 0.0, 128
    %605 = vxpose.xlu0.b32.end [16/16] 0.0, 128
    %v606 = vpop.trf.xlu0
    %v607 = vpop.trf.xlu0
    %v608 = vpop.trf.xlu0
    %v609 = vpop.trf.xlu0
    %v610 = vpop.trf.xlu0
    %v611 = vpop.trf.xlu0
    %v612 = vpop.trf.xlu0
    %v613 = vpop.trf.xlu0
    %v614 = vpop.trf.xlu0
    %v615 = vpop.trf.xlu0
    %v616 = vpop.trf.xlu0
    %v617 = vpop.trf.xlu0
    %v618 = vpop.trf.xlu0
    %v619 = vpop.trf.xlu0
    %v620 = vpop.trf.xlu0
    %v621 = vpop.trf.xlu0
    %v623 = vsel %vm402, %v606, 0
    %v626 = vsel %vm402, %v607, 0
    %628 = vmatprep.subr.mxu0 0.0
    %629 = vmatpush1.msra.mxu0 %v337
    %630 = vmatprep.subr.mxu0 0.0
    %631 = vmatpush1.msra.mxu0 0.0
    %632 = vmatprep.subr.mxu0 0.0
    %633 = vmatpush1.msra.mxu0 0.0
    %634 = vmatprep.subr.mxu0 0.0
    %635 = vmatpush1.msra.mxu0 0.0
    %636 = vmatprep.subr.mxu0 0.0
    %637 = vmatpush1.msra.mxu0 0.0
    %638 = vmatprep.subr.mxu0 0.0
    %639 = vmatpush1.msra.mxu0 0.0
    %640 = vmatprep.subr.mxu0 0.0
    %641 = vmatpush1.msra.mxu0 0.0
    %642 = vmatprep.subr.mxu0 0.0
    %643 = vmatpush1.msra.mxu0 0.0
    %644 = vmatprep.subr.mxu0 0.0
    %645 = vmatpush1.msra.mxu0 0.0
    %646 = vmatprep.subr.mxu0 0.0
    %647 = vmatpush1.msra.mxu0 0.0
    %648 = vmatprep.subr.mxu0 0.0
    %649 = vmatpush1.msra.mxu0 0.0
    %650 = vmatprep.subr.mxu0 0.0
    %651 = vmatpush1.msra.mxu0 0.0
    %652 = vmatprep.subr.mxu0 0.0
    %653 = vmatpush1.msra.mxu0 0.0
    %654 = vmatprep.subr.mxu0 0.0
    %655 = vmatpush1.msra.mxu0 0.0
    %656 = vmatprep.subr.mxu0 0.0
    %657 = vmatpush1.msra.mxu0 0.0
    %658 = vmatprep.subr.mxu0 0.0
    %659 = vmatpush1.msra.mxu0 0.0
    %660 = vmatprep.subr.mxu0 0.0
    %661 = vmatpush1.msra.mxu0 0.0
    %662 = vmatprep.subr.mxu0 0.0
    %663 = vmatpush1.msra.mxu0 0.0
    %664 = vmatprep.subr.mxu0 0.0
    %665 = vmatpush1.msra.mxu0 0.0
    %666 = vmatprep.subr.mxu0 0.0
    %667 = vmatpush1.msra.mxu0 0.0
    %668 = vmatprep.subr.mxu0 0.0
    %669 = vmatpush1.msra.mxu0 0.0
    %670 = vmatprep.subr.mxu0 0.0
    %671 = vmatpush1.msra.mxu0 0.0
    %672 = vmatprep.subr.mxu0 0.0
    %673 = vmatpush1.msra.mxu0 0.0
    %674 = vmatprep.subr.mxu0 0.0
    %675 = vmatpush1.msra.mxu0 0.0
    %676 = vmatprep.subr.mxu0 0.0
    %677 = vmatpush1.msra.mxu0 0.0
    %678 = vmatprep.subr.mxu0 0.0
    %679 = vmatpush1.msra.mxu0 0.0
    %680 = vmatprep.subr.mxu0 0.0
    %681 = vmatpush1.msra.mxu0 0.0
    %682 = vmatprep.subr.mxu0 0.0
    %683 = vmatpush1.msra.mxu0 0.0
    %684 = vmatprep.subr.mxu0 0.0
    %685 = vmatpush1.msra.mxu0 0.0
    %686 = vmatprep.subr.mxu0 0.0
    %687 = vmatpush1.msra.mxu0 0.0
    %688 = vmatprep.subr.mxu0 0.0
    %689 = vmatpush1.msra.mxu0 0.0
    %690 = vmatprep.subr.mxu0 0.0
    %691 = vmatpush1.msra.mxu0 0.0
    %692 = vmatprep.mubr.f32.mxu0 0.0
    %693 = vmatmul.mubr.f32.gmra.mrb[0].mxu0 %v623
    %v694 = vpop.f32.mrb[0].mxu0
    %v695 = vadd.f32 0.0, %v694
    %v696 = vpop.f32.mrb[0].mxu0
    %697 = vmatprep.mubr.f32.mxu0 0.0
    %698 = vmatmul.mubr.f32.gmra.mrb[0].mxu0 %v626
    %v699 = vpop.f32.mrb[0].mxu0
    %v700 = vadd.f32 0.0, %v699
    %v701 = vpop.f32.mrb[0].mxu0
    %702 = vdwg.mxu0
    %v703 = vmul.f32 %v695, 0.35355338
    %v704 = vmul.f32 %v700, 0.35355338
    %v705 = vadd.f32 %v703, %v69
    %v706 = vadd.f32 %v704, %v70
    %v707 = vsel %vm488, %v705, -inf
    %708 = vmax.xlane.f32.xlu0 %v707
    %v709 = vpop.xlane.xlu0 %708
    %v710 = vsel %vm488, %v706, -inf
    %711 = vmax.xlane.f32.xlu0 %v710
    %v712 = vpop.xlane.xlu0 %711
    %v713 = vsub.f32 %v705, %v709
    %v714 = vsub.f32 %v706, %v712
    %v715 = vmul.f32 %v713, 1.442695
    %v716 = vpow.pop %v715
    %v717 = vmul.f32 %v714, 1.442695
    %v718 = vpow.pop %v717
    %v719 = vsel %vm488, %v716, 0.0
    %720 = vadd.xlane.f32.xlu0 %v719
    %v721 = vpop.xlane.xlu0 %720
    %v722 = vsel %vm488, %v718, 0.0
    %723 = vadd.xlane.f32.xlu0 %v722
    %v724 = vpop.xlane.xlu0 %723
    %v725 = vrcp.pop %v721
    %v726 = vrcp.pop %v724
    %v727 = vmul.f32 %v716, %v725
    %v728 = vmul.f32 %v718, %v726
    %v730 = vsel %vm488, %v357, 0
    %v733 = vsel %vm488, %v727, 0
    %v736 = vsel %vm488, %v728, 0
    %738 = vmatprep.subr.mxu0 0.0
    %739 = vmatpush1.xpose.msra.mxu0 %v733
    %740 = vmatprep.subr.mxu0 0.0
    %741 = vmatpush1.xpose.msra.mxu0 %v736
    %742 = vmatprep.subr.mxu0 0.0
    %743 = vmatpush1.xpose.msra.mxu0 0.0
    %744 = vmatprep.subr.mxu0 0.0
    %745 = vmatpush1.xpose.msra.mxu0 0.0
    %746 = vmatprep.subr.mxu0 0.0
    %747 = vmatpush1.xpose.msra.mxu0 0.0
    %748 = vmatprep.subr.mxu0 0.0
    %749 = vmatpush1.xpose.msra.mxu0 0.0
    %750 = vmatprep.subr.mxu0 0.0
    %751 = vmatpush1.xpose.msra.mxu0 0.0
    %752 = vmatprep.subr.mxu0 0.0
    %753 = vmatpush1.xpose.msra.mxu0 0.0
    %754 = vmatprep.subr.mxu0 0.0
    %755 = vmatpush1.xpose.msra.mxu0 0.0
    %756 = vmatprep.subr.mxu0 0.0
    %757 = vmatpush1.xpose.msra.mxu0 0.0
    %758 = vmatprep.subr.mxu0 0.0
    %759 = vmatpush1.xpose.msra.mxu0 0.0
    %760 = vmatprep.subr.mxu0 0.0
    %761 = vmatpush1.xpose.msra.mxu0 0.0
    %762 = vmatprep.subr.mxu0 0.0
    %763 = vmatpush1.xpose.msra.mxu0 0.0
    %764 = vmatprep.subr.mxu0 0.0
    %765 = vmatpush1.xpose.msra.mxu0 0.0
    %766 = vmatprep.subr.mxu0 0.0
    %767 = vmatpush1.xpose.msra.mxu0 0.0
    %768 = vmatprep.subr.mxu0 0.0
    %769 = vmatpush1.xpose.msra.mxu0 0.0
    %770 = vmatprep.subr.mxu0 0.0
    %771 = vmatpush1.xpose.msra.mxu0 0.0
    %772 = vmatprep.subr.mxu0 0.0
    %773 = vmatpush1.xpose.msra.mxu0 0.0
    %774 = vmatprep.subr.mxu0 0.0
    %775 = vmatpush1.xpose.msra.mxu0 0.0
    %776 = vmatprep.subr.mxu0 0.0
    %777 = vmatpush1.xpose.msra.mxu0 0.0
    %778 = vmatprep.subr.mxu0 0.0
    %779 = vmatpush1.xpose.msra.mxu0 0.0
    %780 = vmatprep.subr.mxu0 0.0
    %781 = vmatpush1.xpose.msra.mxu0 0.0
    %782 = vmatprep.subr.mxu0 0.0
    %783 = vmatpush1.xpose.msra.mxu0 0.0
    %784 = vmatprep.subr.mxu0 0.0
    %785 = vmatpush1.xpose.msra.mxu0 0.0
    %786 = vmatprep.subr.mxu0 0.0
    %787 = vmatpush1.xpose.msra.mxu0 0.0
    %788 = vmatprep.subr.mxu0 0.0
    %789 = vmatpush1.xpose.msra.mxu0 0.0
    %790 = vmatprep.subr.mxu0 0.0
    %791 = vmatpush1.xpose.msra.mxu0 0.0
    %792 = vmatprep.subr.mxu0 0.0
    %793 = vmatpush1.xpose.msra.mxu0 0.0
    %794 = vmatprep.subr.mxu0 0.0
    %795 = vmatpush1.xpose.msra.mxu0 0.0
    %796 = vmatprep.subr.mxu0 0.0
    %797 = vmatpush1.xpose.msra.mxu0 0.0
    %798 = vmatprep.subr.mxu0 0.0
    %799 = vmatpush1.xpose.msra.mxu0 0.0
    %800 = vmatprep.subr.mxu0 0.0
    %801 = vmatpush1.xpose.msra.mxu0 0.0
    %802 = vmatprep.mubr.f32.mxu0 0.0
    %803 = vmatmul.mubr.f32.gmra.mrb[0].mxu0 %v730
    %v804 = vpop.f32.mrb[0].mxu0
    %v805 = vadd.f32 0.0, %v804
    %v806 = vpop.f32.mrb[0].mxu0
    %807 = vdwg.mxu0
    %808 = vxpose.xlu0.b32.start [1/16] %v322, 128
    %809 = vxpose.xlu0.b32.cont [2/16] 0.0, 128
    %810 = vxpose.xlu0.b32.cont [3/16] 0.0, 128
    %811 = vxpose.xlu0.b32.cont [4/16] 0.0, 128
    %812 = vxpose.xlu0.b32.cont [5/16] 0.0, 128
    %813 = vxpose.xlu0.b32.cont [6/16] 0.0, 128
    %814 = vxpose.xlu0.b32.cont [7/16] 0.0, 128
    %815 = vxpose.xlu0.b32.cont [8/16] 0.0, 128
    %816 = vxpose.xlu0.b32.cont [9/16] 0.0, 128
    %817 = vxpose.xlu0.b32.cont [10/16] 0.0, 128
    %818 = vxpose.xlu0.b32.cont [11/16] 0.0, 128
    %819 = vxpose.xlu0.b32.cont [12/16] 0.0, 128
    %820 = vxpose.xlu0.b32.cont [13/16] 0.0, 128
    %821 = vxpose.xlu0.b32.cont [14/16] 0.0, 128
    %822 = vxpose.xlu0.b32.cont [15/16] 0.0, 128
    %823 = vxpose.xlu0.b32.end [16/16] 0.0, 128
    %v824 = vpop.trf.xlu0
    %v825 = vpop.trf.xlu0
    %v826 = vpop.trf.xlu0
    %v827 = vpop.trf.xlu0
    %v828 = vpop.trf.xlu0
    %v829 = vpop.trf.xlu0
    %v830 = vpop.trf.xlu0
    %v831 = vpop.trf.xlu0
    %v832 = vpop.trf.xlu0
    %v833 = vpop.trf.xlu0
    %v834 = vpop.trf.xlu0
    %v835 = vpop.trf.xlu0
    %v836 = vpop.trf.xlu0
    %v837 = vpop.trf.xlu0
    %v838 = vpop.trf.xlu0
    %v839 = vpop.trf.xlu0
    %v841 = vsel %vm402, %v824, 0
    %v844 = vsel %vm402, %v825, 0
    %846 = vmatprep.subr.mxu0 0.0
    %847 = vmatpush1.msra.mxu0 %v342
    %848 = vmatprep.subr.mxu0 0.0
    %849 = vmatpush1.msra.mxu0 0.0
    %850 = vmatprep.subr.mxu0 0.0
    %851 = vmatpush1.msra.mxu0 0.0
    %852 = vmatprep.subr.mxu0 0.0
    %853 = vmatpush1.msra.mxu0 0.0
    %854 = vmatprep.subr.mxu0 0.0
    %855 = vmatpush1.msra.mxu0 0.0
    %856 = vmatprep.subr.mxu0 0.0
    %857 = vmatpush1.msra.mxu0 0.0
    %858 = vmatprep.subr.mxu0 0.0
    %859 = vmatpush1.msra.mxu0 0.0
    %860 = vmatprep.subr.mxu0 0.0
    %861 = vmatpush1.msra.mxu0 0.0
    %862 = vmatprep.subr.mxu0 0.0
    %863 = vmatpush1.msra.mxu0 0.0
    %864 = vmatprep.subr.mxu0 0.0
    %865 = vmatpush1.msra.mxu0 0.0
    %866 = vmatprep.subr.mxu0 0.0
    %867 = vmatpush1.msra.mxu0 0.0
    %868 = vmatprep.subr.mxu0 0.0
    %869 = vmatpush1.msra.mxu0 0.0
    %870 = vmatprep.subr.mxu0 0.0
    %871 = vmatpush1.msra.mxu0 0.0
    %872 = vmatprep.subr.mxu0 0.0
    %873 = vmatpush1.msra.mxu0 0.0
    %874 = vmatprep.subr.mxu0 0.0
    %875 = vmatpush1.msra.mxu0 0.0
    %876 = vmatprep.subr.mxu0 0.0
    %877 = vmatpush1.msra.mxu0 0.0
    %878 = vmatprep.subr.mxu0 0.0
    %879 = vmatpush1.msra.mxu0 0.0
    %880 = vmatprep.subr.mxu0 0.0
    %881 = vmatpush1.msra.mxu0 0.0
    %882 = vmatprep.subr.mxu0 0.0
    %883 = vmatpush1.msra.mxu0 0.0
    %884 = vmatprep.subr.mxu0 0.0
    %885 = vmatpush1.msra.mxu0 0.0
    %886 = vmatprep.subr.mxu0 0.0
    %887 = vmatpush1.msra.mxu0 0.0
    %888 = vmatprep.subr.mxu0 0.0
    %889 = vmatpush1.msra.mxu0 0.0
    %890 = vmatprep.subr.mxu0 0.0
    %891 = vmatpush1.msra.mxu0 0.0
    %892 = vmatprep.subr.mxu0 0.0
    %893 = vmatpush1.msra.mxu0 0.0
    %894 = vmatprep.subr.mxu0 0.0
    %895 = vmatpush1.msra.mxu0 0.0
    %896 = vmatprep.subr.mxu0 0.0
    %897 = vmatpush1.msra.mxu0 0.0
    %898 = vmatprep.subr.mxu0 0.0
    %899 = vmatpush1.msra.mxu0 0.0
    %900 = vmatprep.subr.mxu0 0.0
    %901 = vmatpush1.msra.mxu0 0.0
    %902 = vmatprep.subr.mxu0 0.0
    %903 = vmatpush1.msra.mxu0 0.0
    %904 = vmatprep.subr.mxu0 0.0
    %905 = vmatpush1.msra.mxu0 0.0
    %906 = vmatprep.subr.mxu0 0.0
    %907 = vmatpush1.msra.mxu0 0.0
    %908 = vmatprep.subr.mxu0 0.0
    %909 = vmatpush1.msra.mxu0 0.0
    %910 = vmatprep.mubr.f32.mxu0 0.0
    %911 = vmatmul.mubr.f32.gmra.mrb[0].mxu0 %v841
    %v912 = vpop.f32.mrb[0].mxu0
    %v913 = vadd.f32 0.0, %v912
    %v914 = vpop.f32.mrb[0].mxu0
    %915 = vmatprep.mubr.f32.mxu0 0.0
    %916 = vmatmul.mubr.f32.gmra.mrb[0].mxu0 %v844
    %v917 = vpop.f32.mrb[0].mxu0
    %v918 = vadd.f32 0.0, %v917
    %v919 = vpop.f32.mrb[0].mxu0
    %920 = vdwg.mxu0
    %v921 = vmul.f32 %v913, 0.35355338
    %v922 = vmul.f32 %v918, 0.35355338
    %v923 = vadd.f32 %v921, %v69
    %v924 = vadd.f32 %v922, %v70
    %v925 = vsel %vm488, %v923, -inf
    %926 = vmax.xlane.f32.xlu0 %v925
    %v927 = vpop.xlane.xlu0 %926
    %v928 = vsel %vm488, %v924, -inf
    %929 = vmax.xlane.f32.xlu0 %v928
    %v930 = vpop.xlane.xlu0 %929
    %v931 = vsub.f32 %v923, %v927
    %v932 = vsub.f32 %v924, %v930
    %v933 = vmul.f32 %v931, 1.442695
    %v934 = vpow.pop %v933
    %v935 = vmul.f32 %v932, 1.442695
    %v936 = vpow.pop %v935
    %v937 = vsel %vm488, %v934, 0.0
    %938 = vadd.xlane.f32.xlu0 %v937
    %v939 = vpop.xlane.xlu0 %938
    %v940 = vsel %vm488, %v936, 0.0
    %941 = vadd.xlane.f32.xlu0 %v940
    %v942 = vpop.xlane.xlu0 %941
    %v943 = vrcp.pop %v939
    %v944 = vrcp.pop %v942
    %v945 = vmul.f32 %v934, %v943
    %v946 = vmul.f32 %v936, %v944
    %v948 = vsel %vm488, %v362, 0
    %v951 = vsel %vm488, %v945, 0
    %v954 = vsel %vm488, %v946, 0
    %956 = vmatprep.subr.mxu0 0.0
    %957 = vmatpush1.xpose.msra.mxu0 %v951
    %958 = vmatprep.subr.mxu0 0.0
    %959 = vmatpush1.xpose.msra.mxu0 %v954
    %960 = vmatprep.subr.mxu0 0.0
    %961 = vmatpush1.xpose.msra.mxu0 0.0
    %962 = vmatprep.subr.mxu0 0.0
    %963 = vmatpush1.xpose.msra.mxu0 0.0
    %964 = vmatprep.subr.mxu0 0.0
    %965 = vmatpush1.xpose.msra.mxu0 0.0
    %966 = vmatprep.subr.mxu0 0.0
    %967 = vmatpush1.xpose.msra.mxu0 0.0
    %968 = vmatprep.subr.mxu0 0.0
    %969 = vmatpush1.xpose.msra.mxu0 0.0
    %970 = vmatprep.subr.mxu0 0.0
    %971 = vmatpush1.xpose.msra.mxu0 0.0
    %972 = vmatprep.subr.mxu0 0.0
    %973 = vmatpush1.xpose.msra.mxu0 0.0
    %974 = vmatprep.subr.mxu0 0.0
    %975 = vmatpush1.xpose.msra.mxu0 0.0
    %976 = vmatprep.subr.mxu0 0.0
    %977 = vmatpush1.xpose.msra.mxu0 0.0
    %978 = vmatprep.subr.mxu0 0.0
    %979 = vmatpush1.xpose.msra.mxu0 0.0
    %980 = vmatprep.subr.mxu0 0.0
    %981 = vmatpush1.xpose.msra.mxu0 0.0
    %982 = vmatprep.subr.mxu0 0.0
    %983 = vmatpush1.xpose.msra.mxu0 0.0
    %984 = vmatprep.subr.mxu0 0.0
    %985 = vmatpush1.xpose.msra.mxu0 0.0
    %986 = vmatprep.subr.mxu0 0.0
    %987 = vmatpush1.xpose.msra.mxu0 0.0
    %988 = vmatprep.subr.mxu0 0.0
    %989 = vmatpush1.xpose.msra.mxu0 0.0
    %990 = vmatprep.subr.mxu0 0.0
    %991 = vmatpush1.xpose.msra.mxu0 0.0
    %992 = vmatprep.subr.mxu0 0.0
    %993 = vmatpush1.xpose.msra.mxu0 0.0
    %994 = vmatprep.subr.mxu0 0.0
    %995 = vmatpush1.xpose.msra.mxu0 0.0
    %996 = vmatprep.subr.mxu0 0.0
    %997 = vmatpush1.xpose.msra.mxu0 0.0
    %998 = vmatprep.subr.mxu0 0.0
    %999 = vmatpush1.xpose.msra.mxu0 0.0
    %1000 = vmatprep.subr.mxu0 0.0
    %1001 = vmatpush1.xpose.msra.mxu0 0.0
    %1002 = vmatprep.subr.mxu0 0.0
    %1003 = vmatpush1.xpose.msra.mxu0 0.0
    %1004 = vmatprep.subr.mxu0 0.0
    %1005 = vmatpush1.xpose.msra.mxu0 0.0
    %1006 = vmatprep.subr.mxu0 0.0
    %1007 = vmatpush1.xpose.msra.mxu0 0.0
    %1008 = vmatprep.subr.mxu0 0.0
    %1009 = vmatpush1.xpose.msra.mxu0 0.0
    %1010 = vmatprep.subr.mxu0 0.0
    %1011 = vmatpush1.xpose.msra.mxu0 0.0
    %1012 = vmatprep.subr.mxu0 0.0
    %1013 = vmatpush1.xpose.msra.mxu0 0.0
    %1014 = vmatprep.subr.mxu0 0.0
    %1015 = vmatpush1.xpose.msra.mxu0 0.0
    %1016 = vmatprep.subr.mxu0 0.0
    %1017 = vmatpush1.xpose.msra.mxu0 0.0
    %1018 = vmatprep.subr.mxu0 0.0
    %1019 = vmatpush1.xpose.msra.mxu0 0.0
    %1020 = vmatprep.mubr.f32.mxu0 0.0
    %1021 = vmatmul.mubr.f32.gmra.mrb[0].mxu0 %v948
    %v1022 = vpop.f32.mrb[0].mxu0
    %v1023 = vadd.f32 0.0, %v1022
    %v1024 = vpop.f32.mrb[0].mxu0
    %1025 = vdwg.mxu0
    %1026 = vxpose.xlu0.b32.start [1/16] %v327, 128
    %1027 = vxpose.xlu0.b32.cont [2/16] 0.0, 128
    %1028 = vxpose.xlu0.b32.cont [3/16] 0.0, 128
    %1029 = vxpose.xlu0.b32.cont [4/16] 0.0, 128
    %1030 = vxpose.xlu0.b32.cont [5/16] 0.0, 128
    %1031 = vxpose.xlu0.b32.cont [6/16] 0.0, 128
    %1032 = vxpose.xlu0.b32.cont [7/16] 0.0, 128
    %1033 = vxpose.xlu0.b32.cont [8/16] 0.0, 128
    %1034 = vxpose.xlu0.b32.cont [9/16] 0.0, 128
    %1035 = vxpose.xlu0.b32.cont [10/16] 0.0, 128
    %1036 = vxpose.xlu0.b32.cont [11/16] 0.0, 128
    %1037 = vxpose.xlu0.b32.cont [12/16] 0.0, 128
    %1038 = vxpose.xlu0.b32.cont [13/16] 0.0, 128
    %1039 = vxpose.xlu0.b32.cont [14/16] 0.0, 128
    %1040 = vxpose.xlu0.b32.cont [15/16] 0.0, 128
    %1041 = vxpose.xlu0.b32.end [16/16] 0.0, 128
    %v1042 = vpop.trf.xlu0
    %v1043 = vpop.trf.xlu0
    %v1044 = vpop.trf.xlu0
    %v1045 = vpop.trf.xlu0
    %v1046 = vpop.trf.xlu0
    %v1047 = vpop.trf.xlu0
    %v1048 = vpop.trf.xlu0
    %v1049 = vpop.trf.xlu0
    %v1050 = vpop.trf.xlu0
    %v1051 = vpop.trf.xlu0
    %v1052 = vpop.trf.xlu0
    %v1053 = vpop.trf.xlu0
    %v1054 = vpop.trf.xlu0
    %v1055 = vpop.trf.xlu0
    %v1056 = vpop.trf.xlu0
    %v1057 = vpop.trf.xlu0
    %v1059 = vsel %vm402, %v1042, 0
    %v1062 = vsel %vm402, %v1043, 0
    %1064 = vmatprep.subr.mxu0 0.0
    %1065 = vmatpush1.msra.mxu0 %v347
    %1066 = vmatprep.subr.mxu0 0.0
    %1067 = vmatpush1.msra.mxu0 0.0
    %1068 = vmatprep.subr.mxu0 0.0
    %1069 = vmatpush1.msra.mxu0 0.0
    %1070 = vmatprep.subr.mxu0 0.0
    %1071 = vmatpush1.msra.mxu0 0.0
    %1072 = vmatprep.subr.mxu0 0.0
    %1073 = vmatpush1.msra.mxu0 0.0
    %1074 = vmatprep.subr.mxu0 0.0
    %1075 = vmatpush1.msra.mxu0 0.0
    %1076 = vmatprep.subr.mxu0 0.0
    %1077 = vmatpush1.msra.mxu0 0.0
    %1078 = vmatprep.subr.mxu0 0.0
    %1079 = vmatpush1.msra.mxu0 0.0
    %1080 = vmatprep.subr.mxu0 0.0
    %1081 = vmatpush1.msra.mxu0 0.0
    %1082 = vmatprep.subr.mxu0 0.0
    %1083 = vmatpush1.msra.mxu0 0.0
    %1084 = vmatprep.subr.mxu0 0.0
    %1085 = vmatpush1.msra.mxu0 0.0
    %1086 = vmatprep.subr.mxu0 0.0
    %1087 = vmatpush1.msra.mxu0 0.0
    %1088 = vmatprep.subr.mxu0 0.0
    %1089 = vmatpush1.msra.mxu0 0.0
    %1090 = vmatprep.subr.mxu0 0.0
    %1091 = vmatpush1.msra.mxu0 0.0
    %1092 = vmatprep.subr.mxu0 0.0
    %1093 = vmatpush1.msra.mxu0 0.0
    %1094 = vmatprep.subr.mxu0 0.0
    %1095 = vmatpush1.msra.mxu0 0.0
    %1096 = vmatprep.subr.mxu0 0.0
    %1097 = vmatpush1.msra.mxu0 0.0
    %1098 = vmatprep.subr.mxu0 0.0
    %1099 = vmatpush1.msra.mxu0 0.0
    %1100 = vmatprep.subr.mxu0 0.0
    %1101 = vmatpush1.msra.mxu0 0.0
    %1102 = vmatprep.subr.mxu0 0.0
    %1103 = vmatpush1.msra.mxu0 0.0
    %1104 = vmatprep.subr.mxu0 0.0
    %1105 = vmatpush1.msra.mxu0 0.0
    %1106 = vmatprep.subr.mxu0 0.0
    %1107 = vmatpush1.msra.mxu0 0.0
    %1108 = vmatprep.subr.mxu0 0.0
    %1109 = vmatpush1.msra.mxu0 0.0
    %1110 = vmatprep.subr.mxu0 0.0
    %1111 = vmatpush1.msra.mxu0 0.0
    %1112 = vmatprep.subr.mxu0 0.0
    %1113 = vmatpush1.msra.mxu0 0.0
    %1114 = vmatprep.subr.mxu0 0.0
    %1115 = vmatpush1.msra.mxu0 0.0
    %1116 = vmatprep.subr.mxu0 0.0
    %1117 = vmatpush1.msra.mxu0 0.0
    %1118 = vmatprep.subr.mxu0 0.0
    %1119 = vmatpush1.msra.mxu0 0.0
    %1120 = vmatprep.subr.mxu0 0.0
    %1121 = vmatpush1.msra.mxu0 0.0
    %1122 = vmatprep.subr.mxu0 0.0
    %1123 = vmatpush1.msra.mxu0 0.0
    %1124 = vmatprep.subr.mxu0 0.0
    %1125 = vmatpush1.msra.mxu0 0.0
    %1126 = vmatprep.subr.mxu0 0.0
    %1127 = vmatpush1.msra.mxu0 0.0
    %1128 = vmatprep.mubr.f32.mxu0 0.0
    %1129 = vmatmul.mubr.f32.gmra.mrb[0].mxu0 %v1059
    %v1130 = vpop.f32.mrb[0].mxu0
    %v1131 = vadd.f32 0.0, %v1130
    %v1132 = vpop.f32.mrb[0].mxu0
    %1133 = vmatprep.mubr.f32.mxu0 0.0
    %1134 = vmatmul.mubr.f32.gmra.mrb[0].mxu0 %v1062
    %v1135 = vpop.f32.mrb[0].mxu0
    %v1136 = vadd.f32 0.0, %v1135
    %v1137 = vpop.f32.mrb[0].mxu0
    %1138 = vdwg.mxu0
    %v1139 = vmul.f32 %v1131, 0.35355338
    %v1140 = vmul.f32 %v1136, 0.35355338
    %v1141 = vadd.f32 %v1139, %v69
    %v1142 = vadd.f32 %v1140, %v70
    %v1143 = vsel %vm488, %v1141, -inf
    %1144 = vmax.xlane.f32.xlu0 %v1143
    %v1145 = vpop.xlane.xlu0 %1144
    %v1146 = vsel %vm488, %v1142, -inf
    %1147 = vmax.xlane.f32.xlu0 %v1146
    %v1148 = vpop.xlane.xlu0 %1147
    %v1149 = vsub.f32 %v1141, %v1145
    %v1150 = vsub.f32 %v1142, %v1148
    %v1151 = vmul.f32 %v1149, 1.442695
    %v1152 = vpow.pop %v1151
    %v1153 = vmul.f32 %v1150, 1.442695
    %v1154 = vpow.pop %v1153
    %v1155 = vsel %vm488, %v1152, 0.0
    %1156 = vadd.xlane.f32.xlu0 %v1155
    %v1157 = vpop.xlane.xlu0 %1156
    %v1158 = vsel %vm488, %v1154, 0.0
    %1159 = vadd.xlane.f32.xlu0 %v1158
    %v1160 = vpop.xlane.xlu0 %1159
    %v1161 = vrcp.pop %v1157
    %v1162 = vrcp.pop %v1160
    %v1163 = vmul.f32 %v1152, %v1161
    %v1164 = vmul.f32 %v1154, %v1162
    %v1166 = vsel %vm488, %v367, 0
    %v1169 = vsel %vm488, %v1163, 0
    %v1172 = vsel %vm488, %v1164, 0
    %1174 = vmatprep.subr.mxu0 0.0
    %1175 = vmatpush1.xpose.msra.mxu0 %v1169
    %1176 = vmatprep.subr.mxu0 0.0
    %1177 = vmatpush1.xpose.msra.mxu0 %v1172
    %1178 = vmatprep.subr.mxu0 0.0
    %1179 = vmatpush1.xpose.msra.mxu0 0.0
    %1180 = vmatprep.subr.mxu0 0.0
    %1181 = vmatpush1.xpose.msra.mxu0 0.0
    %1182 = vmatprep.subr.mxu0 0.0
    %1183 = vmatpush1.xpose.msra.mxu0 0.0
    %1184 = vmatprep.subr.mxu0 0.0
    %1185 = vmatpush1.xpose.msra.mxu0 0.0
    %1186 = vmatprep.subr.mxu0 0.0
    %1187 = vmatpush1.xpose.msra.mxu0 0.0
    %1188 = vmatprep.subr.mxu0 0.0
    %1189 = vmatpush1.xpose.msra.mxu0 0.0
    %1190 = vmatprep.subr.mxu0 0.0
    %1191 = vmatpush1.xpose.msra.mxu0 0.0
    %1192 = vmatprep.subr.mxu0 0.0
    %1193 = vmatpush1.xpose.msra.mxu0 0.0
    %1194 = vmatprep.subr.mxu0 0.0
    %1195 = vmatpush1.xpose.msra.mxu0 0.0
    %1196 = vmatprep.subr.mxu0 0.0
    %1197 = vmatpush1.xpose.msra.mxu0 0.0
    %1198 = vmatprep.subr.mxu0 0.0
    %1199 = vmatpush1.xpose.msra.mxu0 0.0
    %1200 = vmatprep.subr.mxu0 0.0
    %1201 = vmatpush1.xpose.msra.mxu0 0.0
    %1202 = vmatprep.subr.mxu0 0.0
    %1203 = vmatpush1.xpose.msra.mxu0 0.0
    %1204 = vmatprep.subr.mxu0 0.0
    %1205 = vmatpush1.xpose.msra.mxu0 0.0
    %1206 = vmatprep.subr.mxu0 0.0
    %1207 = vmatpush1.xpose.msra.mxu0 0.0
    %1208 = vmatprep.subr.mxu0 0.0
    %1209 = vmatpush1.xpose.msra.mxu0 0.0
    %1210 = vmatprep.subr.mxu0 0.0
    %1211 = vmatpush1.xpose.msra.mxu0 0.0
    %1212 = vmatprep.subr.mxu0 0.0
    %1213 = vmatpush1.xpose.msra.mxu0 0.0
    %1214 = vmatprep.subr.mxu0 0.0
    %1215 = vmatpush1.xpose.msra.mxu0 0.0
    %1216 = vmatprep.subr.mxu0 0.0
    %1217 = vmatpush1.xpose.msra.mxu0 0.0
    %1218 = vmatprep.subr.mxu0 0.0
    %1219 = vmatpush1.xpose.msra.mxu0 0.0
    %1220 = vmatprep.subr.mxu0 0.0
    %1221 = vmatpush1.xpose.msra.mxu0 0.0
    %1222 = vmatprep.subr.mxu0 0.0
    %1223 = vmatpush1.xpose.msra.mxu0 0.0
    %1224 = vmatprep.subr.mxu0 0.0
    %1225 = vmatpush1.xpose.msra.mxu0 0.0
    %1226 = vmatprep.subr.mxu0 0.0
    %1227 = vmatpush1.xpose.msra.mxu0 0.0
    %1228 = vmatprep.subr.mxu0 0.0
    %1229 = vmatpush1.xpose.msra.mxu0 0.0
    %1230 = vmatprep.subr.mxu0 0.0
    %1231 = vmatpush1.xpose.msra.mxu0 0.0
    %1232 = vmatprep.subr.mxu0 0.0
    %1233 = vmatpush1.xpose.msra.mxu0 0.0
    %1234 = vmatprep.subr.mxu0 0.0
    %1235 = vmatpush1.xpose.msra.mxu0 0.0
    %1236 = vmatprep.subr.mxu0 0.0
    %1237 = vmatpush1.xpose.msra.mxu0 0.0
    %1238 = vmatprep.mubr.f32.mxu0 0.0
    %1239 = vmatmul.mubr.f32.gmra.mrb[0].mxu0 %v1166
    %v1240 = vpop.f32.mrb[0].mxu0
    %v1241 = vadd.f32 0.0, %v1240
    %v1242 = vpop.f32.mrb[0].mxu0
    %1243 = vdwg.mxu0
    %v1244 = vld [vmem:[%s6] sm:$0xff]
    %v1245 = vld [vmem:[%s6 + $0x8] sm:$0xff]
    %v1246 = vld [vmem:[%s6 + $0x10] sm:$0xff]
    %v1247 = vld [vmem:[%s6 + $0x18] sm:$0xff]
    %v1248 = vld [vmem:[%s7] sm:$0x1]
    %v1250 = vlaneseq
    %v1251 = vshrl.u32 %v1250, 7
    %v1252 = vsub.s32 0, %v1251
    %v1253 = vrot.slane %v1248, %v1252
    %1255 = vxpose.xlu0.b32.start [1/16] %v587, 128
    %1256 = vxpose.xlu0.b32.cont [2/16] %v805, 128
    %1257 = vxpose.xlu0.b32.cont [3/16] %v1023, 128
    %1258 = vxpose.xlu0.b32.cont [4/16] %v1241, 128
    %1259 = vxpose.xlu0.b32.cont [5/16] 0.0, 128
    %1260 = vxpose.xlu0.b32.cont [6/16] 0.0, 128
    %1261 = vxpose.xlu0.b32.cont [7/16] 0.0, 128
    %1262 = vxpose.xlu0.b32.cont [8/16] 0.0, 128
    %1263 = vxpose.xlu0.b32.cont [9/16] 0.0, 128
    %1264 = vxpose.xlu0.b32.cont [10/16] 0.0, 128
    %1265 = vxpose.xlu0.b32.cont [11/16] 0.0, 128
    %1266 = vxpose.xlu0.b32.cont [12/16] 0.0, 128
    %1267 = vxpose.xlu0.b32.cont [13/16] 0.0, 128
    %1268 = vxpose.xlu0.b32.cont [14/16] 0.0, 128
    %1269 = vxpose.xlu0.b32.cont [15/16] 0.0, 128
    %1270 = vxpose.xlu0.b32.end [16/16] 0.0, 128
    %v1271 = vpop.trf.xlu0
    %v1272 = vpop.trf.xlu0
    %v1273 = vpop.trf.xlu0
    %v1274 = vpop.trf.xlu0
    %v1275 = vpop.trf.xlu0
    %v1276 = vpop.trf.xlu0
    %v1277 = vpop.trf.xlu0
    %v1278 = vpop.trf.xlu0
    %v1279 = vpop.trf.xlu0
    %v1280 = vpop.trf.xlu0
    %v1281 = vpop.trf.xlu0
    %v1282 = vpop.trf.xlu0
    %v1283 = vpop.trf.xlu0
    %v1284 = vpop.trf.xlu0
    %v1285 = vpop.trf.xlu0
    %v1286 = vpop.trf.xlu0
    %v1288 = vsel %vm75, %v1271, 0
    %v1291 = vsel %vm75, %v1272, 0
    %1293 = vmatprep.subr.mxu0 0.0
    %1294 = vmatpush1.msra.mxu0 %v1244
    %1295 = vmatprep.subr.mxu0 0.0
    %1296 = vmatpush1.msra.mxu0 %v1245
    %1297 = vmatprep.subr.mxu0 0.0
    %1298 = vmatpush1.msra.mxu0 %v1246
    %1299 = vmatprep.subr.mxu0 0.0
    %1300 = vmatpush1.msra.mxu0 %v1247
    %1301 = vmatprep.subr.mxu0 0.0
    %1302 = vmatpush1.msra.mxu0 0.0
    %1303 = vmatprep.subr.mxu0 0.0
    %1304 = vmatpush1.msra.mxu0 0.0
    %1305 = vmatprep.subr.mxu0 0.0
    %1306 = vmatpush1.msra.mxu0 0.0
    %1307 = vmatprep.subr.mxu0 0.0
    %1308 = vmatpush1.msra.mxu0 0.0
    %1309 = vmatprep.subr.mxu0 0.0
    %1310 = vmatpush1.msra.mxu0 0.0
    %1311 = vmatprep.subr.mxu0 0.0
    %1312 = vmatpush1.msra.mxu0 0.0
    %1313 = vmatprep.subr.mxu0 0.0
    %1314 = vmatpush1.msra.mxu0 0.0
    %1315 = vmatprep.subr.mxu0 0.0
    %1316 = vmatpush1.msra.mxu0 0.0
    %1317 = vmatprep.subr.mxu0 0.0
    %1318 = vmatpush1.msra.mxu0 0.0
    %1319 = vmatprep.subr.mxu0 0.0
    %1320 = vmatpush1.msra.mxu0 0.0
    %1321 = vmatprep.subr.mxu0 0.0
    %1322 = vmatpush1.msra.mxu0 0.0
    %1323 = vmatprep.subr.mxu0 0.0
    %1324 = vmatpush1.msra.mxu0 0.0
    %1325 = vmatprep.subr.mxu0 0.0
    %1326 = vmatpush1.msra.mxu0 0.0
    %1327 = vmatprep.subr.mxu0 0.0
    %1328 = vmatpush1.msra.mxu0 0.0
    %1329 = vmatprep.subr.mxu0 0.0
    %1330 = vmatpush1.msra.mxu0 0.0
    %1331 = vmatprep.subr.mxu0 0.0
    %1332 = vmatpush1.msra.mxu0 0.0
    %1333 = vmatprep.subr.mxu0 0.0
    %1334 = vmatpush1.msra.mxu0 0.0
    %1335 = vmatprep.subr.mxu0 0.0
    %1336 = vmatpush1.msra.mxu0 0.0
    %1337 = vmatprep.subr.mxu0 0.0
    %1338 = vmatpush1.msra.mxu0 0.0
    %1339 = vmatprep.subr.mxu0 0.0
    %1340 = vmatpush1.msra.mxu0 0.0
    %1341 = vmatprep.subr.mxu0 0.0
    %1342 = vmatpush1.msra.mxu0 0.0
    %1343 = vmatprep.subr.mxu0 0.0
    %1344 = vmatpush1.msra.mxu0 0.0
    %1345 = vmatprep.subr.mxu0 0.0
    %1346 = vmatpush1.msra.mxu0 0.0
    %1347 = vmatprep.subr.mxu0 0.0
    %1348 = vmatpush1.msra.mxu0 0.0
    %1349 = vmatprep.subr.mxu0 0.0
    %1350 = vmatpush1.msra.mxu0 0.0
    %1351 = vmatprep.subr.mxu0 0.0
    %1352 = vmatpush1.msra.mxu0 0.0
    %1353 = vmatprep.subr.mxu0 0.0
    %1354 = vmatpush1.msra.mxu0 0.0
    %1355 = vmatprep.subr.mxu0 0.0
    %1356 = vmatpush1.msra.mxu0 0.0
    %1357 = vmatprep.mubr.f32.mxu0 0.0
    %1358 = vmatmul.mubr.f32.gmra.mrb[0].mxu0 %v1288
    %v1359 = vpop.f32.mrb[0].mxu0
    %v1360 = vadd.f32 %v1253, %v1359
    %v1361 = vpop.f32.mrb[0].mxu0
    %1362 = vmatprep.mubr.f32.mxu0 0.0
    %1363 = vmatmul.mubr.f32.gmra.mrb[0].mxu0 %v1291
    %v1364 = vpop.f32.mrb[0].mxu0
    %v1365 = vadd.f32 %v1253, %v1364
    %v1366 = vpop.f32.mrb[0].mxu0
    %1367 = vdwg.mxu0
    %v1368 = vadd.f32 %v117, %v1360
    %v1369 = vadd.f32 %v118, %v1365
    %v1370 = vld [vmem:[%s8] sm:$0x1]
    %v1371 = vld [vmem:[%s9] sm:$0x1]
    %v1372 = vsel %vm75, %v1368, 0.0
    %1373 = vadd.xlane.f32.xlu0 %v1372
    %v1374 = vpop.xlane.xlu0 %1373
    %v1375 = vsel %vm75, %v1369, 0.0
    %1376 = vadd.xlane.f32.xlu0 %v1375
    %v1377 = vpop.xlane.xlu0 %1376
    %v1378 = vmul.f32 %v1374, %v82
    %v1379 = vmul.f32 %v1377, %v82
    %v1380 = vsub.f32 %v1368, %v1378
    %v1381 = vsub.f32 %v1369, %v1379
    %v1382 = vmul.f32 %v1380, %v1380
    %v1383 = vmul.f32 %v1381, %v1381
    %v1384 = vsel %vm75, %v1382, 0.0
    %1385 = vadd.xlane.f32.xlu0 %v1384
    %v1386 = vpop.xlane.xlu0 %1385
    %v1387 = vsel %vm75, %v1383, 0.0
    %1388 = vadd.xlane.f32.xlu0 %v1387
    %v1389 = vpop.xlane.xlu0 %1388
    %v1390 = vmul.f32 %v1386, %v82
    %v1391 = vmul.f32 %v1389, %v82
    %v1392 = vadd.f32 %v1390, 1e-12
    %v1393 = vadd.f32 %v1391, 1e-12
    %v1394 = vrsqrt.pop %v1392
    %v1395 = vrsqrt.pop %v1393
    %v1396 = vmul.f32 %v1380, %v1394
    %v1397 = vmul.f32 %v1381, %v1395
    %v1399 = vlaneseq
    %v1400 = vshrl.u32 %v1399, 7
    %v1401 = vsub.s32 0, %v1400
    %v1402 = vrot.slane %v1370, %v1401
    %v1404 = vmul.f32 %v1396, %v1402
    %v1405 = vmul.f32 %v1397, %v1402
    %v1407 = vlaneseq
    %v1408 = vshrl.u32 %v1407, 7
    %v1409 = vsub.s32 0, %v1408
    %v1410 = vrot.slane %v1371, %v1409
    %v1412 = vadd.f32 %v1404, %v1410
    %v1413 = vadd.f32 %v1405, %v1410
    %v1414 = vld [vmem:[%s10] sm:$0xff]
    %v1415 = vld [vmem:[%s10 + $0x8] sm:$0xff]
    %v1416 = vld [vmem:[%s10 + $0x10] sm:$0xff]
    %v1417 = vld [vmem:[%s10 + $0x18] sm:$0xff]
    %v1418 = vld [vmem:[%s11] sm:$0x1]
    %v1420 = vlaneseq
    %v1421 = vshrl.u32 %v1420, 7
    %v1422 = vsub.s32 0, %v1421
    %v1423 = vrot.slane %v1418, %v1422
    %v1426 = vsel %vm75, %v1412, 0
    %v1429 = vsel %vm75, %v1413, 0
    %1431 = vmatprep.subr.mxu0 0.0
    %1432 = vmatpush1.msra.mxu0 %v1414
    %1433 = vmatprep.subr.mxu0 0.0
    %1434 = vmatpush1.msra.mxu0 %v1415
    %1435 = vmatprep.subr.mxu0 0.0
    %1436 = vmatpush1.msra.mxu0 %v1416
    %1437 = vmatprep.subr.mxu0 0.0
    %1438 = vmatpush1.msra.mxu0 %v1417
    %1439 = vmatprep.subr.mxu0 0.0
    %1440 = vmatpush1.msra.mxu0 0.0
    %1441 = vmatprep.subr.mxu0 0.0
    %1442 = vmatpush1.msra.mxu0 0.0
    %1443 = vmatprep.subr.mxu0 0.0
    %1444 = vmatpush1.msra.mxu0 0.0
    %1445 = vmatprep.subr.mxu0 0.0
    %1446 = vmatpush1.msra.mxu0 0.0
    %1447 = vmatprep.subr.mxu0 0.0
    %1448 = vmatpush1.msra.mxu0 0.0
    %1449 = vmatprep.subr.mxu0 0.0
    %1450 = vmatpush1.msra.mxu0 0.0
    %1451 = vmatprep.subr.mxu0 0.0
    %1452 = vmatpush1.msra.mxu0 0.0
    %1453 = vmatprep.subr.mxu0 0.0
    %1454 = vmatpush1.msra.mxu0 0.0
    %1455 = vmatprep.subr.mxu0 0.0
    %1456 = vmatpush1.msra.mxu0 0.0
    %1457 = vmatprep.subr.mxu0 0.0
    %1458 = vmatpush1.msra.mxu0 0.0
    %1459 = vmatprep.subr.mxu0 0.0
    %1460 = vmatpush1.msra.mxu0 0.0
    %1461 = vmatprep.subr.mxu0 0.0
    %1462 = vmatpush1.msra.mxu0 0.0
    %1463 = vmatprep.subr.mxu0 0.0
    %1464 = vmatpush1.msra.mxu0 0.0
    %1465 = vmatprep.subr.mxu0 0.0
    %1466 = vmatpush1.msra.mxu0 0.0
    %1467 = vmatprep.subr.mxu0 0.0
    %1468 = vmatpush1.msra.mxu0 0.0
    %1469 = vmatprep.subr.mxu0 0.0
    %1470 = vmatpush1.msra.mxu0 0.0
    %1471 = vmatprep.subr.mxu0 0.0
    %1472 = vmatpush1.msra.mxu0 0.0
    %1473 = vmatprep.subr.mxu0 0.0
    %1474 = vmatpush1.msra.mxu0 0.0
    %1475 = vmatprep.subr.mxu0 0.0
    %1476 = vmatpush1.msra.mxu0 0.0
    %1477 = vmatprep.subr.mxu0 0.0
    %1478 = vmatpush1.msra.mxu0 0.0
    %1479 = vmatprep.subr.mxu0 0.0
    %1480 = vmatpush1.msra.mxu0 0.0
    %1481 = vmatprep.subr.mxu0 0.0
    %1482 = vmatpush1.msra.mxu0 0.0
    %1483 = vmatprep.subr.mxu0 0.0
    %1484 = vmatpush1.msra.mxu0 0.0
    %1485 = vmatprep.subr.mxu0 0.0
    %1486 = vmatpush1.msra.mxu0 0.0
    %1487 = vmatprep.subr.mxu0 0.0
    %1488 = vmatpush1.msra.mxu0 0.0
    %1489 = vmatprep.subr.mxu0 0.0
    %1490 = vmatpush1.msra.mxu0 0.0
    %1491 = vmatprep.subr.mxu0 0.0
    %1492 = vmatpush1.msra.mxu0 0.0
    %1493 = vmatprep.subr.mxu0 0.0
    %1494 = vmatpush1.msra.mxu0 0.0
    %1495 = vmatprep.mubr.f32.mxu0 0.0
    %1496 = vmatmul.mubr.f32.gmra.mrb[0].mxu0 %v1426
    %v1497 = vpop.f32.mrb[0].mxu0
    %v1498 = vadd.f32 %v1423, %v1497
    %v1499 = vpop.f32.mrb[0].mxu0
    %1500 = vmatprep.mubr.f32.mxu0 0.0
    %1501 = vmatmul.mubr.f32.gmra.mrb[0].mxu0 %v1429
    %v1502 = vpop.f32.mrb[0].mxu0
    %v1503 = vadd.f32 %v1423, %v1502
    %v1504 = vpop.f32.mrb[0].mxu0
    %1505 = vdwg.mxu0
    %v1506 = vmul.f32 %v1498, 0.5
    %v1507 = vmul.f32 %v1503, 0.5
    %v1508 = vmul.f32 %v1498, 0.044715
    %v1509 = vmul.f32 %v1503, 0.044715
    %v1510 = vmul.f32 %v1508, %v1498
    %v1511 = vmul.f32 %v1509, %v1503
    %v1512 = vmul.f32 %v1510, %v1498
    %v1513 = vmul.f32 %v1511, %v1503
    %v1514 = vadd.f32 %v1498, %v1512
    %v1515 = vadd.f32 %v1503, %v1513
    %v1516 = vmul.f32 %v1514, 0.7978846
    %v1517 = vmul.f32 %v1515, 0.7978846
    %v1518 = vtanh.pop %v1516
    %v1519 = vtanh.pop %v1517
    %v1520 = vadd.f32 %v1518, 1.0
    %v1521 = vadd.f32 %v1519, 1.0
    %v1522 = vmul.f32 %v1506, %v1520
    %v1523 = vmul.f32 %v1507, %v1521
    %v1524 = vld [vmem:[%s12] sm:$0xff]
    %v1525 = vld [vmem:[%s12 + $0x8] sm:$0xff]
    %v1526 = vld [vmem:[%s12 + $0x10] sm:$0xff]
    %v1527 = vld [vmem:[%s12 + $0x18] sm:$0xff]
    %v1528 = vld [vmem:[%s12 + $0x20] sm:$0xff]
    %v1529 = vld [vmem:[%s12 + $0x28] sm:$0xff]
    %v1530 = vld [vmem:[%s12 + $0x30] sm:$0xff]
    %v1531 = vld [vmem:[%s12 + $0x38] sm:$0xff]
    %v1532 = vld [vmem:[%s13] sm:$0x1]
    %v1534 = vlaneseq
    %v1535 = vshrl.u32 %v1534, 7
    %v1536 = vsub.s32 0, %v1535
    %v1537 = vrot.slane %v1532, %v1536
    %vm1539 = vcmask 523264
    %v1541 = vsel %vm1539, %v1522, 0
    %v1544 = vsel %vm1539, %v1523, 0
    %1546 = vmatprep.subr.mxu0 0.0
    %1547 = vmatpush1.msra.mxu0 %v1524
    %1548 = vmatprep.subr.mxu0 0.0
    %1549 = vmatpush1.msra.mxu0 %v1525
    %1550 = vmatprep.subr.mxu0 0.0
    %1551 = vmatpush1.msra.mxu0 %v1526
    %1552 = vmatprep.subr.mxu0 0.0
    %1553 = vmatpush1.msra.mxu0 %v1527
    %1554 = vmatprep.subr.mxu0 0.0
    %1555 = vmatpush1.msra.mxu0 %v1528
    %1556 = vmatprep.subr.mxu0 0.0
    %1557 = vmatpush1.msra.mxu0 %v1529
    %1558 = vmatprep.subr.mxu0 0.0
    %1559 = vmatpush1.msra.mxu0 %v1530
    %1560 = vmatprep.subr.mxu0 0.0
    %1561 = vmatpush1.msra.mxu0 %v1531
    %1562 = vmatprep.subr.mxu0 0.0
    %1563 = vmatpush1.msra.mxu0 0.0
    %1564 = vmatprep.subr.mxu0 0.0
    %1565 = vmatpush1.msra.mxu0 0.0
    %1566 = vmatprep.subr.mxu0 0.0
    %1567 = vmatpush1.msra.mxu0 0.0
    %1568 = vmatprep.subr.mxu0 0.0
    %1569 = vmatpush1.msra.mxu0 0.0
    %1570 = vmatprep.subr.mxu0 0.0
    %1571 = vmatpush1.msra.mxu0 0.0
    %1572 = vmatprep.subr.mxu0 0.0
    %1573 = vmatpush1.msra.mxu0 0.0
    %1574 = vmatprep.subr.mxu0 0.0
    %1575 = vmatpush1.msra.mxu0 0.0
    %1576 = vmatprep.subr.mxu0 0.0
    %1577 = vmatpush1.msra.mxu0 0.0
    %1578 = vmatprep.subr.mxu0 0.0
    %1579 = vmatpush1.msra.mxu0 0.0
    %1580 = vmatprep.subr.mxu0 0.0
    %1581 = vmatpush1.msra.mxu0 0.0
    %1582 = vmatprep.subr.mxu0 0.0
    %1583 = vmatpush1.msra.mxu0 0.0
    %1584 = vmatprep.subr.mxu0 0.0
    %1585 = vmatpush1.msra.mxu0 0.0
    %1586 = vmatprep.subr.mxu0 0.0
    %1587 = vmatpush1.msra.mxu0 0.0
    %1588 = vmatprep.subr.mxu0 0.0
    %1589 = vmatpush1.msra.mxu0 0.0
    %1590 = vmatprep.subr.mxu0 0.0
    %1591 = vmatpush1.msra.mxu0 0.0
    %1592 = vmatprep.subr.mxu0 0.0
    %1593 = vmatpush1.msra.mxu0 0.0
    %1594 = vmatprep.subr.mxu0 0.0
    %1595 = vmatpush1.msra.mxu0 0.0
    %1596 = vmatprep.subr.mxu0 0.0
    %1597 = vmatpush1.msra.mxu0 0.0
    %1598 = vmatprep.subr.mxu0 0.0
    %1599 = vmatpush1.msra.mxu0 0.0
    %1600 = vmatprep.subr.mxu0 0.0
    %1601 = vmatpush1.msra.mxu0 0.0
    %1602 = vmatprep.subr.mxu0 0.0
    %1603 = vmatpush1.msra.mxu0 0.0
    %1604 = vmatprep.subr.mxu0 0.0
    %1605 = vmatpush1.msra.mxu0 0.0
    %1606 = vmatprep.subr.mxu0 0.0
    %1607 = vmatpush1.msra.mxu0 0.0
    %1608 = vmatprep.subr.mxu0 0.0
    %1609 = vmatpush1.msra.mxu0 0.0
    %1610 = vmatprep.mubr.f32.mxu0 0.0
    %1611 = vmatmul.mubr.f32.gmra.mrb[0].mxu0 %v1541
    %v1612 = vpop.f32.mrb[0].mxu0
    %v1613 = vadd.f32 %v1537, %v1612
    %v1614 = vpop.f32.mrb[0].mxu0
    %1615 = vmatprep.mubr.f32.mxu0 0.0
    %1616 = vmatmul.mubr.f32.gmra.mrb[0].mxu0 %v1544
    %v1617 = vpop.f32.mrb[0].mxu0
    %v1618 = vadd.f32 %v1537, %v1617
    %v1619 = vpop.f32.mrb[0].mxu0
    %1620 = vdwg.mxu0
    %v1621 = vadd.f32 %v1412, %v1613
    %v1622 = vadd.f32 %v1413, %v1618
    %v1623 = vld [vmem:[%s14] sm:$0x1]
    %v1624 = vld [vmem:[%s15] sm:$0x1]
    %v1625 = vsel %vm75, %v1621, 0.0
    %1626 = vadd.xlane.f32.xlu0 %v1625
    %v1627 = vpop.xlane.xlu0 %1626
    %v1628 = vsel %vm75, %v1622, 0.0
    %1629 = vadd.xlane.f32.xlu0 %v1628
    %v1630 = vpop.xlane.xlu0 %1629
    %v1631 = vmul.f32 %v1627, %v82
    %v1632 = vmul.f32 %v1630, %v82
    %v1633 = vsub.f32 %v1621, %v1631
    %v1634 = vsub.f32 %v1622, %v1632
    %v1635 = vmul.f32 %v1633, %v1633
    %v1636 = vmul.f32 %v1634, %v1634
    %v1637 = vsel %vm75, %v1635, 0.0
    %1638 = vadd.xlane.f32.xlu0 %v1637
    %v1639 = vpop.xlane.xlu0 %1638
    %v1640 = vsel %vm75, %v1636, 0.0
    %1641 = vadd.xlane.f32.xlu0 %v1640
    %v1642 = vpop.xlane.xlu0 %1641
    %v1643 = vmul.f32 %v1639, %v82
    %v1644 = vmul.f32 %v1642, %v82
    %v1645 = vadd.f32 %v1643, 1e-12
    %v1646 = vadd.f32 %v1644, 1e-12
    %v1647 = vrsqrt.pop %v1645
    %v1648 = vrsqrt.pop %v1646
    %v1649 = vmul.f32 %v1633, %v1647
    %v1650 = vmul.f32 %v1634, %v1648
    %v1652 = vlaneseq
    %v1653 = vshrl.u32 %v1652, 7
    %v1654 = vsub.s32 0, %v1653
    %v1655 = vrot.slane %v1623, %v1654
    %v1657 = vmul.f32 %v1649, %v1655
    %v1658 = vmul.f32 %v1650, %v1655
    %v1660 = vlaneseq
    %v1661 = vshrl.u32 %v1660, 7
    %v1662 = vsub.s32 0, %v1661
    %v1663 = vrot.slane %v1624, %v1662
    %v1665 = vadd.f32 %v1657, %v1663
    %v1666 = vadd.f32 %v1658, %v1663
    %s1667 = scalar_lea.vmem %s4, 96
    %v1668 = vld [vmem:[%s1667] sm:$0xff]
    %v1669 = vld [vmem:[%s1667 + $0x8] sm:$0xff]
    %v1670 = vld [vmem:[%s1667 + $0x10] sm:$0xff]
    %v1671 = vld [vmem:[%s1667 + $0x18] sm:$0xff]
    %v1672 = vld [vmem:[%s1667 + $0x20] sm:$0xff]
    %v1673 = vld [vmem:[%s1667 + $0x28] sm:$0xff]
    %v1674 = vld [vmem:[%s1667 + $0x30] sm:$0xff]
    %v1675 = vld [vmem:[%s1667 + $0x38] sm:$0xff]
    %v1676 = vld [vmem:[%s1667 + $0x40] sm:$0xff]
    %v1677 = vld [vmem:[%s1667 + $0x48] sm:$0xff]
    %v1678 = vld [vmem:[%s1667 + $0x50] sm:$0xff]
    %v1679 = vld [vmem:[%s1667 + $0x58] sm:$0xff]
    %s1680 = scalar_lea.vmem %s5, 96
    %v1681 = vld [vmem:[%s1680] sm:$0xff]
    %v1682 = vld [vmem:[%s1680 + $0x8] sm:$0xff]
    %v1683 = vld [vmem:[%s1680 + $0x10] sm:$0xff]
    %v1684 = vld [vmem:[%s1680 + $0x18] sm:$0xff]
    %v1685 = vld [vmem:[%s1680 + $0x20] sm:$0xff]
    %v1686 = vld [vmem:[%s1680 + $0x28] sm:$0xff]
    %v1687 = vld [vmem:[%s1680 + $0x30] sm:$0xff]
    %v1688 = vld [vmem:[%s1680 + $0x38] sm:$0xff]
    %v1689 = vld [vmem:[%s1680 + $0x40] sm:$0xff]
    %v1690 = vld [vmem:[%s1680 + $0x48] sm:$0xff]
    %v1691 = vld [vmem:[%s1680 + $0x50] sm:$0xff]
    %v1692 = vld [vmem:[%s1680 + $0x58] sm:$0xff]
    %1694 = vset.pattern.permute.xlu0 0
    %1695 = vperm.xlu0 %1694, %v1681
    %v1696 = vpop.permute.xlu0 %1695
    %1699 = vset.pattern.permute.xlu0 0
    %1700 = vperm.xlu0 %1699, %v1682
    %v1701 = vpop.permute.xlu0 %1700
    %1704 = vset.pattern.permute.xlu0 0
    %1705 = vperm.xlu0 %1704, %v1683
    %v1706 = vpop.permute.xlu0 %1705
    %1709 = vset.pattern.permute.xlu0 0
    %1710 = vperm.xlu0 %1709, %v1684
    %v1711 = vpop.permute.xlu0 %1710
    %1714 = vset.pattern.permute.xlu0 0
    %1715 = vperm.xlu0 %1714, %v1685
    %v1716 = vpop.permute.xlu0 %1715
    %1719 = vset.pattern.permute.xlu0 0
    %1720 = vperm.xlu0 %1719, %v1686
    %v1721 = vpop.permute.xlu0 %1720
    %1724 = vset.pattern.permute.xlu0 0
    %1725 = vperm.xlu0 %1724, %v1687
    %v1726 = vpop.permute.xlu0 %1725
    %1729 = vset.pattern.permute.xlu0 0
    %1730 = vperm.xlu0 %1729, %v1688
    %v1731 = vpop.permute.xlu0 %1730
    %1734 = vset.pattern.permute.xlu0 0
    %1735 = vperm.xlu0 %1734, %v1689
    %v1736 = vpop.permute.xlu0 %1735
    %1739 = vset.pattern.permute.xlu0 0
    %1740 = vperm.xlu0 %1739, %v1690
    %v1741 = vpop.permute.xlu0 %1740
    %1744 = vset.pattern.permute.xlu0 0
    %1745 = vperm.xlu0 %1744, %v1691
    %v1746 = vpop.permute.xlu0 %1745
    %1749 = vset.pattern.permute.xlu0 0
    %1750 = vperm.xlu0 %1749, %v1692
    %v1751 = vpop.permute.xlu0 %1750
    %v1754 = vsel %vm75, %v1668, 0
    %v1757 = vsel %vm75, %v1669, 0
    %v1760 = vsel %vm75, %v1670, 0
    %v1763 = vsel %vm75, %v1671, 0
    %v1766 = vsel %vm75, %v1672, 0
    %v1769 = vsel %vm75, %v1673, 0
    %v1772 = vsel %vm75, %v1674, 0
    %v1775 = vsel %vm75, %v1675, 0
    %v1778 = vsel %vm75, %v1676, 0
    %v1781 = vsel %vm75, %v1677, 0
    %v1784 = vsel %vm75, %v1678, 0
    %v1787 = vsel %vm75, %v1679, 0
    %v1790 = vsel %vm75, %v1665, 0
    %v1793 = vsel %vm75, %v1666, 0
    %1795 = vmatprep.subr.mxu0 0.0
    %1796 = vmatpush1.xpose.msra.mxu0 %v1790
    %1797 = vmatprep.subr.mxu0 0.0
    %1798 = vmatpush1.xpose.msra.mxu0 %v1793
    %1799 = vmatprep.subr.mxu0 0.0
    %1800 = vmatpush1.xpose.msra.mxu0 0.0
    %1801 = vmatprep.subr.mxu0 0.0
    %1802 = vmatpush1.xpose.msra.mxu0 0.0
    %1803 = vmatprep.subr.mxu0 0.0
    %1804 = vmatpush1.xpose.msra.mxu0 0.0
    %1805 = vmatprep.subr.mxu0 0.0
    %1806 = vmatpush1.xpose.msra.mxu0 0.0
    %1807 = vmatprep.subr.mxu0 0.0
    %1808 = vmatpush1.xpose.msra.mxu0 0.0
    %1809 = vmatprep.subr.mxu0 0.0
    %1810 = vmatpush1.xpose.msra.mxu0 0.0
    %1811 = vmatprep.subr.mxu0 0.0
    %1812 = vmatpush1.xpose.msra.mxu0 0.0
    %1813 = vmatprep.subr.mxu0 0.0
    %1814 = vmatpush1.xpose.msra.mxu0 0.0
    %1815 = vmatprep.subr.mxu0 0.0
    %1816 = vmatpush1.xpose.msra.mxu0 0.0
    %1817 = vmatprep.subr.mxu0 0.0
    %1818 = vmatpush1.xpose.msra.mxu0 0.0
    %1819 = vmatprep.subr.mxu0 0.0
    %1820 = vmatpush1.xpose.msra.mxu0 0.0
    %1821 = vmatprep.subr.mxu0 0.0
    %1822 = vmatpush1.xpose.msra.mxu0 0.0
    %1823 = vmatprep.subr.mxu0 0.0
    %1824 = vmatpush1.xpose.msra.mxu0 0.0
    %1825 = vmatprep.subr.mxu0 0.0
    %1826 = vmatpush1.xpose.msra.mxu0 0.0
    %1827 = vmatprep.subr.mxu0 0.0
    %1828 = vmatpush1.xpose.msra.mxu0 0.0
    %1829 = vmatprep.subr.mxu0 0.0
    %1830 = vmatpush1.xpose.msra.mxu0 0.0
    %1831 = vmatprep.subr.mxu0 0.0
    %1832 = vmatpush1.xpose.msra.mxu0 0.0
    %1833 = vmatprep.subr.mxu0 0.0
    %1834 = vmatpush1.xpose.msra.mxu0 0.0
    %1835 = vmatprep.subr.mxu0 0.0
    %1836 = vmatpush1.xpose.msra.mxu0 0.0
    %1837 = vmatprep.subr.mxu0 0.0
    %1838 = vmatpush1.xpose.msra.mxu0 0.0
    %1839 = vmatprep.subr.mxu0 0.0
    %1840 = vmatpush1.xpose.msra.mxu0 0.0
    %1841 = vmatprep.subr.mxu0 0.0
    %1842 = vmatpush1.xpose.msra.mxu0 0.0
    %1843 = vmatprep.subr.mxu0 0.0
    %1844 = vmatpush1.xpose.msra.mxu0 0.0
    %1845 = vmatprep.subr.mxu0 0.0
    %1846 = vmatpush1.xpose.msra.mxu0 0.0
    %1847 = vmatprep.subr.mxu0 0.0
    %1848 = vmatpush1.xpose.msra.mxu0 0.0
    %1849 = vmatprep.subr.mxu0 0.0
    %1850 = vmatpush1.xpose.msra.mxu0 0.0
    %1851 = vmatprep.subr.mxu0 0.0
    %1852 = vmatpush1.xpose.msra.mxu0 0.0
    %1853 = vmatprep.subr.mxu0 0.0
    %1854 = vmatpush1.xpose.msra.mxu0 0.0
    %1855 = vmatprep.subr.mxu0 0.0
    %1856 = vmatpush1.xpose.msra.mxu0 0.0
    %1857 = vmatprep.subr.mxu0 0.0
    %1858 = vmatpush1.xpose.msra.mxu0 0.0
    %1859 = vmatprep.mubr.f32.mxu0 0.0
    %1860 = vmatmul.mubr.f32.gmra.mrb[0].mxu0 %v1754
    %v1861 = vpop.f32.mrb[0].mxu0
    %v1862 = vadd.f32 %v1696, %v1861
    %v1863 = vpop.f32.mrb[0].mxu0
    %1864 = vmatprep.mubr.f32.mxu0 0.0
    %1865 = vmatmul.mubr.f32.gmra.mrb[0].mxu0 %v1757
    %v1866 = vpop.f32.mrb[0].mxu0
    %v1867 = vadd.f32 %v1701, %v1866
    %v1868 = vpop.f32.mrb[0].mxu0
    %1869 = vmatprep.mubr.f32.mxu0 0.0
    %1870 = vmatmul.mubr.f32.gmra.mrb[0].mxu0 %v1760
    %v1871 = vpop.f32.mrb[0].mxu0
    %v1872 = vadd.f32 %v1706, %v1871
    %v1873 = vpop.f32.mrb[0].mxu0
    %1874 = vmatprep.mubr.f32.mxu0 0.0
    %1875 = vmatmul.mubr.f32.gmra.mrb[0].mxu0 %v1763
    %v1876 = vpop.f32.mrb[0].mxu0
    %v1877 = vadd.f32 %v1711, %v1876
    %v1878 = vpop.f32.mrb[0].mxu0
    %1879 = vmatprep.mubr.f32.mxu0 0.0
    %1880 = vmatmul.mubr.f32.gmra.mrb[0].mxu0 %v1766
    %v1881 = vpop.f32.mrb[0].mxu0
    %v1882 = vadd.f32 %v1716, %v1881
    %v1883 = vpop.f32.mrb[0].mxu0
    %1884 = vmatprep.mubr.f32.mxu0 0.0
    %1885 = vmatmul.mubr.f32.gmra.mrb[0].mxu0 %v1769
    %v1886 = vpop.f32.mrb[0].mxu0
    %v1887 = vadd.f32 %v1721, %v1886
    %v1888 = vpop.f32.mrb[0].mxu0
    %1889 = vmatprep.mubr.f32.mxu0 0.0
    %1890 = vmatmul.mubr.f32.gmra.mrb[0].mxu0 %v1772
    %v1891 = vpop.f32.mrb[0].mxu0
    %v1892 = vadd.f32 %v1726, %v1891
    %v1893 = vpop.f32.mrb[0].mxu0
    %1894 = vmatprep.mubr.f32.mxu0 0.0
    %1895 = vmatmul.mubr.f32.gmra.mrb[0].mxu0 %v1775
    %v1896 = vpop.f32.mrb[0].mxu0
    %v1897 = vadd.f32 %v1731, %v1896
    %v1898 = vpop.f32.mrb[0].mxu0
    %1899 = vmatprep.mubr.f32.mxu0 0.0
    %1900 = vmatmul.mubr.f32.gmra.mrb[0].mxu0 %v1778
    %v1901 = vpop.f32.mrb[0].mxu0
    %v1902 = vadd.f32 %v1736, %v1901
    %v1903 = vpop.f32.mrb[0].mxu0
    %1904 = vmatprep.mubr.f32.mxu0 0.0
    %1905 = vmatmul.mubr.f32.gmra.mrb[0].mxu0 %v1781
    %v1906 = vpop.f32.mrb[0].mxu0
    %v1907 = vadd.f32 %v1741, %v1906
    %v1908 = vpop.f32.mrb[0].mxu0
    %1909 = vmatprep.mubr.f32.mxu0 0.0
    %1910 = vmatmul.mubr.f32.gmra.mrb[0].mxu0 %v1784
    %v1911 = vpop.f32.mrb[0].mxu0
    %v1912 = vadd.f32 %v1746, %v1911
    %v1913 = vpop.f32.mrb[0].mxu0
    %1914 = vmatprep.mubr.f32.mxu0 0.0
    %1915 = vmatmul.mubr.f32.gmra.mrb[0].mxu0 %v1787
    %v1916 = vpop.f32.mrb[0].mxu0
    %v1917 = vadd.f32 %v1751, %v1916
    %v1918 = vpop.f32.mrb[0].mxu0
    %1919 = vdwg.mxu0
    %1920 = vxpose.xlu0.b32.start [1/16] %v1862, 128
    %1921 = vxpose.xlu0.b32.cont [2/16] 0.0, 128
    %1922 = vxpose.xlu0.b32.cont [3/16] 0.0, 128
    %1923 = vxpose.xlu0.b32.cont [4/16] 0.0, 128
    %1924 = vxpose.xlu0.b32.cont [5/16] 0.0, 128
    %1925 = vxpose.xlu0.b32.cont [6/16] 0.0, 128
    %1926 = vxpose.xlu0.b32.cont [7/16] 0.0, 128
    %1927 = vxpose.xlu0.b32.cont [8/16] 0.0, 128
    %1928 = vxpose.xlu0.b32.cont [9/16] 0.0, 128
    %1929 = vxpose.xlu0.b32.cont [10/16] 0.0, 128
    %1930 = vxpose.xlu0.b32.cont [11/16] 0.0, 128
    %1931 = vxpose.xlu0.b32.cont [12/16] 0.0, 128
    %1932 = vxpose.xlu0.b32.cont [13/16] 0.0, 128
    %1933 = vxpose.xlu0.b32.cont [14/16] 0.0, 128
    %1934 = vxpose.xlu0.b32.cont [15/16] 0.0, 128
    %1935 = vxpose.xlu0.b32.end [16/16] 0.0, 128
    %v1936 = vpop.trf.xlu0
    %v1937 = vpop.trf.xlu0
    %v1938 = vpop.trf.xlu0
    %v1939 = vpop.trf.xlu0
    %v1940 = vpop.trf.xlu0
    %v1941 = vpop.trf.xlu0
    %v1942 = vpop.trf.xlu0
    %v1943 = vpop.trf.xlu0
    %v1944 = vpop.trf.xlu0
    %v1945 = vpop.trf.xlu0
    %v1946 = vpop.trf.xlu0
    %v1947 = vpop.trf.xlu0
    %v1948 = vpop.trf.xlu0
    %v1949 = vpop.trf.xlu0
    %v1950 = vpop.trf.xlu0
    %v1951 = vpop.trf.xlu0
    %v1953 = vsel %vm402, %v1936, 0
    %v1956 = vsel %vm402, %v1937, 0
    %1958 = vmatprep.subr.mxu0 0.0
    %1959 = vmatpush1.msra.mxu0 %v1882
    %1960 = vmatprep.subr.mxu0 0.0
    %1961 = vmatpush1.msra.mxu0 0.0
    %1962 = vmatprep.subr.mxu0 0.0
    %1963 = vmatpush1.msra.mxu0 0.0
    %1964 = vmatprep.subr.mxu0 0.0
    %1965 = vmatpush1.msra.mxu0 0.0
    %1966 = vmatprep.subr.mxu0 0.0
    %1967 = vmatpush1.msra.mxu0 0.0
    %1968 = vmatprep.subr.mxu0 0.0
    %1969 = vmatpush1.msra.mxu0 0.0
    %1970 = vmatprep.subr.mxu0 0.0
    %1971 = vmatpush1.msra.mxu0 0.0
    %1972 = vmatprep.subr.mxu0 0.0
    %1973 = vmatpush1.msra.mxu0 0.0
    %1974 = vmatprep.subr.mxu0 0.0
    %1975 = vmatpush1.msra.mxu0 0.0
    %1976 = vmatprep.subr.mxu0 0.0
    %1977 = vmatpush1.msra.mxu0 0.0
    %1978 = vmatprep.subr.mxu0 0.0
    %1979 = vmatpush1.msra.mxu0 0.0
    %1980 = vmatprep.subr.mxu0 0.0
    %1981 = vmatpush1.msra.mxu0 0.0
    %1982 = vmatprep.subr.mxu0 0.0
    %1983 = vmatpush1.msra.mxu0 0.0
    %1984 = vmatprep.subr.mxu0 0.0
    %1985 = vmatpush1.msra.mxu0 0.0
    %1986 = vmatprep.subr.mxu0 0.0
    %1987 = vmatpush1.msra.mxu0 0.0
    %1988 = vmatprep.subr.mxu0 0.0
    %1989 = vmatpush1.msra.mxu0 0.0
    %1990 = vmatprep.subr.mxu0 0.0
    %1991 = vmatpush1.msra.mxu0 0.0
    %1992 = vmatprep.subr.mxu0 0.0
    %1993 = vmatpush1.msra.mxu0 0.0
    %1994 = vmatprep.subr.mxu0 0.0
    %1995 = vmatpush1.msra.mxu0 0.0
    %1996 = vmatprep.subr.mxu0 0.0
    %1997 = vmatpush1.msra.mxu0 0.0
    %1998 = vmatprep.subr.mxu0 0.0
    %1999 = vmatpush1.msra.mxu0 0.0
    %2000 = vmatprep.subr.mxu0 0.0
    %2001 = vmatpush1.msra.mxu0 0.0
    %2002 = vmatprep.subr.mxu0 0.0
    %2003 = vmatpush1.msra.mxu0 0.0
    %2004 = vmatprep.subr.mxu0 0.0
    %2005 = vmatpush1.msra.mxu0 0.0
    %2006 = vmatprep.subr.mxu0 0.0
    %2007 = vmatpush1.msra.mxu0 0.0
    %2008 = vmatprep.subr.mxu0 0.0
    %2009 = vmatpush1.msra.mxu0 0.0
    %2010 = vmatprep.subr.mxu0 0.0
    %2011 = vmatpush1.msra.mxu0 0.0
    %2012 = vmatprep.subr.mxu0 0.0
    %2013 = vmatpush1.msra.mxu0 0.0
    %2014 = vmatprep.subr.mxu0 0.0
    %2015 = vmatpush1.msra.mxu0 0.0
    %2016 = vmatprep.subr.mxu0 0.0
    %2017 = vmatpush1.msra.mxu0 0.0
    %2018 = vmatprep.subr.mxu0 0.0
    %2019 = vmatpush1.msra.mxu0 0.0
    %2020 = vmatprep.subr.mxu0 0.0
    %2021 = vmatpush1.msra.mxu0 0.0
    %2022 = vmatprep.mubr.f32.mxu0 0.0
    %2023 = vmatmul.mubr.f32.gmra.mrb[0].mxu0 %v1953
    %v2024 = vpop.f32.mrb[0].mxu0
    %v2025 = vadd.f32 0.0, %v2024
    %v2026 = vpop.f32.mrb[0].mxu0
    %2027 = vmatprep.mubr.f32.mxu0 0.0
    %2028 = vmatmul.mubr.f32.gmra.mrb[0].mxu0 %v1956
    %v2029 = vpop.f32.mrb[0].mxu0
    %v2030 = vadd.f32 0.0, %v2029
    %v2031 = vpop.f32.mrb[0].mxu0
    %2032 = vdwg.mxu0
    %v2033 = vmul.f32 %v2025, 0.35355338
    %v2034 = vmul.f32 %v2030, 0.35355338
    %v2035 = vadd.f32 %v2033, %v69
    %v2036 = vadd.f32 %v2034, %v70
    %v2037 = vsel %vm488, %v2035, -inf
    %2038 = vmax.xlane.f32.xlu0 %v2037
    %v2039 = vpop.xlane.xlu0 %2038
    %v2040 = vsel %vm488, %v2036, -inf
    %2041 = vmax.xlane.f32.xlu0 %v2040
    %v2042 = vpop.xlane.xlu0 %2041
    %v2043 = vsub.f32 %v2035, %v2039
    %v2044 = vsub.f32 %v2036, %v2042
    %v2045 = vmul.f32 %v2043, 1.442695
    %v2046 = vpow.pop %v2045
    %v2047 = vmul.f32 %v2044, 1.442695
    %v2048 = vpow.pop %v2047
    %v2049 = vsel %vm488, %v2046, 0.0
    %2050 = vadd.xlane.f32.xlu0 %v2049
    %v2051 = vpop.xlane.xlu0 %2050
    %v2052 = vsel %vm488, %v2048, 0.0
    %2053 = vadd.xlane.f32.xlu0 %v2052
    %v2054 = vpop.xlane.xlu0 %2053
    %v2055 = vrcp.pop %v2051
    %v2056 = vrcp.pop %v2054
    %v2057 = vmul.f32 %v2046, %v2055
    %v2058 = vmul.f32 %v2048, %v2056
    %v2060 = vsel %vm488, %v1902, 0
    %v2063 = vsel %vm488, %v2057, 0
    %v2066 = vsel %vm488, %v2058, 0
    %2068 = vmatprep.subr.mxu0 0.0
    %2069 = vmatpush1.xpose.msra.mxu0 %v2063
    %2070 = vmatprep.subr.mxu0 0.0
    %2071 = vmatpush1.xpose.msra.mxu0 %v2066
    %2072 = vmatprep.subr.mxu0 0.0
    %2073 = vmatpush1.xpose.msra.mxu0 0.0
    %2074 = vmatprep.subr.mxu0 0.0
    %2075 = vmatpush1.xpose.msra.mxu0 0.0
    %2076 = vmatprep.subr.mxu0 0.0
    %2077 = vmatpush1.xpose.msra.mxu0 0.0
    %2078 = vmatprep.subr.mxu0 0.0
    %2079 = vmatpush1.xpose.msra.mxu0 0.0
    %2080 = vmatprep.subr.mxu0 0.0
    %2081 = vmatpush1.xpose.msra.mxu0 0.0
    %2082 = vmatprep.subr.mxu0 0.0
    %2083 = vmatpush1.xpose.msra.mxu0 0.0
    %2084 = vmatprep.subr.mxu0 0.0
    %2085 = vmatpush1.xpose.msra.mxu0 0.0
    %2086 = vmatprep.subr.mxu0 0.0
    %2087 = vmatpush1.xpose.msra.mxu0 0.0
    %2088 = vmatprep.subr.mxu0 0.0
    %2089 = vmatpush1.xpose.msra.mxu0 0.0
    %2090 = vmatprep.subr.mxu0 0.0
    %2091 = vmatpush1.xpose.msra.mxu0 0.0
    %2092 = vmatprep.subr.mxu0 0.0
    %2093 = vmatpush1.xpose.msra.mxu0 0.0
    %2094 = vmatprep.subr.mxu0 0.0
    %2095 = vmatpush1.xpose.msra.mxu0 0.0
    %2096 = vmatprep.subr.mxu0 0.0
    %2097 = vmatpush1.xpose.msra.mxu0 0.0
    %2098 = vmatprep.subr.mxu0 0.0
    %2099 = vmatpush1.xpose.msra.mxu0 0.0
    %2100 = vmatprep.subr.mxu0 0.0
    %2101 = vmatpush1.xpose.msra.mxu0 0.0
    %2102 = vmatprep.subr.mxu0 0.0
    %2103 = vmatpush1.xpose.msra.mxu0 0.0
    %2104 = vmatprep.subr.mxu0 0.0
    %2105 = vmatpush1.xpose.msra.mxu0 0.0
    %2106 = vmatprep.subr.mxu0 0.0
    %2107 = vmatpush1.xpose.msra.mxu0 0.0
    %2108 = vmatprep.subr.mxu0 0.0
    %2109 = vmatpush1.xpose.msra.mxu0 0.0
    %2110 = vmatprep.subr.mxu0 0.0
    %2111 = vmatpush1.xpose.msra.mxu0 0.0
    %2112 = vmatprep.subr.mxu0 0.0
    %2113 = vmatpush1.xpose.msra.mxu0 0.0
    %2114 = vmatprep.subr.mxu0 0.0
    %2115 = vmatpush1.xpose.msra.mxu0 0.0
    %2116 = vmatprep.subr.mxu0 0.0
    %2117 = vmatpush1.xpose.msra.mxu0 0.0
    %2118 = vmatprep.subr.mxu0 0.0
    %2119 = vmatpush1.xpose.msra.mxu0 0.0
    %2120 = vmatprep.subr.mxu0 0.0
    %2121 = vmatpush1.xpose.msra.mxu0 0.0
    %2122 = vmatprep.subr.mxu0 0.0
    %2123 = vmatpush1.xpose.msra.mxu0 0.0
    %2124 = vmatprep.subr.mxu0 0.0
    %2125 = vmatpush1.xpose.msra.mxu0 0.0
    %2126 = vmatprep.subr.mxu0 0.0
    %2127 = vmatpush1.xpose.msra.mxu0 0.0
    %2128 = vmatprep.subr.mxu0 0.0
    %2129 = vmatpush1.xpose.msra.mxu0 0.0
    %2130 = vmatprep.subr.mxu0 0.0
    %2131 = vmatpush1.xpose.msra.mxu0 0.0
    %2132 = vmatprep.mubr.f32.mxu0 0.0
    %2133 = vmatmul.mubr.f32.gmra.mrb[0].mxu0 %v2060
    %v2134 = vpop.f32.mrb[0].mxu0
    %v2135 = vadd.f32 0.0, %v2134
    %v2136 = vpop.f32.mrb[0].mxu0
    %2137 = vdwg.mxu0
    %2138 = vxpose.xlu0.b32.start [1/16] %v1867, 128
    %2139 = vxpose.xlu0.b32.cont [2/16] 0.0, 128
    %2140 = vxpose.xlu0.b32.cont [3/16] 0.0, 128
    %2141 = vxpose.xlu0.b32.cont [4/16] 0.0, 128
    %2142 = vxpose.xlu0.b32.cont [5/16] 0.0, 128
    %2143 = vxpose.xlu0.b32.cont [6/16] 0.0, 128
    %2144 = vxpose.xlu0.b32.cont [7/16] 0.0, 128
    %2145 = vxpose.xlu0.b32.cont [8/16] 0.0, 128
    %2146 = vxpose.xlu0.b32.cont [9/16] 0.0, 128
    %2147 = vxpose.xlu0.b32.cont [10/16] 0.0, 128
    %2148 = vxpose.xlu0.b32.cont [11/16] 0.0, 128
    %2149 = vxpose.xlu0.b32.cont [12/16] 0.0, 128
    %2150 = vxpose.xlu0.b32.cont [13/16] 0.0, 128
    %2151 = vxpose.xlu0.b32.cont [14/16] 0.0, 128
    %2152 = vxpose.xlu0.b32.cont [15/16] 0.0, 128
    %2153 = vxpose.xlu0.b32.end [16/16] 0.0, 128
    %v2154 = vpop.trf.xlu0
    %v2155 = vpop.trf.xlu0
    %v2156 = vpop.trf.xlu0
    %v2157 = vpop.trf.xlu0
    %v2158 = vpop.trf.xlu0
    %v2159 = vpop.trf.xlu0
    %v2160 = vpop.trf.xlu0
    %v2161 = vpop.trf.xlu0
    %v2162 = vpop.trf.xlu0
    %v2163 = vpop.trf.xlu0
    %v2164 = vpop.trf.xlu0
    %v2165 = vpop.trf.xlu0
    %v2166 = vpop.trf.xlu0
    %v2167 = vpop.trf.xlu0
    %v2168 = vpop.trf.xlu0
    %v2169 = vpop.trf.xlu0
    %v2171 = vsel %vm402, %v2154, 0
    %v2174 = vsel %vm402, %v2155, 0
    %2176 = vmatprep.subr.mxu0 0.0
    %2177 = vmatpush1.msra.mxu0 %v1887
    %2178 = vmatprep.subr.mxu0 0.0
    %2179 = vmatpush1.msra.mxu0 0.0
    %2180 = vmatprep.subr.mxu0 0.0
    %2181 = vmatpush1.msra.mxu0 0.0
    %2182 = vmatprep.subr.mxu0 0.0
    %2183 = vmatpush1.msra.mxu0 0.0
    %2184 = vmatprep.subr.mxu0 0.0
    %2185 = vmatpush1.msra.mxu0 0.0
    %2186 = vmatprep.subr.mxu0 0.0
    %2187 = vmatpush1.msra.mxu0 0.0
    %2188 = vmatprep.subr.mxu0 0.0
    %2189 = vmatpush1.msra.mxu0 0.0
    %2190 = vmatprep.subr.mxu0 0.0
    %2191 = vmatpush1.msra.mxu0 0.0
    %2192 = vmatprep.subr.mxu0 0.0
    %2193 = vmatpush1.msra.mxu0 0.0
    %2194 = vmatprep.subr.mxu0 0.0
    %2195 = vmatpush1.msra.mxu0 0.0
    %2196 = vmatprep.subr.mxu0 0.0
    %2197 = vmatpush1.msra.mxu0 0.0
    %2198 = vmatprep.subr.mxu0 0.0
    %2199 = vmatpush1.msra.mxu0 0.0
    %2200 = vmatprep.subr.mxu0 0.0
    %2201 = vmatpush1.msra.mxu0 0.0
    %2202 = vmatprep.subr.mxu0 0.0
    %2203 = vmatpush1.msra.mxu0 0.0
    %2204 = vmatprep.subr.mxu0 0.0
    %2205 = vmatpush1.msra.mxu0 0.0
    %2206 = vmatprep.subr.mxu0 0.0
    %2207 = vmatpush1.msra.mxu0 0.0
    %2208 = vmatprep.subr.mxu0 0.0
    %2209 = vmatpush1.msra.mxu0 0.0
    %2210 = vmatprep.subr.mxu0 0.0
    %2211 = vmatpush1.msra.mxu0 0.0
    %2212 = vmatprep.subr.mxu0 0.0
    %2213 = vmatpush1.msra.mxu0 0.0
    %2214 = vmatprep.subr.mxu0 0.0
    %2215 = vmatpush1.msra.mxu0 0.0
    %2216 = vmatprep.subr.mxu0 0.0
    %2217 = vmatpush1.msra.mxu0 0.0
    %2218 = vmatprep.subr.mxu0 0.0
    %2219 = vmatpush1.msra.mxu0 0.0
    %2220 = vmatprep.subr.mxu0 0.0
    %2221 = vmatpush1.msra.mxu0 0.0
    %2222 = vmatprep.subr.mxu0 0.0
    %2223 = vmatpush1.msra.mxu0 0.0
    %2224 = vmatprep.subr.mxu0 0.0
    %2225 = vmatpush1.msra.mxu0 0.0
    %2226 = vmatprep.subr.mxu0 0.0
    %2227 = vmatpush1.msra.mxu0 0.0
    %2228 = vmatprep.subr.mxu0 0.0
    %2229 = vmatpush1.msra.mxu0 0.0
    %2230 = vmatprep.subr.mxu0 0.0
    %2231 = vmatpush1.msra.mxu0 0.0
    %2232 = vmatprep.subr.mxu0 0.0
    %2233 = vmatpush1.msra.mxu0 0.0
    %2234 = vmatprep.subr.mxu0 0.0
    %2235 = vmatpush1.msra.mxu0 0.0
    %2236 = vmatprep.subr.mxu0 0.0
    %2237 = vmatpush1.msra.mxu0 0.0
    %2238 = vmatprep.subr.mxu0 0.0
    %2239 = vmatpush1.msra.mxu0 0.0
    %2240 = vmatprep.mubr.f32.mxu0 0.0
    %2241 = vmatmul.mubr.f32.gmra.mrb[0].mxu0 %v2171
    %v2242 = vpop.f32.mrb[0].mxu0
    %v2243 = vadd.f32 0.0, %v2242
    %v2244 = vpop.f32.mrb[0].mxu0
    %2245 = vmatprep.mubr.f32.mxu0 0.0
    %2246 = vmatmul.mubr.f32.gmra.mrb[0].mxu0 %v2174
    %v2247 = vpop.f32.mrb[0].mxu0
    %v2248 = vadd.f32 0.0, %v2247
    %v2249 = vpop.f32.mrb[0].mxu0
    %2250 = vdwg.mxu0
    %v2251 = vmul.f32 %v2243, 0.35355338
    %v2252 = vmul.f32 %v2248, 0.35355338
    %v2253 = vadd.f32 %v2251, %v69
    %v2254 = vadd.f32 %v2252, %v70
    %v2255 = vsel %vm488, %v2253, -inf
    %2256 = vmax.xlane.f32.xlu0 %v2255
    %v2257 = vpop.xlane.xlu0 %2256
    %v2258 = vsel %vm488, %v2254, -inf
    %2259 = vmax.xlane.f32.xlu0 %v2258
    %v2260 = vpop.xlane.xlu0 %2259
    %v2261 = vsub.f32 %v2253, %v2257
    %v2262 = vsub.f32 %v2254, %v2260
    %v2263 = vmul.f32 %v2261, 1.442695
    %v2264 = vpow.pop %v2263
    %v2265 = vmul.f32 %v2262, 1.442695
    %v2266 = vpow.pop %v2265
    %v2267 = vsel %vm488, %v2264, 0.0
    %2268 = vadd.xlane.f32.xlu0 %v2267
    %v2269 = vpop.xlane.xlu0 %2268
    %v2270 = vsel %vm488, %v2266, 0.0
    %2271 = vadd.xlane.f32.xlu0 %v2270
    %v2272 = vpop.xlane.xlu0 %2271
    %v2273 = vrcp.pop %v2269
    %v2274 = vrcp.pop %v2272
    %v2275 = vmul.f32 %v2264, %v2273
    %v2276 = vmul.f32 %v2266, %v2274
    %v2278 = vsel %vm488, %v1907, 0
    %v2281 = vsel %vm488, %v2275, 0
    %v2284 = vsel %vm488, %v2276, 0
    %2286 = vmatprep.subr.mxu0 0.0
    %2287 = vmatpush1.xpose.msra.mxu0 %v2281
    %2288 = vmatprep.subr.mxu0 0.0
    %2289 = vmatpush1.xpose.msra.mxu0 %v2284
    %2290 = vmatprep.subr.mxu0 0.0
    %2291 = vmatpush1.xpose.msra.mxu0 0.0
    %2292 = vmatprep.subr.mxu0 0.0
    %2293 = vmatpush1.xpose.msra.mxu0 0.0
    %2294 = vmatprep.subr.mxu0 0.0
    %2295 = vmatpush1.xpose.msra.mxu0 0.0
    %2296 = vmatprep.subr.mxu0 0.0
    %2297 = vmatpush1.xpose.msra.mxu0 0.0
    %2298 = vmatprep.subr.mxu0 0.0
    %2299 = vmatpush1.xpose.msra.mxu0 0.0
    %2300 = vmatprep.subr.mxu0 0.0
    %2301 = vmatpush1.xpose.msra.mxu0 0.0
    %2302 = vmatprep.subr.mxu0 0.0
    %2303 = vmatpush1.xpose.msra.mxu0 0.0
    %2304 = vmatprep.subr.mxu0 0.0
    %2305 = vmatpush1.xpose.msra.mxu0 0.0
    %2306 = vmatprep.subr.mxu0 0.0
    %2307 = vmatpush1.xpose.msra.mxu0 0.0
    %2308 = vmatprep.subr.mxu0 0.0
    %2309 = vmatpush1.xpose.msra.mxu0 0.0
    %2310 = vmatprep.subr.mxu0 0.0
    %2311 = vmatpush1.xpose.msra.mxu0 0.0
    %2312 = vmatprep.subr.mxu0 0.0
    %2313 = vmatpush1.xpose.msra.mxu0 0.0
    %2314 = vmatprep.subr.mxu0 0.0
    %2315 = vmatpush1.xpose.msra.mxu0 0.0
    %2316 = vmatprep.subr.mxu0 0.0
    %2317 = vmatpush1.xpose.msra.mxu0 0.0
    %2318 = vmatprep.subr.mxu0 0.0
    %2319 = vmatpush1.xpose.msra.mxu0 0.0
    %2320 = vmatprep.subr.mxu0 0.0
    %2321 = vmatpush1.xpose.msra.mxu0 0.0
    %2322 = vmatprep.subr.mxu0 0.0
    %2323 = vmatpush1.xpose.msra.mxu0 0.0
    %2324 = vmatprep.subr.mxu0 0.0
    %2325 = vmatpush1.xpose.msra.mxu0 0.0
    %2326 = vmatprep.subr.mxu0 0.0
    %2327 = vmatpush1.xpose.msra.mxu0 0.0
    %2328 = vmatprep.subr.mxu0 0.0
    %2329 = vmatpush1.xpose.msra.mxu0 0.0
    %2330 = vmatprep.subr.mxu0 0.0
    %2331 = vmatpush1.xpose.msra.mxu0 0.0
    %2332 = vmatprep.subr.mxu0 0.0
    %2333 = vmatpush1.xpose.msra.mxu0 0.0
    %2334 = vmatprep.subr.mxu0 0.0
    %2335 = vmatpush1.xpose.msra.mxu0 0.0
    %2336 = vmatprep.subr.mxu0 0.0
    %2337 = vmatpush1.xpose.msra.mxu0 0.0
    %2338 = vmatprep.subr.mxu0 0.0
    %2339 = vmatpush1.xpose.msra.mxu0 0.0
    %2340 = vmatprep.subr.mxu0 0.0
    %2341 = vmatpush1.xpose.msra.mxu0 0.0
    %2342 = vmatprep.subr.mxu0 0.0
    %2343 = vmatpush1.xpose.msra.mxu0 0.0
    %2344 = vmatprep.subr.mxu0 0.0
    %2345 = vmatpush1.xpose.msra.mxu0 0.0
    %2346 = vmatprep.subr.mxu0 0.0
    %2347 = vmatpush1.xpose.msra.mxu0 0.0
    %2348 = vmatprep.subr.mxu0 0.0
    %2349 = vmatpush1.xpose.msra.mxu0 0.0
    %2350 = vmatprep.mubr.f32.mxu0 0.0
    %2351 = vmatmul.mubr.f32.gmra.mrb[0].mxu0 %v2278
    %v2352 = vpop.f32.mrb[0].mxu0
    %v2353 = vadd.f32 0.0, %v2352
    %v2354 = vpop.f32.mrb[0].mxu0
    %2355 = vdwg.mxu0
    %2356 = vxpose.xlu0.b32.start [1/16] %v1872, 128
    %2357 = vxpose.xlu0.b32.cont [2/16] 0.0, 128
    %2358 = vxpose.xlu0.b32.cont [3/16] 0.0, 128
    %2359 = vxpose.xlu0.b32.cont [4/16] 0.0, 128
    %2360 = vxpose.xlu0.b32.cont [5/16] 0.0, 128
    %2361 = vxpose.xlu0.b32.cont [6/16] 0.0, 128
    %2362 = vxpose.xlu0.b32.cont [7/16] 0.0, 128
    %2363 = vxpose.xlu0.b32.cont [8/16] 0.0, 128
    %2364 = vxpose.xlu0.b32.cont [9/16] 0.0, 128
    %2365 = vxpose.xlu0.b32.cont [10/16] 0.0, 128
    %2366 = vxpose.xlu0.b32.cont [11/16] 0.0, 128
    %2367 = vxpose.xlu0.b32.cont [12/16] 0.0, 128
    %2368 = vxpose.xlu0.b32.cont [13/16] 0.0, 128
    %2369 = vxpose.xlu0.b32.cont [14/16] 0.0, 128
    %2370 = vxpose.xlu0.b32.cont [15/16] 0.0, 128
    %2371 = vxpose.xlu0.b32.end [16/16] 0.0, 128
    %v2372 = vpop.trf.xlu0
    %v2373 = vpop.trf.xlu0
    %v2374 = vpop.trf.xlu0
    %v2375 = vpop.trf.xlu0
    %v2376 = vpop.trf.xlu0
    %v2377 = vpop.trf.xlu0
    %v2378 = vpop.trf.xlu0
    %v2379 = vpop.trf.xlu0
    %v2380 = vpop.trf.xlu0
    %v2381 = vpop.trf.xlu0
    %v2382 = vpop.trf.xlu0
    %v2383 = vpop.trf.xlu0
    %v2384 = vpop.trf.xlu0
    %v2385 = vpop.trf.xlu0
    %v2386 = vpop.trf.xlu0
    %v2387 = vpop.trf.xlu0
    %v2389 = vsel %vm402, %v2372, 0
    %v2392 = vsel %vm402, %v2373, 0
    %2394 = vmatprep.subr.mxu0 0.0
    %2395 = vmatpush1.msra.mxu0 %v1892
    %2396 = vmatprep.subr.mxu0 0.0
    %2397 = vmatpush1.msra.mxu0 0.0
    %2398 = vmatprep.subr.mxu0 0.0
    %2399 = vmatpush1.msra.mxu0 0.0
    %2400 = vmatprep.subr.mxu0 0.0
    %2401 = vmatpush1.msra.mxu0 0.0
    %2402 = vmatprep.subr.mxu0 0.0
    %2403 = vmatpush1.msra.mxu0 0.0
    %2404 = vmatprep.subr.mxu0 0.0
    %2405 = vmatpush1.msra.mxu0 0.0
    %2406 = vmatprep.subr.mxu0 0.0
    %2407 = vmatpush1.msra.mxu0 0.0
    %2408 = vmatprep.subr.mxu0 0.0
    %2409 = vmatpush1.msra.mxu0 0.0
    %2410 = vmatprep.subr.mxu0 0.0
    %2411 = vmatpush1.msra.mxu0 0.0
    %2412 = vmatprep.subr.mxu0 0.0
    %2413 = vmatpush1.msra.mxu0 0.0
    %2414 = vmatprep.subr.mxu0 0.0
    %2415 = vmatpush1.msra.mxu0 0.0
    %2416 = vmatprep.subr.mxu0 0.0
    %2417 = vmatpush1.msra.mxu0 0.0
    %2418 = vmatprep.subr.mxu0 0.0
    %2419 = vmatpush1.msra.mxu0 0.0
    %2420 = vmatprep.subr.mxu0 0.0
    %2421 = vmatpush1.msra.mxu0 0.0
    %2422 = vmatprep.subr.mxu0 0.0
    %2423 = vmatpush1.msra.mxu0 0.0
    %2424 = vmatprep.subr.mxu0 0.0
    %2425 = vmatpush1.msra.mxu0 0.0
    %2426 = vmatprep.subr.mxu0 0.0
    %2427 = vmatpush1.msra.mxu0 0.0
    %2428 = vmatprep.subr.mxu0 0.0
    %2429 = vmatpush1.msra.mxu0 0.0
    %2430 = vmatprep.subr.mxu0 0.0
    %2431 = vmatpush1.msra.mxu0 0.0
    %2432 = vmatprep.subr.mxu0 0.0
    %2433 = vmatpush1.msra.mxu0 0.0
    %2434 = vmatprep.subr.mxu0 0.0
    %2435 = vmatpush1.msra.mxu0 0.0
    %2436 = vmatprep.subr.mxu0 0.0
    %2437 = vmatpush1.msra.mxu0 0.0
    %2438 = vmatprep.subr.mxu0 0.0
    %2439 = vmatpush1.msra.mxu0 0.0
    %2440 = vmatprep.subr.mxu0 0.0
    %2441 = vmatpush1.msra.mxu0 0.0
    %2442 = vmatprep.subr.mxu0 0.0
    %2443 = vmatpush1.msra.mxu0 0.0
    %2444 = vmatprep.subr.mxu0 0.0
    %2445 = vmatpush1.msra.mxu0 0.0
    %2446 = vmatprep.subr.mxu0 0.0
    %2447 = vmatpush1.msra.mxu0 0.0
    %2448 = vmatprep.subr.mxu0 0.0
    %2449 = vmatpush1.msra.mxu0 0.0
    %2450 = vmatprep.subr.mxu0 0.0
    %2451 = vmatpush1.msra.mxu0 0.0
    %2452 = vmatprep.subr.mxu0 0.0
    %2453 = vmatpush1.msra.mxu0 0.0
    %2454 = vmatprep.subr.mxu0 0.0
    %2455 = vmatpush1.msra.mxu0 0.0
    %2456 = vmatprep.subr.mxu0 0.0
    %2457 = vmatpush1.msra.mxu0 0.0
    %2458 = vmatprep.mubr.f32.mxu0 0.0
    %2459 = vmatmul.mubr.f32.gmra.mrb[0].mxu0 %v2389
    %v2460 = vpop.f32.mrb[0].mxu0
    %v2461 = vadd.f32 0.0, %v2460
    %v2462 = vpop.f32.mrb[0].mxu0
    %2463 = vmatprep.mubr.f32.mxu0 0.0
    %2464 = vmatmul.mubr.f32.gmra.mrb[0].mxu0 %v2392
    %v2465 = vpop.f32.mrb[0].mxu0
    %v2466 = vadd.f32 0.0, %v2465
    %v2467 = vpop.f32.mrb[0].mxu0
    %2468 = vdwg.mxu0
    %v2469 = vmul.f32 %v2461, 0.35355338
    %v2470 = vmul.f32 %v2466, 0.35355338
    %v2471 = vadd.f32 %v2469, %v69
    %v2472 = vadd.f32 %v2470, %v70
    %v2473 = vsel %vm488, %v2471, -inf
    %2474 = vmax.xlane.f32.xlu0 %v2473
    %v2475 = vpop.xlane.xlu0 %2474
    %v2476 = vsel %vm488, %v2472, -inf
    %2477 = vmax.xlane.f32.xlu0 %v2476
    %v2478 = vpop.xlane.xlu0 %2477
    %v2479 = vsub.f32 %v2471, %v2475
    %v2480 = vsub.f32 %v2472, %v2478
    %v2481 = vmul.f32 %v2479, 1.442695
    %v2482 = vpow.pop %v2481
    %v2483 = vmul.f32 %v2480, 1.442695
    %v2484 = vpow.pop %v2483
    %v2485 = vsel %vm488, %v2482, 0.0
    %2486 = vadd.xlane.f32.xlu0 %v2485
    %v2487 = vpop.xlane.xlu0 %2486
    %v2488 = vsel %vm488, %v2484, 0.0
    %2489 = vadd.xlane.f32.xlu0 %v2488
    %v2490 = vpop.xlane.xlu0 %2489
    %v2491 = vrcp.pop %v2487
    %v2492 = vrcp.pop %v2490
    %v2493 = vmul.f32 %v2482, %v2491
    %v2494 = vmul.f32 %v2484, %v2492
    %v2496 = vsel %vm488, %v1912, 0
    %v2499 = vsel %vm488, %v2493, 0
    %v2502 = vsel %vm488, %v2494, 0
    %2504 = vmatprep.subr.mxu0 0.0
    %2505 = vmatpush1.xpose.msra.mxu0 %v2499
    %2506 = vmatprep.subr.mxu0 0.0
    %2507 = vmatpush1.xpose.msra.mxu0 %v2502
    %2508 = vmatprep.subr.mxu0 0.0
    %2509 = vmatpush1.xpose.msra.mxu0 0.0
    %2510 = vmatprep.subr.mxu0 0.0
    %2511 = vmatpush1.xpose.msra.mxu0 0.0
    %2512 = vmatprep.subr.mxu0 0.0
    %2513 = vmatpush1.xpose.msra.mxu0 0.0
    %2514 = vmatprep.subr.mxu0 0.0
    %2515 = vmatpush1.xpose.msra.mxu0 0.0
    %2516 = vmatprep.subr.mxu0 0.0
    %2517 = vmatpush1.xpose.msra.mxu0 0.0
    %2518 = vmatprep.subr.mxu0 0.0
    %2519 = vmatpush1.xpose.msra.mxu0 0.0
    %2520 = vmatprep.subr.mxu0 0.0
    %2521 = vmatpush1.xpose.msra.mxu0 0.0
    %2522 = vmatprep.subr.mxu0 0.0
    %2523 = vmatpush1.xpose.msra.mxu0 0.0
    %2524 = vmatprep.subr.mxu0 0.0
    %2525 = vmatpush1.xpose.msra.mxu0 0.0
    %2526 = vmatprep.subr.mxu0 0.0
    %2527 = vmatpush1.xpose.msra.mxu0 0.0
    %2528 = vmatprep.subr.mxu0 0.0
    %2529 = vmatpush1.xpose.msra.mxu0 0.0
    %2530 = vmatprep.subr.mxu0 0.0
    %2531 = vmatpush1.xpose.msra.mxu0 0.0
    %2532 = vmatprep.subr.mxu0 0.0
    %2533 = vmatpush1.xpose.msra.mxu0 0.0
    %2534 = vmatprep.subr.mxu0 0.0
    %2535 = vmatpush1.xpose.msra.mxu0 0.0
    %2536 = vmatprep.subr.mxu0 0.0
    %2537 = vmatpush1.xpose.msra.mxu0 0.0
    %2538 = vmatprep.subr.mxu0 0.0
    %2539 = vmatpush1.xpose.msra.mxu0 0.0
    %2540 = vmatprep.subr.mxu0 0.0
    %2541 = vmatpush1.xpose.msra.mxu0 0.0
    %2542 = vmatprep.subr.mxu0 0.0
    %2543 = vmatpush1.xpose.msra.mxu0 0.0
    %2544 = vmatprep.subr.mxu0 0.0
    %2545 = vmatpush1.xpose.msra.mxu0 0.0
    %2546 = vmatprep.subr.mxu0 0.0
    %2547 = vmatpush1.xpose.msra.mxu0 0.0
    %2548 = vmatprep.subr.mxu0 0.0
    %2549 = vmatpush1.xpose.msra.mxu0 0.0
    %2550 = vmatprep.subr.mxu0 0.0
    %2551 = vmatpush1.xpose.msra.mxu0 0.0
    %2552 = vmatprep.subr.mxu0 0.0
    %2553 = vmatpush1.xpose.msra.mxu0 0.0
    %2554 = vmatprep.subr.mxu0 0.0
    %2555 = vmatpush1.xpose.msra.mxu0 0.0
    %2556 = vmatprep.subr.mxu0 0.0
    %2557 = vmatpush1.xpose.msra.mxu0 0.0
    %2558 = vmatprep.subr.mxu0 0.0
    %2559 = vmatpush1.xpose.msra.mxu0 0.0
    %2560 = vmatprep.subr.mxu0 0.0
    %2561 = vmatpush1.xpose.msra.mxu0 0.0
    %2562 = vmatprep.subr.mxu0 0.0
    %2563 = vmatpush1.xpose.msra.mxu0 0.0
    %2564 = vmatprep.subr.mxu0 0.0
    %2565 = vmatpush1.xpose.msra.mxu0 0.0
    %2566 = vmatprep.subr.mxu0 0.0
    %2567 = vmatpush1.xpose.msra.mxu0 0.0
    %2568 = vmatprep.mubr.f32.mxu0 0.0
    %2569 = vmatmul.mubr.f32.gmra.mrb[0].mxu0 %v2496
    %v2570 = vpop.f32.mrb[0].mxu0
    %v2571 = vadd.f32 0.0, %v2570
    %v2572 = vpop.f32.mrb[0].mxu0
    %2573 = vdwg.mxu0
    %2574 = vxpose.xlu0.b32.start [1/16] %v1877, 128
    %2575 = vxpose.xlu0.b32.cont [2/16] 0.0, 128
    %2576 = vxpose.xlu0.b32.cont [3/16] 0.0, 128
    %2577 = vxpose.xlu0.b32.cont [4/16] 0.0, 128
    %2578 = vxpose.xlu0.b32.cont [5/16] 0.0, 128
    %2579 = vxpose.xlu0.b32.cont [6/16] 0.0, 128
    %2580 = vxpose.xlu0.b32.cont [7/16] 0.0, 128
    %2581 = vxpose.xlu0.b32.cont [8/16] 0.0, 128
    %2582 = vxpose.xlu0.b32.cont [9/16] 0.0, 128
    %2583 = vxpose.xlu0.b32.cont [10/16] 0.0, 128
    %2584 = vxpose.xlu0.b32.cont [11/16] 0.0, 128
    %2585 = vxpose.xlu0.b32.cont [12/16] 0.0, 128
    %2586 = vxpose.xlu0.b32.cont [13/16] 0.0, 128
    %2587 = vxpose.xlu0.b32.cont [14/16] 0.0, 128
    %2588 = vxpose.xlu0.b32.cont [15/16] 0.0, 128
    %2589 = vxpose.xlu0.b32.end [16/16] 0.0, 128
    %v2590 = vpop.trf.xlu0
    %v2591 = vpop.trf.xlu0
    %v2592 = vpop.trf.xlu0
    %v2593 = vpop.trf.xlu0
    %v2594 = vpop.trf.xlu0
    %v2595 = vpop.trf.xlu0
    %v2596 = vpop.trf.xlu0
    %v2597 = vpop.trf.xlu0
    %v2598 = vpop.trf.xlu0
    %v2599 = vpop.trf.xlu0
    %v2600 = vpop.trf.xlu0
    %v2601 = vpop.trf.xlu0
    %v2602 = vpop.trf.xlu0
    %v2603 = vpop.trf.xlu0
    %v2604 = vpop.trf.xlu0
    %v2605 = vpop.trf.xlu0
    %v2607 = vsel %vm402, %v2590, 0
    %v2610 = vsel %vm402, %v2591, 0
    %2612 = vmatprep.subr.mxu0 0.0
    %2613 = vmatpush1.msra.mxu0 %v1897
    %2614 = vmatprep.subr.mxu0 0.0
    %2615 = vmatpush1.msra.mxu0 0.0
    %2616 = vmatprep.subr.mxu0 0.0
    %2617 = vmatpush1.msra.mxu0 0.0
    %2618 = vmatprep.subr.mxu0 0.0
    %2619 = vmatpush1.msra.mxu0 0.0
    %2620 = vmatprep.subr.mxu0 0.0
    %2621 = vmatpush1.msra.mxu0 0.0
    %2622 = vmatprep.subr.mxu0 0.0
    %2623 = vmatpush1.msra.mxu0 0.0
    %2624 = vmatprep.subr.mxu0 0.0
    %2625 = vmatpush1.msra.mxu0 0.0
    %2626 = vmatprep.subr.mxu0 0.0
    %2627 = vmatpush1.msra.mxu0 0.0
    %2628 = vmatprep.subr.mxu0 0.0
    %2629 = vmatpush1.msra.mxu0 0.0
    %2630 = vmatprep.subr.mxu0 0.0
    %2631 = vmatpush1.msra.mxu0 0.0
    %2632 = vmatprep.subr.mxu0 0.0
    %2633 = vmatpush1.msra.mxu0 0.0
    %2634 = vmatprep.subr.mxu0 0.0
    %2635 = vmatpush1.msra.mxu0 0.0
    %2636 = vmatprep.subr.mxu0 0.0
    %2637 = vmatpush1.msra.mxu0 0.0
    %2638 = vmatprep.subr.mxu0 0.0
    %2639 = vmatpush1.msra.mxu0 0.0
    %2640 = vmatprep.subr.mxu0 0.0
    %2641 = vmatpush1.msra.mxu0 0.0
    %2642 = vmatprep.subr.mxu0 0.0
    %2643 = vmatpush1.msra.mxu0 0.0
    %2644 = vmatprep.subr.mxu0 0.0
    %2645 = vmatpush1.msra.mxu0 0.0
    %2646 = vmatprep.subr.mxu0 0.0
    %2647 = vmatpush1.msra.mxu0 0.0
    %2648 = vmatprep.subr.mxu0 0.0
    %2649 = vmatpush1.msra.mxu0 0.0
    %2650 = vmatprep.subr.mxu0 0.0
    %2651 = vmatpush1.msra.mxu0 0.0
    %2652 = vmatprep.subr.mxu0 0.0
    %2653 = vmatpush1.msra.mxu0 0.0
    %2654 = vmatprep.subr.mxu0 0.0
    %2655 = vmatpush1.msra.mxu0 0.0
    %2656 = vmatprep.subr.mxu0 0.0
    %2657 = vmatpush1.msra.mxu0 0.0
    %2658 = vmatprep.subr.mxu0 0.0
    %2659 = vmatpush1.msra.mxu0 0.0
    %2660 = vmatprep.subr.mxu0 0.0
    %2661 = vmatpush1.msra.mxu0 0.0
    %2662 = vmatprep.subr.mxu0 0.0
    %2663 = vmatpush1.msra.mxu0 0.0
    %2664 = vmatprep.subr.mxu0 0.0
    %2665 = vmatpush1.msra.mxu0 0.0
    %2666 = vmatprep.subr.mxu0 0.0
    %2667 = vmatpush1.msra.mxu0 0.0
    %2668 = vmatprep.subr.mxu0 0.0
    %2669 = vmatpush1.msra.mxu0 0.0
    %2670 = vmatprep.subr.mxu0 0.0
    %2671 = vmatpush1.msra.mxu0 0.0
    %2672 = vmatprep.subr.mxu0 0.0
    %2673 = vmatpush1.msra.mxu0 0.0
    %2674 = vmatprep.subr.mxu0 0.0
    %2675 = vmatpush1.msra.mxu0 0.0
    %2676 = vmatprep.mubr.f32.mxu0 0.0
    %2677 = vmatmul.mubr.f32.gmra.mrb[0].mxu0 %v2607
    %v2678 = vpop.f32.mrb[0].mxu0
    %v2679 = vadd.f32 0.0, %v2678
    %v2680 = vpop.f32.mrb[0].mxu0
    %2681 = vmatprep.mubr.f32.mxu0 0.0
    %2682 = vmatmul.mubr.f32.gmra.mrb[0].mxu0 %v2610
    %v2683 = vpop.f32.mrb[0].mxu0
    %v2684 = vadd.f32 0.0, %v2683
    %v2685 = vpop.f32.mrb[0].mxu0
    %2686 = vdwg.mxu0
    %v2687 = vmul.f32 %v2679, 0.35355338
    %v2688 = vmul.f32 %v2684, 0.35355338
    %v2689 = vadd.f32 %v2687, %v69
    %v2690 = vadd.f32 %v2688, %v70
    %v2691 = vsel %vm488, %v2689, -inf
    %2692 = vmax.xlane.f32.xlu0 %v2691
    %v2693 = vpop.xlane.xlu0 %2692
    %v2694 = vsel %vm488, %v2690, -inf
    %2695 = vmax.xlane.f32.xlu0 %v2694
    %v2696 = vpop.xlane.xlu0 %2695
    %v2697 = vsub.f32 %v2689, %v2693
    %v2698 = vsub.f32 %v2690, %v2696
    %v2699 = vmul.f32 %v2697, 1.442695
    %v2700 = vpow.pop %v2699
    %v2701 = vmul.f32 %v2698, 1.442695
    %v2702 = vpow.pop %v2701
    %v2703 = vsel %vm488, %v2700, 0.0
    %2704 = vadd.xlane.f32.xlu0 %v2703
    %v2705 = vpop.xlane.xlu0 %2704
    %v2706 = vsel %vm488, %v2702, 0.0
    %2707 = vadd.xlane.f32.xlu0 %v2706
    %v2708 = vpop.xlane.xlu0 %2707
    %v2709 = vrcp.pop %v2705
    %v2710 = vrcp.pop %v2708
    %v2711 = vmul.f32 %v2700, %v2709
    %v2712 = vmul.f32 %v2702, %v2710
    %v2714 = vsel %vm488, %v1917, 0
    %v2717 = vsel %vm488, %v2711, 0
    %v2720 = vsel %vm488, %v2712, 0
    %2722 = vmatprep.subr.mxu0 0.0
    %2723 = vmatpush1.xpose.msra.mxu0 %v2717
    %2724 = vmatprep.subr.mxu0 0.0
    %2725 = vmatpush1.xpose.msra.mxu0 %v2720
    %2726 = vmatprep.subr.mxu0 0.0
    %2727 = vmatpush1.xpose.msra.mxu0 0.0
    %2728 = vmatprep.subr.mxu0 0.0
    %2729 = vmatpush1.xpose.msra.mxu0 0.0
    %2730 = vmatprep.subr.mxu0 0.0
    %2731 = vmatpush1.xpose.msra.mxu0 0.0
    %2732 = vmatprep.subr.mxu0 0.0
    %2733 = vmatpush1.xpose.msra.mxu0 0.0
    %2734 = vmatprep.subr.mxu0 0.0
    %2735 = vmatpush1.xpose.msra.mxu0 0.0
    %2736 = vmatprep.subr.mxu0 0.0
    %2737 = vmatpush1.xpose.msra.mxu0 0.0
    %2738 = vmatprep.subr.mxu0 0.0
    %2739 = vmatpush1.xpose.msra.mxu0 0.0
    %2740 = vmatprep.subr.mxu0 0.0
    %2741 = vmatpush1.xpose.msra.mxu0 0.0
    %2742 = vmatprep.subr.mxu0 0.0
    %2743 = vmatpush1.xpose.msra.mxu0 0.0
    %2744 = vmatprep.subr.mxu0 0.0
    %2745 = vmatpush1.xpose.msra.mxu0 0.0
    %2746 = vmatprep.subr.mxu0 0.0
    %2747 = vmatpush1.xpose.msra.mxu0 0.0
    %2748 = vmatprep.subr.mxu0 0.0
    %2749 = vmatpush1.xpose.msra.mxu0 0.0
    %2750 = vmatprep.subr.mxu0 0.0
    %2751 = vmatpush1.xpose.msra.mxu0 0.0
    %2752 = vmatprep.subr.mxu0 0.0
    %2753 = vmatpush1.xpose.msra.mxu0 0.0
    %2754 = vmatprep.subr.mxu0 0.0
    %2755 = vmatpush1.xpose.msra.mxu0 0.0
    %2756 = vmatprep.subr.mxu0 0.0
    %2757 = vmatpush1.xpose.msra.mxu0 0.0
    %2758 = vmatprep.subr.mxu0 0.0
    %2759 = vmatpush1.xpose.msra.mxu0 0.0
    %2760 = vmatprep.subr.mxu0 0.0
    %2761 = vmatpush1.xpose.msra.mxu0 0.0
    %2762 = vmatprep.subr.mxu0 0.0
    %2763 = vmatpush1.xpose.msra.mxu0 0.0
    %2764 = vmatprep.subr.mxu0 0.0
    %2765 = vmatpush1.xpose.msra.mxu0 0.0
    %2766 = vmatprep.subr.mxu0 0.0
    %2767 = vmatpush1.xpose.msra.mxu0 0.0
    %2768 = vmatprep.subr.mxu0 0.0
    %2769 = vmatpush1.xpose.msra.mxu0 0.0
    %2770 = vmatprep.subr.mxu0 0.0
    %2771 = vmatpush1.xpose.msra.mxu0 0.0
    %2772 = vmatprep.subr.mxu0 0.0
    %2773 = vmatpush1.xpose.msra.mxu0 0.0
    %2774 = vmatprep.subr.mxu0 0.0
    %2775 = vmatpush1.xpose.msra.mxu0 0.0
    %2776 = vmatprep.subr.mxu0 0.0
    %2777 = vmatpush1.xpose.msra.mxu0 0.0
    %2778 = vmatprep.subr.mxu0 0.0
    %2779 = vmatpush1.xpose.msra.mxu0 0.0
    %2780 = vmatprep.subr.mxu0 0.0
    %2781 = vmatpush1.xpose.msra.mxu0 0.0
    %2782 = vmatprep.subr.mxu0 0.0
    %2783 = vmatpush1.xpose.msra.mxu0 0.0
    %2784 = vmatprep.subr.mxu0 0.0
    %2785 = vmatpush1.xpose.msra.mxu0 0.0
    %2786 = vmatprep.mubr.f32.mxu0 0.0
    %2787 = vmatmul.mubr.f32.gmra.mrb[0].mxu0 %v2714
    %v2788 = vpop.f32.mrb[0].mxu0
    %v2789 = vadd.f32 0.0, %v2788
    %v2790 = vpop.f32.mrb[0].mxu0
    %2791 = vdwg.mxu0
    %s2792 = scalar_lea.vmem %s6, 32
    %v2793 = vld [vmem:[%s2792] sm:$0xff]
    %v2794 = vld [vmem:[%s2792 + $0x8] sm:$0xff]
    %v2795 = vld [vmem:[%s2792 + $0x10] sm:$0xff]
    %v2796 = vld [vmem:[%s2792 + $0x18] sm:$0xff]
    %s2797 = scalar_lea.vmem %s7, 1
    %v2798 = vld [vmem:[%s2797] sm:$0x1]
    %v2800 = vlaneseq
    %v2801 = vshrl.u32 %v2800, 7
    %v2802 = vsub.s32 0, %v2801
    %v2803 = vrot.slane %v2798, %v2802
    %2805 = vxpose.xlu0.b32.start [1/16] %v2135, 128
    %2806 = vxpose.xlu0.b32.cont [2/16] %v2353, 128
    %2807 = vxpose.xlu0.b32.cont [3/16] %v2571, 128
    %2808 = vxpose.xlu0.b32.cont [4/16] %v2789, 128
    %2809 = vxpose.xlu0.b32.cont [5/16] 0.0, 128
    %2810 = vxpose.xlu0.b32.cont [6/16] 0.0, 128
    %2811 = vxpose.xlu0.b32.cont [7/16] 0.0, 128
    %2812 = vxpose.xlu0.b32.cont [8/16] 0.0, 128
    %2813 = vxpose.xlu0.b32.cont [9/16] 0.0, 128
    %2814 = vxpose.xlu0.b32.cont [10/16] 0.0, 128
    %2815 = vxpose.xlu0.b32.cont [11/16] 0.0, 128
    %2816 = vxpose.xlu0.b32.cont [12/16] 0.0, 128
    %2817 = vxpose.xlu0.b32.cont [13/16] 0.0, 128
    %2818 = vxpose.xlu0.b32.cont [14/16] 0.0, 128
    %2819 = vxpose.xlu0.b32.cont [15/16] 0.0, 128
    %2820 = vxpose.xlu0.b32.end [16/16] 0.0, 128
    %v2821 = vpop.trf.xlu0
    %v2822 = vpop.trf.xlu0
    %v2823 = vpop.trf.xlu0
    %v2824 = vpop.trf.xlu0
    %v2825 = vpop.trf.xlu0
    %v2826 = vpop.trf.xlu0
    %v2827 = vpop.trf.xlu0
    %v2828 = vpop.trf.xlu0
    %v2829 = vpop.trf.xlu0
    %v2830 = vpop.trf.xlu0
    %v2831 = vpop.trf.xlu0
    %v2832 = vpop.trf.xlu0
    %v2833 = vpop.trf.xlu0
    %v2834 = vpop.trf.xlu0
    %v2835 = vpop.trf.xlu0
    %v2836 = vpop.trf.xlu0
    %v2838 = vsel %vm75, %v2821, 0
    %v2841 = vsel %vm75, %v2822, 0
    %2843 = vmatprep.subr.mxu0 0.0
    %2844 = vmatpush1.msra.mxu0 %v2793
    %2845 = vmatprep.subr.mxu0 0.0
    %2846 = vmatpush1.msra.mxu0 %v2794
    %2847 = vmatprep.subr.mxu0 0.0
    %2848 = vmatpush1.msra.mxu0 %v2795
    %2849 = vmatprep.subr.mxu0 0.0
    %2850 = vmatpush1.msra.mxu0 %v2796
    %2851 = vmatprep.subr.mxu0 0.0
    %2852 = vmatpush1.msra.mxu0 0.0
    %2853 = vmatprep.subr.mxu0 0.0
    %2854 = vmatpush1.msra.mxu0 0.0
    %2855 = vmatprep.subr.mxu0 0.0
    %2856 = vmatpush1.msra.mxu0 0.0
    %2857 = vmatprep.subr.mxu0 0.0
    %2858 = vmatpush1.msra.mxu0 0.0
    %2859 = vmatprep.subr.mxu0 0.0
    %2860 = vmatpush1.msra.mxu0 0.0
    %2861 = vmatprep.subr.mxu0 0.0
    %2862 = vmatpush1.msra.mxu0 0.0
    %2863 = vmatprep.subr.mxu0 0.0
    %2864 = vmatpush1.msra.mxu0 0.0
    %2865 = vmatprep.subr.mxu0 0.0
    %2866 = vmatpush1.msra.mxu0 0.0
    %2867 = vmatprep.subr.mxu0 0.0
    %2868 = vmatpush1.msra.mxu0 0.0
    %2869 = vmatprep.subr.mxu0 0.0
    %2870 = vmatpush1.msra.mxu0 0.0
    %2871 = vmatprep.subr.mxu0 0.0
    %2872 = vmatpush1.msra.mxu0 0.0
    %2873 = vmatprep.subr.mxu0 0.0
    %2874 = vmatpush1.msra.mxu0 0.0
    %2875 = vmatprep.subr.mxu0 0.0
    %2876 = vmatpush1.msra.mxu0 0.0
    %2877 = vmatprep.subr.mxu0 0.0
    %2878 = vmatpush1.msra.mxu0 0.0
    %2879 = vmatprep.subr.mxu0 0.0
    %2880 = vmatpush1.msra.mxu0 0.0
    %2881 = vmatprep.subr.mxu0 0.0
    %2882 = vmatpush1.msra.mxu0 0.0
    %2883 = vmatprep.subr.mxu0 0.0
    %2884 = vmatpush1.msra.mxu0 0.0
    %2885 = vmatprep.subr.mxu0 0.0
    %2886 = vmatpush1.msra.mxu0 0.0
    %2887 = vmatprep.subr.mxu0 0.0
    %2888 = vmatpush1.msra.mxu0 0.0
    %2889 = vmatprep.subr.mxu0 0.0
    %2890 = vmatpush1.msra.mxu0 0.0
    %2891 = vmatprep.subr.mxu0 0.0
    %2892 = vmatpush1.msra.mxu0 0.0
    %2893 = vmatprep.subr.mxu0 0.0
    %2894 = vmatpush1.msra.mxu0 0.0
    %2895 = vmatprep.subr.mxu0 0.0
    %2896 = vmatpush1.msra.mxu0 0.0
    %2897 = vmatprep.subr.mxu0 0.0
    %2898 = vmatpush1.msra.mxu0 0.0
    %2899 = vmatprep.subr.mxu0 0.0
    %2900 = vmatpush1.msra.mxu0 0.0
    %2901 = vmatprep.subr.mxu0 0.0
    %2902 = vmatpush1.msra.mxu0 0.0
    %2903 = vmatprep.subr.mxu0 0.0
    %2904 = vmatpush1.msra.mxu0 0.0
    %2905 = vmatprep.subr.mxu0 0.0
    %2906 = vmatpush1.msra.mxu0 0.0
    %2907 = vmatprep.mubr.f32.mxu0 0.0
    %2908 = vmatmul.mubr.f32.gmra.mrb[0].mxu0 %v2838
    %v2909 = vpop.f32.mrb[0].mxu0
    %v2910 = vadd.f32 %v2803, %v2909
    %v2911 = vpop.f32.mrb[0].mxu0
    %2912 = vmatprep.mubr.f32.mxu0 0.0
    %2913 = vmatmul.mubr.f32.gmra.mrb[0].mxu0 %v2841
    %v2914 = vpop.f32.mrb[0].mxu0
    %v2915 = vadd.f32 %v2803, %v2914
    %v2916 = vpop.f32.mrb[0].mxu0
    %2917 = vdwg.mxu0
    %v2918 = vadd.f32 %v1665, %v2910
    %v2919 = vadd.f32 %v1666, %v2915
    %s2920 = scalar_lea.vmem %s8, 1
    %v2921 = vld [vmem:[%s2920] sm:$0x1]
    %s2922 = scalar_lea.vmem %s9, 1
    %v2923 = vld [vmem:[%s2922] sm:$0x1]
    %v2924 = vsel %vm75, %v2918, 0.0
    %2925 = vadd.xlane.f32.xlu0 %v2924
    %v2926 = vpop.xlane.xlu0 %2925
    %v2927 = vsel %vm75, %v2919, 0.0
    %2928 = vadd.xlane.f32.xlu0 %v2927
    %v2929 = vpop.xlane.xlu0 %2928
    %v2930 = vmul.f32 %v2926, %v82
    %v2931 = vmul.f32 %v2929, %v82
    %v2932 = vsub.f32 %v2918, %v2930
    %v2933 = vsub.f32 %v2919, %v2931
    %v2934 = vmul.f32 %v2932, %v2932
    %v2935 = vmul.f32 %v2933, %v2933
    %v2936 = vsel %vm75, %v2934, 0.0
    %2937 = vadd.xlane.f32.xlu0 %v2936
    %v2938 = vpop.xlane.xlu0 %2937
    %v2939 = vsel %vm75, %v2935, 0.0
    %2940 = vadd.xlane.f32.xlu0 %v2939
    %v2941 = vpop.xlane.xlu0 %2940
    %v2942 = vmul.f32 %v2938, %v82
    %v2943 = vmul.f32 %v2941, %v82
    %v2944 = vadd.f32 %v2942, 1e-12
    %v2945 = vadd.f32 %v2943, 1e-12
    %v2946 = vrsqrt.pop %v2944
    %v2947 = vrsqrt.pop %v2945
    %v2948 = vmul.f32 %v2932, %v2946
    %v2949 = vmul.f32 %v2933, %v2947
    %v2951 = vlaneseq
    %v2952 = vshrl.u32 %v2951, 7
    %v2953 = vsub.s32 0, %v2952
    %v2954 = vrot.slane %v2921, %v2953
    %v2956 = vmul.f32 %v2948, %v2954
    %v2957 = vmul.f32 %v2949, %v2954
    %v2959 = vlaneseq
    %v2960 = vshrl.u32 %v2959, 7
    %v2961 = vsub.s32 0, %v2960
    %v2962 = vrot.slane %v2923, %v2961
    %v2964 = vadd.f32 %v2956, %v2962
    %v2965 = vadd.f32 %v2957, %v2962
    %s2966 = scalar_lea.vmem %s10, 32
    %v2967 = vld [vmem:[%s2966] sm:$0xff]
    %v2968 = vld [vmem:[%s2966 + $0x8] sm:$0xff]
    %v2969 = vld [vmem:[%s2966 + $0x10] sm:$0xff]
    %v2970 = vld [vmem:[%s2966 + $0x18] sm:$0xff]
    %s2971 = scalar_lea.vmem %s11, 1
    %v2972 = vld [vmem:[%s2971] sm:$0x1]
    %v2974 = vlaneseq
    %v2975 = vshrl.u32 %v2974, 7
    %v2976 = vsub.s32 0, %v2975
    %v2977 = vrot.slane %v2972, %v2976
    %v2980 = vsel %vm75, %v2964, 0
    %v2983 = vsel %vm75, %v2965, 0
    %2985 = vmatprep.subr.mxu0 0.0
    %2986 = vmatpush1.msra.mxu0 %v2967
    %2987 = vmatprep.subr.mxu0 0.0
    %2988 = vmatpush1.msra.mxu0 %v2968
    %2989 = vmatprep.subr.mxu0 0.0
    %2990 = vmatpush1.msra.mxu0 %v2969
    %2991 = vmatprep.subr.mxu0 0.0
    %2992 = vmatpush1.msra.mxu0 %v2970
    %2993 = vmatprep.subr.mxu0 0.0
    %2994 = vmatpush1.msra.mxu0 0.0
    %2995 = vmatprep.subr.mxu0 0.0
    %2996 = vmatpush1.msra.mxu0 0.0
    %2997 = vmatprep.subr.mxu0 0.0
    %2998 = vmatpush1.msra.mxu0 0.0
    %2999 = vmatprep.subr.mxu0 0.0
    %3000 = vmatpush1.msra.mxu0 0.0
    %3001 = vmatprep.subr.mxu0 0.0
    %3002 = vmatpush1.msra.mxu0 0.0
    %3003 = vmatprep.subr.mxu0 0.0
    %3004 = vmatpush1.msra.mxu0 0.0
    %3005 = vmatprep.subr.mxu0 0.0
    %3006 = vmatpush1.msra.mxu0 0.0
    %3007 = vmatprep.subr.mxu0 0.0
    %3008 = vmatpush1.msra.mxu0 0.0
    %3009 = vmatprep.subr.mxu0 0.0
    %3010 = vmatpush1.msra.mxu0 0.0
    %3011 = vmatprep.subr.mxu0 0.0
    %3012 = vmatpush1.msra.mxu0 0.0
    %3013 = vmatprep.subr.mxu0 0.0
    %3014 = vmatpush1.msra.mxu0 0.0
    %3015 = vmatprep.subr.mxu0 0.0
    %3016 = vmatpush1.msra.mxu0 0.0
    %3017 = vmatprep.subr.mxu0 0.0
    %3018 = vmatpush1.msra.mxu0 0.0
    %3019 = vmatprep.subr.mxu0 0.0
    %3020 = vmatpush1.msra.mxu0 0.0
    %3021 = vmatprep.subr.mxu0 0.0
    %3022 = vmatpush1.msra.mxu0 0.0
    %3023 = vmatprep.subr.mxu0 0.0
    %3024 = vmatpush1.msra.mxu0 0.0
    %3025 = vmatprep.subr.mxu0 0.0
    %3026 = vmatpush1.msra.mxu0 0.0
    %3027 = vmatprep.subr.mxu0 0.0
    %3028 = vmatpush1.msra.mxu0 0.0
    %3029 = vmatprep.subr.mxu0 0.0
    %3030 = vmatpush1.msra.mxu0 0.0
    %3031 = vmatprep.subr.mxu0 0.0
    %3032 = vmatpush1.msra.mxu0 0.0
    %3033 = vmatprep.subr.mxu0 0.0
    %3034 = vmatpush1.msra.mxu0 0.0
    %3035 = vmatprep.subr.mxu0 0.0
    %3036 = vmatpush1.msra.mxu0 0.0
    %3037 = vmatprep.subr.mxu0 0.0
    %3038 = vmatpush1.msra.mxu0 0.0
    %3039 = vmatprep.subr.mxu0 0.0
    %3040 = vmatpush1.msra.mxu0 0.0
    %3041 = vmatprep.subr.mxu0 0.0
    %3042 = vmatpush1.msra.mxu0 0.0
    %3043 = vmatprep.subr.mxu0 0.0
    %3044 = vmatpush1.msra.mxu0 0.0
    %3045 = vmatprep.subr.mxu0 0.0
    %3046 = vmatpush1.msra.mxu0 0.0
    %3047 = vmatprep.subr.mxu0 0.0
    %3048 = vmatpush1.msra.mxu0 0.0
    %3049 = vmatprep.mubr.f32.mxu0 0.0
    %3050 = vmatmul.mubr.f32.gmra.mrb[0].mxu0 %v2980
    %v3051 = vpop.f32.mrb[0].mxu0
    %v3052 = vadd.f32 %v2977, %v3051
    %v3053 = vpop.f32.mrb[0].mxu0
    %3054 = vmatprep.mubr.f32.mxu0 0.0
    %3055 = vmatmul.mubr.f32.gmra.mrb[0].mxu0 %v2983
    %v3056 = vpop.f32.mrb[0].mxu0
    %v3057 = vadd.f32 %v2977, %v3056
    %v3058 = vpop.f32.mrb[0].mxu0
    %3059 = vdwg.mxu0
    %v3060 = vmul.f32 %v3052, 0.5
    %v3061 = vmul.f32 %v3057, 0.5
    %v3062 = vmul.f32 %v3052, 0.044715
    %v3063 = vmul.f32 %v3057, 0.044715
    %v3064 = vmul.f32 %v3062, %v3052
    %v3065 = vmul.f32 %v3063, %v3057
    %v3066 = vmul.f32 %v3064, %v3052
    %v3067 = vmul.f32 %v3065, %v3057
    %v3068 = vadd.f32 %v3052, %v3066
    %v3069 = vadd.f32 %v3057, %v3067
    %v3070 = vmul.f32 %v3068, 0.7978846
    %v3071 = vmul.f32 %v3069, 0.7978846
    %v3072 = vtanh.pop %v3070
    %v3073 = vtanh.pop %v3071
    %v3074 = vadd.f32 %v3072, 1.0
    %v3075 = vadd.f32 %v3073, 1.0
    %v3076 = vmul.f32 %v3060, %v3074
    %v3077 = vmul.f32 %v3061, %v3075
    %s3078 = scalar_lea.vmem %s12, 64
    %v3079 = vld [vmem:[%s3078] sm:$0xff]
    %v3080 = vld [vmem:[%s3078 + $0x8] sm:$0xff]
    %v3081 = vld [vmem:[%s3078 + $0x10] sm:$0xff]
    %v3082 = vld [vmem:[%s3078 + $0x18] sm:$0xff]
    %v3083 = vld [vmem:[%s3078 + $0x20] sm:$0xff]
    %v3084 = vld [vmem:[%s3078 + $0x28] sm:$0xff]
    %v3085 = vld [vmem:[%s3078 + $0x30] sm:$0xff]
    %v3086 = vld [vmem:[%s3078 + $0x38] sm:$0xff]
    %s3087 = scalar_lea.vmem %s13, 1
    %v3088 = vld [vmem:[%s3087] sm:$0x1]
    %v3090 = vlaneseq
    %v3091 = vshrl.u32 %v3090, 7
    %v3092 = vsub.s32 0, %v3091
    %v3093 = vrot.slane %v3088, %v3092
    %v3096 = vsel %vm1539, %v3076, 0
    %v3099 = vsel %vm1539, %v3077, 0
    %3101 = vmatprep.subr.mxu0 0.0
    %3102 = vmatpush1.msra.mxu0 %v3079
    %3103 = vmatprep.subr.mxu0 0.0
    %3104 = vmatpush1.msra.mxu0 %v3080
    %3105 = vmatprep.subr.mxu0 0.0
    %3106 = vmatpush1.msra.mxu0 %v3081
    %3107 = vmatprep.subr.mxu0 0.0
    %3108 = vmatpush1.msra.mxu0 %v3082
    %3109 = vmatprep.subr.mxu0 0.0
    %3110 = vmatpush1.msra.mxu0 %v3083
    %3111 = vmatprep.subr.mxu0 0.0
    %3112 = vmatpush1.msra.mxu0 %v3084
    %3113 = vmatprep.subr.mxu0 0.0
    %3114 = vmatpush1.msra.mxu0 %v3085
    %3115 = vmatprep.subr.mxu0 0.0
    %3116 = vmatpush1.msra.mxu0 %v3086
    %3117 = vmatprep.subr.mxu0 0.0
    %3118 = vmatpush1.msra.mxu0 0.0
    %3119 = vmatprep.subr.mxu0 0.0
    %3120 = vmatpush1.msra.mxu0 0.0
    %3121 = vmatprep.subr.mxu0 0.0
    %3122 = vmatpush1.msra.mxu0 0.0
    %3123 = vmatprep.subr.mxu0 0.0
    %3124 = vmatpush1.msra.mxu0 0.0
    %3125 = vmatprep.subr.mxu0 0.0
    %3126 = vmatpush1.msra.mxu0 0.0
    %3127 = vmatprep.subr.mxu0 0.0
    %3128 = vmatpush1.msra.mxu0 0.0
    %3129 = vmatprep.subr.mxu0 0.0
    %3130 = vmatpush1.msra.mxu0 0.0
    %3131 = vmatprep.subr.mxu0 0.0
    %3132 = vmatpush1.msra.mxu0 0.0
    %3133 = vmatprep.subr.mxu0 0.0
    %3134 = vmatpush1.msra.mxu0 0.0
    %3135 = vmatprep.subr.mxu0 0.0
    %3136 = vmatpush1.msra.mxu0 0.0
    %3137 = vmatprep.subr.mxu0 0.0
    %3138 = vmatpush1.msra.mxu0 0.0
    %3139 = vmatprep.subr.mxu0 0.0
    %3140 = vmatpush1.msra.mxu0 0.0
    %3141 = vmatprep.subr.mxu0 0.0
    %3142 = vmatpush1.msra.mxu0 0.0
    %3143 = vmatprep.subr.mxu0 0.0
    %3144 = vmatpush1.msra.mxu0 0.0
    %3145 = vmatprep.subr.mxu0 0.0
    %3146 = vmatpush1.msra.mxu0 0.0
    %3147 = vmatprep.subr.mxu0 0.0
    %3148 = vmatpush1.msra.mxu0 0.0
    %3149 = vmatprep.subr.mxu0 0.0
    %3150 = vmatpush1.msra.mxu0 0.0
    %3151 = vmatprep.subr.mxu0 0.0
    %3152 = vmatpush1.msra.mxu0 0.0
    %3153 = vmatprep.subr.mxu0 0.0
    %3154 = vmatpush1.msra.mxu0 0.0
    %3155 = vmatprep.subr.mxu0 0.0
    %3156 = vmatpush1.msra.mxu0 0.0
    %3157 = vmatprep.subr.mxu0 0.0
    %3158 = vmatpush1.msra.mxu0 0.0
    %3159 = vmatprep.subr.mxu0 0.0
    %3160 = vmatpush1.msra.mxu0 0.0
    %3161 = vmatprep.subr.mxu0 0.0
    %3162 = vmatpush1.msra.mxu0 0.0
    %3163 = vmatprep.subr.mxu0 0.0
    %3164 = vmatpush1.msra.mxu0 0.0
    %3165 = vmatprep.mubr.f32.mxu0 0.0
    %3166 = vmatmul.mubr.f32.gmra.mrb[0].mxu0 %v3096
    %v3167 = vpop.f32.mrb[0].mxu0
    %v3168 = vadd.f32 %v3093, %v3167
    %v3169 = vpop.f32.mrb[0].mxu0
    %3170 = vmatprep.mubr.f32.mxu0 0.0
    %3171 = vmatmul.mubr.f32.gmra.mrb[0].mxu0 %v3099
    %v3172 = vpop.f32.mrb[0].mxu0
    %v3173 = vadd.f32 %v3093, %v3172
    %v3174 = vpop.f32.mrb[0].mxu0
    %3175 = vdwg.mxu0
    %v3176 = vadd.f32 %v2964, %v3168
    %v3177 = vadd.f32 %v2965, %v3173
    %s3178 = scalar_lea.vmem %s14, 1
    %v3179 = vld [vmem:[%s3178] sm:$0x1]
    %s3180 = scalar_lea.vmem %s15, 1
    %v3181 = vld [vmem:[%s3180] sm:$0x1]
    %v3182 = vsel %vm75, %v3176, 0.0
    %3183 = vadd.xlane.f32.xlu0 %v3182
    %v3184 = vpop.xlane.xlu0 %3183
    %v3185 = vsel %vm75, %v3177, 0.0
    %3186 = vadd.xlane.f32.xlu0 %v3185
    %v3187 = vpop.xlane.xlu0 %3186
    %v3188 = vmul.f32 %v3184, %v82
    %v3189 = vmul.f32 %v3187, %v82
    %v3190 = vsub.f32 %v3176, %v3188
    %v3191 = vsub.f32 %v3177, %v3189
    %v3192 = vmul.f32 %v3190, %v3190
    %v3193 = vmul.f32 %v3191, %v3191
    %v3194 = vsel %vm75, %v3192, 0.0
    %3195 = vadd.xlane.f32.xlu0 %v3194
    %v3196 = vpop.xlane.xlu0 %3195
    %v3197 = vsel %vm75, %v3193, 0.0
    %3198 = vadd.xlane.f32.xlu0 %v3197
    %v3199 = vpop.xlane.xlu0 %3198
    %v3200 = vmul.f32 %v3196, %v82
    %v3201 = vmul.f32 %v3199, %v82
    %v3202 = vadd.f32 %v3200, 1e-12
    %v3203 = vadd.f32 %v3201, 1e-12
    %v3204 = vrsqrt.pop %v3202
    %v3205 = vrsqrt.pop %v3203
    %v3206 = vmul.f32 %v3190, %v3204
    %v3207 = vmul.f32 %v3191, %v3205
    %v3209 = vlaneseq
    %v3210 = vshrl.u32 %v3209, 7
    %v3211 = vsub.s32 0, %v3210
    %v3212 = vrot.slane %v3179, %v3211
    %v3214 = vmul.f32 %v3206, %v3212
    %v3215 = vmul.f32 %v3207, %v3212
    %v3217 = vlaneseq
    %v3218 = vshrl.u32 %v3217, 7
    %v3219 = vsub.s32 0, %v3218
    %v3220 = vrot.slane %v3181, %v3219
    %v3222 = vadd.f32 %v3214, %v3220
    %v3223 = vadd.f32 %v3215, %v3220
    %v3225 = vrot.slane %v3223, 7
    %vm3227 = vcmask 1040384
    %v3228 = vsel %vm3227, %v3222, %v3225
    %v3229 = vld [vmem:[%s16] sm:$0xff]
    %v3230 = vld [vmem:[%s16 + $0x8] sm:$0xff]
    %v3231 = vld [vmem:[%s16 + $0x10] sm:$0xff]
    %v3232 = vld [vmem:[%s16 + $0x18] sm:$0xff]
    %v3233 = vld [vmem:[%s17] sm:$0x1]
    %v3235 = vlaneseq
    %v3236 = vshrl.u32 %v3235, 7
    %v3237 = vsub.s32 0, %v3236
    %v3238 = vrot.slane %v3233, %v3237
    %v3241 = vsel %vm75, %v3228, 0
    %3243 = vmatprep.subr.mxu0 0.0
    %3244 = vmatpush1.msra.mxu0 %v3229
    %3245 = vmatprep.subr.mxu0 0.0
    %3246 = vmatpush1.msra.mxu0 %v3230
    %3247 = vmatprep.subr.mxu0 0.0
    %3248 = vmatpush1.msra.mxu0 %v3231
    %3249 = vmatprep.subr.mxu0 0.0
    %3250 = vmatpush1.msra.mxu0 %v3232
    %3251 = vmatprep.subr.mxu0 0.0
    %3252 = vmatpush1.msra.mxu0 0.0
    %3253 = vmatprep.subr.mxu0 0.0
    %3254 = vmatpush1.msra.mxu0 0.0
    %3255 = vmatprep.subr.mxu0 0.0
    %3256 = vmatpush1.msra.mxu0 0.0
    %3257 = vmatprep.subr.mxu0 0.0
    %3258 = vmatpush1.msra.mxu0 0.0
    %3259 = vmatprep.subr.mxu0 0.0
    %3260 = vmatpush1.msra.mxu0 0.0
    %3261 = vmatprep.subr.mxu0 0.0
    %3262 = vmatpush1.msra.mxu0 0.0
    %3263 = vmatprep.subr.mxu0 0.0
    %3264 = vmatpush1.msra.mxu0 0.0
    %3265 = vmatprep.subr.mxu0 0.0
    %3266 = vmatpush1.msra.mxu0 0.0
    %3267 = vmatprep.subr.mxu0 0.0
    %3268 = vmatpush1.msra.mxu0 0.0
    %3269 = vmatprep.subr.mxu0 0.0
    %3270 = vmatpush1.msra.mxu0 0.0
    %3271 = vmatprep.subr.mxu0 0.0
    %3272 = vmatpush1.msra.mxu0 0.0
    %3273 = vmatprep.subr.mxu0 0.0
    %3274 = vmatpush1.msra.mxu0 0.0
    %3275 = vmatprep.subr.mxu0 0.0
    %3276 = vmatpush1.msra.mxu0 0.0
    %3277 = vmatprep.subr.mxu0 0.0
    %3278 = vmatpush1.msra.mxu0 0.0
    %3279 = vmatprep.subr.mxu0 0.0
    %3280 = vmatpush1.msra.mxu0 0.0
    %3281 = vmatprep.subr.mxu0 0.0
    %3282 = vmatpush1.msra.mxu0 0.0
    %3283 = vmatprep.subr.mxu0 0.0
    %3284 = vmatpush1.msra.mxu0 0.0
    %3285 = vmatprep.subr.mxu0 0.0
    %3286 = vmatpush1.msra.mxu0 0.0
    %3287 = vmatprep.subr.mxu0 0.0
    %3288 = vmatpush1.msra.mxu0 0.0
    %3289 = vmatprep.subr.mxu0 0.0
    %3290 = vmatpush1.msra.mxu0 0.0
    %3291 = vmatprep.subr.mxu0 0.0
    %3292 = vmatpush1.msra.mxu0 0.0
    %3293 = vmatprep.subr.mxu0 0.0
    %3294 = vmatpush1.msra.mxu0 0.0
    %3295 = vmatprep.subr.mxu0 0.0
    %3296 = vmatpush1.msra.mxu0 0.0
    %3297 = vmatprep.subr.mxu0 0.0
    %3298 = vmatpush1.msra.mxu0 0.0
    %3299 = vmatprep.subr.mxu0 0.0
    %3300 = vmatpush1.msra.mxu0 0.0
    %3301 = vmatprep.subr.mxu0 0.0
    %3302 = vmatpush1.msra.mxu0 0.0
    %3303 = vmatprep.subr.mxu0 0.0
    %3304 = vmatpush1.msra.mxu0 0.0
    %3305 = vmatprep.subr.mxu0 0.0
    %3306 = vmatpush1.msra.mxu0 0.0
    %3307 = vmatprep.mubr.f32.mxu0 0.0
    %3308 = vmatmul.mubr.f32.gmra.mrb[0].mxu0 %v3241
    %v3309 = vpop.f32.mrb[0].mxu0
    %v3310 = vadd.f32 %v3238, %v3309
    %v3311 = vpop.f32.mrb[0].mxu0
    %3312 = vdwg.mxu0
    %v3313 = vtanh.pop %v3310
    %v3314 = vld [vmem:[%s18] sm:$0xff]
    %v3315 = vld [vmem:[%s18 + $0x8] sm:$0xff]
    %v3316 = vld [vmem:[%s18 + $0x10] sm:$0xff]
    %v3317 = vld [vmem:[%s18 + $0x18] sm:$0xff]
    %v3318 = vld [vmem:[%s20] sm:$0x3]
    %v3319 = vld [vmem:[%s18 + $0x20] sm:$0x3]
    %vm3320 = vcmask 15360
    %v3322 = vsel %vm3320, %v3318, 0
    %vm3324 = vcmask 1041408
    %v3326 = vsel %vm3324, %v3319, 0
    %3328 = vmatprep.subr.mxu0 0.0
    %3329 = vmatpush1.msra.mxu0 %v3326
    %3330 = vmatprep.subr.mxu0 0.0
    %3331 = vmatpush1.msra.mxu0 0.0
    %3332 = vmatprep.subr.mxu0 0.0
    %3333 = vmatpush1.msra.mxu0 0.0
    %3334 = vmatprep.subr.mxu0 0.0
    %3335 = vmatpush1.msra.mxu0 0.0
    %3336 = vmatprep.subr.mxu0 0.0
    %3337 = vmatpush1.msra.mxu0 0.0
    %3338 = vmatprep.subr.mxu0 0.0
    %3339 = vmatpush1.msra.mxu0 0.0
    %3340 = vmatprep.subr.mxu0 0.0
    %3341 = vmatpush1.msra.mxu0 0.0
    %3342 = vmatprep.subr.mxu0 0.0
    %3343 = vmatpush1.msra.mxu0 0.0
    %3344 = vmatprep.subr.mxu0 0.0
    %3345 = vmatpush1.msra.mxu0 0.0
    %3346 = vmatprep.subr.mxu0 0.0
    %3347 = vmatpush1.msra.mxu0 0.0
    %3348 = vmatprep.subr.mxu0 0.0
    %3349 = vmatpush1.msra.mxu0 0.0
    %3350 = vmatprep.subr.mxu0 0.0
    %3351 = vmatpush1.msra.mxu0 0.0
    %3352 = vmatprep.subr.mxu0 0.0
    %3353 = vmatpush1.msra.mxu0 0.0
    %3354 = vmatprep.subr.mxu0 0.0
    %3355 = vmatpush1.msra.mxu0 0.0
    %3356 = vmatprep.subr.mxu0 0.0
    %3357 = vmatpush1.msra.mxu0 0.0
    %3358 = vmatprep.subr.mxu0 0.0
    %3359 = vmatpush1.msra.mxu0 0.0
    %3360 = vmatprep.subr.mxu0 0.0
    %3361 = vmatpush1.msra.mxu0 0.0
    %3362 = vmatprep.subr.mxu0 0.0
    %3363 = vmatpush1.msra.mxu0 0.0
    %3364 = vmatprep.subr.mxu0 0.0
    %3365 = vmatpush1.msra.mxu0 0.0
    %3366 = vmatprep.subr.mxu0 0.0
    %3367 = vmatpush1.msra.mxu0 0.0
    %3368 = vmatprep.subr.mxu0 0.0
    %3369 = vmatpush1.msra.mxu0 0.0
    %3370 = vmatprep.subr.mxu0 0.0
    %3371 = vmatpush1.msra.mxu0 0.0
    %3372 = vmatprep.subr.mxu0 0.0
    %3373 = vmatpush1.msra.mxu0 0.0
    %3374 = vmatprep.subr.mxu0 0.0
    %3375 = vmatpush1.msra.mxu0 0.0
    %3376 = vmatprep.subr.mxu0 0.0
    %3377 = vmatpush1.msra.mxu0 0.0
    %3378 = vmatprep.subr.mxu0 0.0
    %3379 = vmatpush1.msra.mxu0 0.0
    %3380 = vmatprep.subr.mxu0 0.0
    %3381 = vmatpush1.msra.mxu0 0.0
    %3382 = vmatprep.subr.mxu0 0.0
    %3383 = vmatpush1.msra.mxu0 0.0
    %3384 = vmatprep.subr.mxu0 0.0
    %3385 = vmatpush1.msra.mxu0 0.0
    %3386 = vmatprep.subr.mxu0 0.0
    %3387 = vmatpush1.msra.mxu0 0.0
    %3388 = vmatprep.subr.mxu0 0.0
    %3389 = vmatpush1.msra.mxu0 0.0
    %3390 = vmatprep.subr.mxu0 0.0
    %3391 = vmatpush1.msra.mxu0 0.0
    %3392 = vmatprep.mubr.f32.mxu0 0.0
    %3393 = vmatmul.mubr.f32.gmra.mrb[0].mxu0 %v3322
    %v3394 = vpop.f32.mrb[0].mxu0
    %v3395 = vadd.f32 0.0, %v3394
    %v3396 = vpop.f32.mrb[0].mxu0
    %3397 = vdwg.mxu0
    %v3399 = vsel %vm75, %v3313, 0
    %3401 = vmatprep.subr.mxu0 0.0
    %3402 = vmatpush1.msra.mxu0 %v3314
    %3403 = vmatprep.subr.mxu0 0.0
    %3404 = vmatpush1.msra.mxu0 %v3315
    %3405 = vmatprep.subr.mxu0 0.0
    %3406 = vmatpush1.msra.mxu0 %v3316
    %3407 = vmatprep.subr.mxu0 0.0
    %3408 = vmatpush1.msra.mxu0 %v3317
    %3409 = vmatprep.subr.mxu0 0.0
    %3410 = vmatpush1.msra.mxu0 0.0
    %3411 = vmatprep.subr.mxu0 0.0
    %3412 = vmatpush1.msra.mxu0 0.0
    %3413 = vmatprep.subr.mxu0 0.0
    %3414 = vmatpush1.msra.mxu0 0.0
    %3415 = vmatprep.subr.mxu0 0.0
    %3416 = vmatpush1.msra.mxu0 0.0
    %3417 = vmatprep.subr.mxu0 0.0
    %3418 = vmatpush1.msra.mxu0 0.0
    %3419 = vmatprep.subr.mxu0 0.0
    %3420 = vmatpush1.msra.mxu0 0.0
    %3421 = vmatprep.subr.mxu0 0.0
    %3422 = vmatpush1.msra.mxu0 0.0
    %3423 = vmatprep.subr.mxu0 0.0
    %3424 = vmatpush1.msra.mxu0 0.0
    %3425 = vmatprep.subr.mxu0 0.0
    %3426 = vmatpush1.msra.mxu0 0.0
    %3427 = vmatprep.subr.mxu0 0.0
    %3428 = vmatpush1.msra.mxu0 0.0
    %3429 = vmatprep.subr.mxu0 0.0
    %3430 = vmatpush1.msra.mxu0 0.0
    %3431 = vmatprep.subr.mxu0 0.0
    %3432 = vmatpush1.msra.mxu0 0.0
    %3433 = vmatprep.subr.mxu0 0.0
    %3434 = vmatpush1.msra.mxu0 0.0
    %3435 = vmatprep.subr.mxu0 0.0
    %3436 = vmatpush1.msra.mxu0 0.0
    %3437 = vmatprep.subr.mxu0 0.0
    %3438 = vmatpush1.msra.mxu0 0.0
    %3439 = vmatprep.subr.mxu0 0.0
    %3440 = vmatpush1.msra.mxu0 0.0
    %3441 = vmatprep.subr.mxu0 0.0
    %3442 = vmatpush1.msra.mxu0 0.0
    %3443 = vmatprep.subr.mxu0 0.0
    %3444 = vmatpush1.msra.mxu0 0.0
    %3445 = vmatprep.subr.mxu0 0.0
    %3446 = vmatpush1.msra.mxu0 0.0
    %3447 = vmatprep.subr.mxu0 0.0
    %3448 = vmatpush1.msra.mxu0 0.0
    %3449 = vmatprep.subr.mxu0 0.0
    %3450 = vmatpush1.msra.mxu0 0.0
    %3451 = vmatprep.subr.mxu0 0.0
    %3452 = vmatpush1.msra.mxu0 0.0
    %3453 = vmatprep.subr.mxu0 0.0
    %3454 = vmatpush1.msra.mxu0 0.0
    %3455 = vmatprep.subr.mxu0 0.0
    %3456 = vmatpush1.msra.mxu0 0.0
    %3457 = vmatprep.subr.mxu0 0.0
    %3458 = vmatpush1.msra.mxu0 0.0
    %3459 = vmatprep.subr.mxu0 0.0
    %3460 = vmatpush1.msra.mxu0 0.0
    %3461 = vmatprep.subr.mxu0 0.0
    %3462 = vmatpush1.msra.mxu0 0.0
    %3463 = vmatprep.subr.mxu0 0.0
    %3464 = vmatpush1.msra.mxu0 0.0
    %3465 = vmatprep.mubr.f32.mxu0 0.0
    %3466 = vmatmul.mubr.f32.gmra.mrb[0].mxu0 %v3399
    %v3467 = vpop.f32.mrb[0].mxu0
    %v3468 = vadd.f32 %v3395, %v3467
    %v3469 = vpop.f32.mrb[0].mxu0
    %3470 = vdwg.mxu0
    %v3471 = vld [vmem:[%s19] sm:$0x1]
    %v3473 = vlaneseq
    %v3474 = vshrl.u32 %v3473, 7
    %v3475 = vsub.s32 0, %v3474
    %v3476 = vrot.slane %v3471, %v3475
    %v3478 = vadd.f32 %v3468, %v3476
    %3479 = vst [vmem:[#allocation2] sm:$0x3] %v3478
    // Predicated region
    $region86: #{tpu_custom_call.1} parent=1 // pred_check
      _
    $region87: #{tpu_custom_call.1} parent=1 // pred_check_branch
      %3481 = sbr.rel (0) target = $region89
    $region88: #{tpu_custom_call.1} parent=1 // pred_region
      %s3483 = ssub.s32 32, 32
      %3484 = vsyncadd [#allocation3], %s3483
      %s3486 = sshll.u32 [#allocation2], 4
      %s3487 = int_to_ptr.vmem [resolvable:$true] %s3486
      %3489 = dma.vmem_to_hbm [thread:$0]  %s3487, 32, %s21, [#allocation3]
    $region89: #{tpu_custom_call.1} parent=1 // pred_fallthru
      _
    // Predicated region
    $region90: #{tpu_custom_call.1} parent=1 // pred_check
      _
    $region91: #{tpu_custom_call.1} parent=1 // pred_check_branch
      %3491 = sbr.rel (0) target = $region93
    $region92: #{tpu_custom_call.1} parent=1 // pred_region
      %3492 = dma.done [#allocation3], 32
    $region93: #{tpu_custom_call.1} parent=1 // pred_fallthru
      _
    %3493 = vsyncpa [#allocation3], 1

</llo_original>
